<compile_context>
chip_gen: v7x
topology: tpu7x:2x2x1
jax: 0.10.0
libtpu: 0.0.40
codegen_flags: <defaults>
</compile_context>

<pallas_src>
import math

import jax
import jax.numpy as jnp
from jax import lax
from jax.experimental import pallas as pl
from jax.experimental.pallas import tpu as pltpu

LN_EPS = 1e-5  # PyTorch nn.LayerNorm default


def _layernorm(x, w, b):
    # x: (rows, C) f32; w, b: (1, C) f32
    mu = jnp.mean(x, axis=-1, keepdims=True)
    xc = x - mu
    var = jnp.mean(xc * xc, axis=-1, keepdims=True)
    return xc * lax.rsqrt(var + LN_EPS) * w + b


def _erf(x):
    # Abramowitz & Stegun 7.1.26 polynomial approximation, |error| < 1.5e-7.
    # Avoids relying on a lax.erf lowering rule inside Mosaic.
    a1, a2, a3, a4, a5 = 0.254829592, -0.284496736, 1.421413741, -1.453152027, 1.061405429
    p = 0.3275911
    ax = jnp.abs(x)
    t = 1.0 / (1.0 + p * ax)
    poly = ((((a5 * t + a4) * t + a3) * t + a2) * t + a1) * t
    y = 1.0 - poly * jnp.exp(-ax * ax)
    return jnp.where(x >= 0.0, y, -y)


def _gelu_exact(x):
    # PyTorch nn.GELU() default = exact (erf-based) GELU
    return 0.5 * x * (1.0 + _erf(x * (1.0 / math.sqrt(2.0))))


def block_kernel(
    xf_ref,     # (1, N, C)  activations (bf16 or f32)
    ln1w_ref,   # (1, C) f32
    ln1b_ref,   # (1, C) f32
    wq_ref,     # (heads, C, d) bf16, softmax scale folded in
    wkv_ref,    # (C, 2C) bf16   columns = [K head0..H-1 | V head0..H-1]
    wproj_ref,  # (heads, d, C) bf16
    bproj_ref,  # (1, C) f32
    ln2w_ref,   # (1, C) f32
    ln2b_ref,   # (1, C) f32
    wfc1_ref,   # (C, H) bf16
    bfc1_ref,   # (1, H) f32
    wfc2_ref,   # (H, C) bf16
    bfc2_ref,   # (1, C) f32
    o_ref,      # (1, TQ, C)
    hf_s,       # (N, C) bf16 scratch: LN1(x) over the full sequence
    k_s,        # (heads, N, d) bf16 scratch
    v_s,        # (heads, N, d) bf16 scratch
):
    num_heads, C, d = wq_ref.shape
    TQ = o_ref.shape[1]
    q_idx = pl.program_id(1)

    # ---- once per batch: LN1(full sequence) + K/V projections into scratch --
    @pl.when(q_idx == 0)
    def _():
        xf = xf_ref[0].astype(jnp.float32)                                     # (N, C)
        hf = _layernorm(xf, ln1w_ref[...], ln1b_ref[...]).astype(jnp.bfloat16)
        hf_s[...] = hf
        # one full-width MXU matmul for all heads' K and V
        kv = jnp.dot(hf, wkv_ref[...],
                     preferred_element_type=jnp.float32).astype(jnp.bfloat16)  # (N, 2C)
        for h in range(num_heads):   # static slices, once per batch only
            k_s[h] = kv[:, h * d:(h + 1) * d]
            v_s[h] = kv[:, C + h * d:C + (h + 1) * d]

    # ---- per query tile ------------------------------------------------------
    q0 = pl.multiple_of(q_idx * TQ, TQ)
    xq = xf_ref[0, pl.ds(q0, TQ), :].astype(jnp.float32)     # raw rows for residual
    hq = hf_s[pl.ds(q0, TQ), :]                              # LN'd rows (bf16)

    def head_body(h, acc):
        q_h = jnp.dot(hq, wq_ref[h],
                      preferred_element_type=jnp.float32).astype(jnp.bfloat16)   # (TQ, d)
        # scores = q_h @ k_h^T without materializing a transpose (contract last dims)
        s = lax.dot_general(q_h, k_s[h], (((1,), (1,)), ((), ())),
                            preferred_element_type=jnp.float32)                  # (TQ, N)
        s = s - jnp.max(s, axis=-1, keepdims=True)
        p = jnp.exp(s)
        p = p * pl.reciprocal(jnp.sum(p, axis=-1, keepdims=True), approx=True)
        hv = jnp.dot(p.astype(jnp.bfloat16), v_s[h],
                     preferred_element_type=jnp.float32)                          # (TQ, d)
        # fold this head's output straight into the output projection (no concat)
        return acc + jnp.dot(hv.astype(jnp.bfloat16), wproj_ref[h],
                             preferred_element_type=jnp.float32)                  # (TQ, C)

    acc = jnp.zeros((TQ, C), jnp.float32)
    if num_heads >= 8:
        # dynamic loop bounds live ranges (one head's temporaries live at a time)
        acc = lax.fori_loop(0, num_heads, head_body, acc)
    else:
        for h in range(num_heads):       # trace-time unroll for small head counts
            acc = head_body(h, acc)

    x1 = xq + acc + bproj_ref[...]                            # residual 1

    # ---- MLP branch ----------------------------------------------------------
    h2 = _layernorm(x1, ln2w_ref[...], ln2b_ref[...])
    h2 = jnp.dot(h2.astype(jnp.bfloat16), wfc1_ref[...],
                 preferred_element_type=jnp.float32) + bfc1_ref[...]              # (TQ, H)
    h2 = _gelu_exact(h2)
    h2 = jnp.dot(h2.astype(jnp.bfloat16), wfc2_ref[...],
                 preferred_element_type=jnp.float32) + bfc2_ref[...]              # (TQ, C)

    o_ref[...] = (x1 + h2)[None, :, :].astype(o_ref.dtype)                        # residual 2


def _vmem_cap_bytes():
    # Physical VMEM with 25% headroom: ~48 MiB on v7x (64 MiB), ~96 MiB on v5e/v6e.
    try:
        phys = int(pltpu.get_tpu_info().vmem_capacity_bytes)
    except Exception:
        phys = 64 * 1024 * 1024   # assume the smallest (v7x) if the query fails
    return (phys * 3) // 4


def _pick_tq(N, vmem_cap):
    if N <= 128 or N % 128 != 0:
        # Whole sequence per step (fine for short N; large unaligned N would
        # want masked 128-row tail tiles instead).
        return N
    if N % 256 == 0 and vmem_cap >= 80 * 1024 * 1024:
        return 256   # 256-row tiles match the 256-wide MXU when VMEM is plentiful
    return 128


def block_forward(x, params, *, num_heads, activations_dtype=jnp.bfloat16):
    B, N, C = x.shape
    H = params["w_fc1"].shape[1]
    assert C % num_heads == 0, "C must be divisible by num_heads"
    d = C // num_heads
    f32, bf16 = jnp.float32, jnp.bfloat16

    vmem_cap = _vmem_cap_bytes()
    TQ = _pick_tq(N, vmem_cap)
    n_qt = N // TQ

    # ---- one-time HBM-side weight preprocessing -----------------------------
    w_qkv = params["w_qkv"].astype(f32)                    # (C, 3C) = [Wq | Wk | Wv]
    scale = d ** (-0.5)
    # fold softmax scale into Wq; split per head: (heads, C, d)
    wq = (w_qkv[:, :C] * scale).reshape(C, num_heads, d).transpose(1, 0, 2).astype(bf16)
    # K/V fused full width: (C, 2C), head slicing happens once per batch in-kernel
    wkv = w_qkv[:, C:].astype(bf16)
    wproj = params["w_proj"].astype(f32).reshape(num_heads, d, C).astype(bf16)
    wfc1 = params["w_fc1"].astype(bf16)
    wfc2 = params["w_fc2"].astype(bf16)

    ln1_w = params["ln1_w"].astype(f32)
    ln1_b = params["ln1_b"].astype(f32)
    b_proj = params["b_proj"].astype(f32)
    ln2_w = params["ln2_w"].astype(f32)
    ln2_b = params["ln2_b"].astype(f32)
    b_fc1 = params["b_fc1"].astype(f32)
    b_fc2 = params["b_fc2"].astype(f32)

    x_in = x.astype(activations_dtype)
    act_itemsize = jnp.dtype(activations_dtype).itemsize

    # ---- advisory cost estimate (matches the K/V-once-per-batch structure) --
    weight_bytes = 2 * (4 * C * C + 2 * C * H) + 4 * (6 * C + H)
    flops = 2 * B * (2 * N * C * C      # K/V projection (once per batch)
                     + N * C * C        # Q projection
                     + 2 * N * N * C    # scores + attn @ V
                     + N * C * C        # output projection
                     + 2 * N * C * H)   # MLP
    transcendentals = B * (num_heads * N * N + N * H)
    bytes_accessed = int(B * N * C * (act_itemsize + 4) + weight_bytes)
    cost = pl.CostEstimate(flops=int(flops),
                           transcendentals=int(transcendentals),
                           bytes_accessed=bytes_accessed)

    # ---- scoped-VMEM budget from the real footprint, clamped per chip -------
    scratch_bytes = 6 * N * C                                   # hf + K + V (bf16)
    block_bytes = 2 * N * C * act_itemsize + 2 * TQ * C * 4     # x + out, double-buffered
    temp_bytes = 4 * (4 * TQ * C + 2 * TQ * N + TQ * H + 2 * N * C)
    budget = int(1.5 * (2 * weight_bytes + scratch_bytes + block_bytes + temp_bytes))
    vmem_limit = int(min(vmem_cap, max(16 * 1024 * 1024, budget)))

    def call(single_buffer_weights):
        def const_spec(shape):
            ndim = len(shape)
            index_map = lambda b, q: (0,) * ndim
            if single_buffer_weights:
                # Constant-index blocks don't need double buffering -> halve weight VMEM.
                return pl.BlockSpec(shape, index_map, pipeline_mode=pl.Buffered(1))
            return pl.BlockSpec(shape, index_map)

        in_specs = [
            pl.BlockSpec((1, N, C), lambda b, q: (b, 0, 0)),   # x (full sequence)
            const_spec((1, C)),                                # ln1 weight
            const_spec((1, C)),                                # ln1 bias
            const_spec((num_heads, C, d)),                     # wq (per head, scale folded)
            const_spec((C, 2 * C)),                            # wkv (full width)
            const_spec((num_heads, d, C)),                     # wproj (per head)
            const_spec((1, C)),                                # proj bias
            const_spec((1, C)),                                # ln2 weight
            const_spec((1, C)),                                # ln2 bias
            const_spec((C, H)),                                # fc1 weight
            const_spec((1, H)),                                # fc1 bias
            const_spec((H, C)),                                # fc2 weight
            const_spec((1, C)),                                # fc2 bias
        ]
        out_spec = pl.BlockSpec((1, TQ, C), lambda b, q: (b, q, 0))

        return pl.pallas_call(
            block_kernel,
            out_shape=jax.ShapeDtypeStruct((B, N, C), x.dtype),
            grid_spec=pltpu.PrefetchScalarGridSpec(
                num_scalar_prefetch=0,
                grid=(B, n_qt),
                in_specs=in_specs,
                out_specs=out_spec,
                scratch_shapes=[
                    pltpu.VMEM((N, C), bf16),              # hf = LN1(x) scratch
                    pltpu.VMEM((num_heads, N, d), bf16),   # K scratch
                    pltpu.VMEM((num_heads, N, d), bf16),   # V scratch
                ],
            ),
            compiler_params=pltpu.CompilerParams(
                # K/V scratch is reused across query tiles -> q axis is "arbitrary";
                # batch axis stays "parallel" for megacore sharding.
                dimension_semantics=("parallel", "arbitrary"),
                vmem_limit_bytes=vmem_limit,
            ),
            cost_estimate=cost,
        )(x_in, ln1_w, ln1_b, wq, wkv, wproj, b_proj, ln2_w, ln2_b,
          wfc1, b_fc1, wfc2, b_fc2)

    try:
        out = call(True)
        jax.block_until_ready(out)   # surface lowering/runtime issues here
        return out
    except Exception:
        # Installed JAX may not support pipeline_mode=pl.Buffered(1) on this path;
        # retry with default (double) buffering for the constant weight blocks.
        return call(False)


# ---------------------------- pure-JAX reference --------------------------------
def block_reference(x, params, *, num_heads):
    B, N, C = x.shape
    d = C // num_heads
    scale = d ** (-0.5)

    def ln(x, w, b):
        mu = jnp.mean(x, axis=-1, keepdims=True)
        var = jnp.mean((x - mu) ** 2, axis=-1, keepdims=True)
        return (x - mu) / jnp.sqrt(var + LN_EPS) * w + b

    h = ln(x, params["ln1_w"], params["ln1_b"])
    qkv = h @ params["w_qkv"]                       # (B, N, 3C)
    qkv = qkv.reshape(B, N, 3, num_heads, d).transpose(2, 0, 3, 1, 4)
    q, k, v = qkv[0], qkv[1], qkv[2]                # (B, heads, N, d)
    attn = jnp.einsum("bhnd,bhmd->bhnm", q, k) * scale
    attn = jax.nn.softmax(attn, axis=-1)
    o = jnp.einsum("bhnm,bhmd->bhnd", attn, v).transpose(0, 2, 1, 3).reshape(B, N, C)
    o = o @ params["w_proj"] + params["b_proj"]
    x1 = x + o

    h2 = ln(x1, params["ln2_w"], params["ln2_b"])
    h2 = h2 @ params["w_fc1"] + params["b_fc1"]
    h2 = 0.5 * h2 * (1.0 + lax.erf(h2 / math.sqrt(2.0)))
    h2 = h2 @ params["w_fc2"] + params["b_fc2"]
    return x1 + h2


if __name__ == "__main__":
    # Small shapes: B=2, N=8 tokens, C=32 channels, 4 heads, mlp_ratio=4 -> H=128
    B, N, C = 2, 8, 32
    num_heads = 4
    H = int(C * 4.0)

    key = jax.random.PRNGKey(0)
    ks = jax.random.split(key, 8)
    s = 0.05  # small deterministic init scale

    params = {
        "ln1_w": jnp.ones((1, C), jnp.float32),
        "ln1_b": jnp.zeros((1, C), jnp.float32),
        "w_qkv": jax.random.normal(ks[0], (C, 3 * C), jnp.float32) * s,   # qkv_bias=False
        "w_proj": jax.random.normal(ks[1], (C, C), jnp.float32) * s,
        "b_proj": jax.random.normal(ks[2], (1, C), jnp.float32) * s,
        "ln2_w": jnp.ones((1, C), jnp.float32),
        "ln2_b": jnp.zeros((1, C), jnp.float32),
        "w_fc1": jax.random.normal(ks[3], (C, H), jnp.float32) * s,
        "b_fc1": jax.random.normal(ks[4], (1, H), jnp.float32) * s,
        "w_fc2": jax.random.normal(ks[5], (H, C), jnp.float32) * s,
        "b_fc2": jax.random.normal(ks[6], (1, C), jnp.float32) * s,
    }

    x = jax.random.normal(ks[7], (B, N, C), jnp.float32)

    ref = block_reference(x, params, num_heads=num_heads)

    out = block_forward(x, params, num_heads=num_heads)
    out = jax.block_until_ready(out)

    assert out.shape == (B, N, C)
    # bf16 activations + bf16 matmul operands + approx reciprocal vs f32 reference.
    assert jnp.allclose(out, ref, atol=2e-2, rtol=2e-2), "Pallas output mismatch vs reference"

    print("KERNEL_OK")
</pallas_src>

<mosaic_0001>
module attributes {stable_mosaic.version = 11 : i64} {
  func.func @block_kernel(%arg0: i32, %arg1: i32, %arg2: memref<1x8x32xbf16, #tpu.memory_space<vmem>>, %arg3: memref<1x32xf32, #tpu.memory_space<vmem>>, %arg4: memref<1x32xf32, #tpu.memory_space<vmem>>, %arg5: memref<4x32x8xbf16, #tpu.memory_space<vmem>>, %arg6: memref<32x64xbf16, #tpu.memory_space<vmem>>, %arg7: memref<4x8x32xbf16, #tpu.memory_space<vmem>>, %arg8: memref<1x32xf32, #tpu.memory_space<vmem>>, %arg9: memref<1x32xf32, #tpu.memory_space<vmem>>, %arg10: memref<1x32xf32, #tpu.memory_space<vmem>>, %arg11: memref<32x128xbf16, #tpu.memory_space<vmem>>, %arg12: memref<1x128xf32, #tpu.memory_space<vmem>>, %arg13: memref<128x32xbf16, #tpu.memory_space<vmem>>, %arg14: memref<1x32xf32, #tpu.memory_space<vmem>>, %arg15: memref<1x8x32xf32, #tpu.memory_space<vmem>>, %arg16: memref<8x32xbf16, #tpu.memory_space<vmem>>, %arg17: memref<4x8x8xbf16, #tpu.memory_space<vmem>>, %arg18: memref<4x8x8xbf16, #tpu.memory_space<vmem>>) attributes {dimension_semantics = [#tpu.dimension_semantics<parallel>, #tpu.dimension_semantics<arbitrary>], iteration_bounds = array<i64: 2, 1>, scalar_prefetch = 0 : i64, scratch_operands = 3 : i64, tpu.core_type = #tpu.core_type<tc>, window_params = [{transform_indices = @transform_0, window_bounds = array<i64: 1, 8, 32>}, {pipeline_mode = #tpu.pipeline_mode<synchronous>, transform_indices = @transform_1, window_bounds = array<i64: 1, 32>}, {pipeline_mode = #tpu.pipeline_mode<synchronous>, transform_indices = @transform_2, window_bounds = array<i64: 1, 32>}, {pipeline_mode = #tpu.pipeline_mode<synchronous>, transform_indices = @transform_3, window_bounds = array<i64: 4, 32, 8>}, {pipeline_mode = #tpu.pipeline_mode<synchronous>, transform_indices = @transform_4, window_bounds = array<i64: 32, 64>}, {pipeline_mode = #tpu.pipeline_mode<synchronous>, transform_indices = @transform_5, window_bounds = array<i64: 4, 8, 32>}, {pipeline_mode = #tpu.pipeline_mode<synchronous>, transform_indices = @transform_6, window_bounds = array<i64: 1, 32>}, {pipeline_mode = #tpu.pipeline_mode<synchronous>, transform_indices = @transform_7, window_bounds = array<i64: 1, 32>}, {pipeline_mode = #tpu.pipeline_mode<synchronous>, transform_indices = @transform_8, window_bounds = array<i64: 1, 32>}, {pipeline_mode = #tpu.pipeline_mode<synchronous>, transform_indices = @transform_9, window_bounds = array<i64: 32, 128>}, {pipeline_mode = #tpu.pipeline_mode<synchronous>, transform_indices = @transform_10, window_bounds = array<i64: 1, 128>}, {pipeline_mode = #tpu.pipeline_mode<synchronous>, transform_indices = @transform_11, window_bounds = array<i64: 128, 32>}, {pipeline_mode = #tpu.pipeline_mode<synchronous>, transform_indices = @transform_12, window_bounds = array<i64: 1, 32>}, {transform_indices = @transform_13, window_bounds = array<i64: 1, 8, 32>}]} {
    %c0_i32 = arith.constant 0 : i32
    %0 = arith.cmpi eq, %arg1, %c0_i32 : i32
    %1 = arith.extui %0 : i1 to i32
    %c0_i32_0 = arith.constant 0 : i32
    %2 = arith.cmpi ne, %1, %c0_i32_0 : i32
    scf.if %2 {
      %c0_111 = arith.constant 0 : index
      %c0_112 = arith.constant 0 : index
      %c0_113 = arith.constant 0 : index
      %197 = vector.load %arg2[%c0_111, %c0_112, %c0_113] : memref<1x8x32xbf16, #tpu.memory_space<vmem>>, vector<1x8x32xbf16>
      %198 = vector.shape_cast %197 : vector<1x8x32xbf16> to vector<8x32xbf16>
      %199 = arith.extf %198 : vector<8x32xbf16> to vector<8x32xf32>
      %c0_114 = arith.constant 0 : index
      %c0_115 = arith.constant 0 : index
      %200 = vector.load %arg3[%c0_114, %c0_115] : memref<1x32xf32, #tpu.memory_space<vmem>>, vector<1x32xf32>
      %c0_116 = arith.constant 0 : index
      %c0_117 = arith.constant 0 : index
      %201 = vector.load %arg4[%c0_116, %c0_117] : memref<1x32xf32, #tpu.memory_space<vmem>>, vector<1x32xf32>
      %cst_118 = arith.constant dense<0.000000e+00> : vector<8xf32>
      %202 = vector.multi_reduction <add>, %199, %cst_118 [1] : vector<8x32xf32> to vector<8xf32>
      %203 = vector.shape_cast %202 : vector<8xf32> to vector<8x1xf32>
      %cst_119 = arith.constant 3.200000e+01 : f32
      %204 = vector.broadcast %cst_119 : f32 to vector<8x1xf32>
      %205 = arith.divf %203, %204 : vector<8x1xf32>
      %206 = vector.broadcast %205 : vector<8x1xf32> to vector<8x32xf32>
      %207 = arith.subf %199, %206 : vector<8x32xf32>
      %208 = arith.mulf %207, %207 : vector<8x32xf32>
      %cst_120 = arith.constant dense<0.000000e+00> : vector<8xf32>
      %209 = vector.multi_reduction <add>, %208, %cst_120 [1] : vector<8x32xf32> to vector<8xf32>
      %210 = vector.shape_cast %209 : vector<8xf32> to vector<8x1xf32>
      %cst_121 = arith.constant 3.200000e+01 : f32
      %211 = vector.broadcast %cst_121 : f32 to vector<8x1xf32>
      %212 = arith.divf %210, %211 : vector<8x1xf32>
      %cst_122 = arith.constant 9.99999974E-6 : f32
      %213 = vector.broadcast %cst_122 : f32 to vector<8x1xf32>
      %214 = arith.addf %212, %213 : vector<8x1xf32>
      %215 = math.rsqrt %214 : vector<8x1xf32>
      %216 = vector.broadcast %215 : vector<8x1xf32> to vector<8x32xf32>
      %217 = arith.mulf %207, %216 : vector<8x32xf32>
      %218 = vector.broadcast %200 : vector<1x32xf32> to vector<8x32xf32>
      %219 = arith.mulf %217, %218 : vector<8x32xf32>
      %220 = vector.broadcast %201 : vector<1x32xf32> to vector<8x32xf32>
      %221 = arith.addf %219, %220 : vector<8x32xf32>
      %222 = arith.truncf %221 : vector<8x32xf32> to vector<8x32xbf16>
      %c0_123 = arith.constant 0 : index
      %c0_124 = arith.constant 0 : index
      %223 = vector.load %arg16[%c0_123, %c0_124] : memref<8x32xbf16, #tpu.memory_space<vmem>>, vector<8x32xbf16>
      tpu.vector_store %arg16[%c0_123, %c0_124], %222 {strides = array<i32>} : memref<8x32xbf16, #tpu.memory_space<vmem>>, vector<8x32xbf16>,
      %c0_125 = arith.constant 0 : index
      %c0_126 = arith.constant 0 : index
      %224 = vector.load %arg6[%c0_125, %c0_126] : memref<32x64xbf16, #tpu.memory_space<vmem>>, vector<32x64xbf16>
      %cst_127 = arith.constant dense<0.000000e+00> : vector<8x64xf32>
      %225 = tpu.matmul %222, %224, %cst_127 {dimension_numbers = #tpu.dot_dimension_numbers<[1], [0], [0], [1], [0, 0, 1, 1], [], []>} : vector<8x32xbf16>, vector<32x64xbf16>, vector<8x64xf32> -> vector<8x64xf32>
      %226 = arith.truncf %225 : vector<8x64xf32> to vector<8x64xbf16>
      %227 = vector.extract_strided_slice %226 {offsets = [0, 0], sizes = [8, 8], strides = [1, 1]} : vector<8x64xbf16> to vector<8x8xbf16>
      %c0_128 = arith.constant 0 : index
      %c0_129 = arith.constant 0 : index
      %c0_130 = arith.constant 0 : index
      %228 = vector.load %arg17[%c0_128, %c0_129, %c0_130] : memref<4x8x8xbf16, #tpu.memory_space<vmem>>, vector<1x8x8xbf16>
      %229 = vector.shape_cast %228 : vector<1x8x8xbf16> to vector<8x8xbf16>
      %230 = vector.shape_cast %227 : vector<8x8xbf16> to vector<1x8x8xbf16>
      tpu.vector_store %arg17[%c0_128, %c0_129, %c0_130], %230 {strides = array<i32>} : memref<4x8x8xbf16, #tpu.memory_space<vmem>>, vector<1x8x8xbf16>,
      %231 = vector.extract_strided_slice %226 {offsets = [0, 32], sizes = [8, 8], strides = [1, 1]} : vector<8x64xbf16> to vector<8x8xbf16>
      %c0_131 = arith.constant 0 : index
      %c0_132 = arith.constant 0 : index
      %c0_133 = arith.constant 0 : index
      %232 = vector.load %arg18[%c0_131, %c0_132, %c0_133] : memref<4x8x8xbf16, #tpu.memory_space<vmem>>, vector<1x8x8xbf16>
      %233 = vector.shape_cast %232 : vector<1x8x8xbf16> to vector<8x8xbf16>
      %234 = vector.shape_cast %231 : vector<8x8xbf16> to vector<1x8x8xbf16>
      tpu.vector_store %arg18[%c0_131, %c0_132, %c0_133], %234 {strides = array<i32>} : memref<4x8x8xbf16, #tpu.memory_space<vmem>>, vector<1x8x8xbf16>,
      %235 = vector.extract_strided_slice %226 {offsets = [0, 8], sizes = [8, 8], strides = [1, 1]} : vector<8x64xbf16> to vector<8x8xbf16>
      %c1_134 = arith.constant 1 : index
      %c0_135 = arith.constant 0 : index
      %c0_136 = arith.constant 0 : index
      %236 = vector.load %arg17[%c1_134, %c0_135, %c0_136] : memref<4x8x8xbf16, #tpu.memory_space<vmem>>, vector<1x8x8xbf16>
      %237 = vector.shape_cast %236 : vector<1x8x8xbf16> to vector<8x8xbf16>
      %238 = vector.shape_cast %235 : vector<8x8xbf16> to vector<1x8x8xbf16>
      tpu.vector_store %arg17[%c1_134, %c0_135, %c0_136], %238 {strides = array<i32>} : memref<4x8x8xbf16, #tpu.memory_space<vmem>>, vector<1x8x8xbf16>,
      %239 = vector.extract_strided_slice %226 {offsets = [0, 40], sizes = [8, 8], strides = [1, 1]} : vector<8x64xbf16> to vector<8x8xbf16>
      %c1_137 = arith.constant 1 : index
      %c0_138 = arith.constant 0 : index
      %c0_139 = arith.constant 0 : index
      %240 = vector.load %arg18[%c1_137, %c0_138, %c0_139] : memref<4x8x8xbf16, #tpu.memory_space<vmem>>, vector<1x8x8xbf16>
      %241 = vector.shape_cast %240 : vector<1x8x8xbf16> to vector<8x8xbf16>
      %242 = vector.shape_cast %239 : vector<8x8xbf16> to vector<1x8x8xbf16>
      tpu.vector_store %arg18[%c1_137, %c0_138, %c0_139], %242 {strides = array<i32>} : memref<4x8x8xbf16, #tpu.memory_space<vmem>>, vector<1x8x8xbf16>,
      %243 = vector.extract_strided_slice %226 {offsets = [0, 16], sizes = [8, 8], strides = [1, 1]} : vector<8x64xbf16> to vector<8x8xbf16>
      %c2_140 = arith.constant 2 : index
      %c0_141 = arith.constant 0 : index
      %c0_142 = arith.constant 0 : index
      %244 = vector.load %arg17[%c2_140, %c0_141, %c0_142] : memref<4x8x8xbf16, #tpu.memory_space<vmem>>, vector<1x8x8xbf16>
      %245 = vector.shape_cast %244 : vector<1x8x8xbf16> to vector<8x8xbf16>
      %246 = vector.shape_cast %243 : vector<8x8xbf16> to vector<1x8x8xbf16>
      tpu.vector_store %arg17[%c2_140, %c0_141, %c0_142], %246 {strides = array<i32>} : memref<4x8x8xbf16, #tpu.memory_space<vmem>>, vector<1x8x8xbf16>,
      %247 = vector.extract_strided_slice %226 {offsets = [0, 48], sizes = [8, 8], strides = [1, 1]} : vector<8x64xbf16> to vector<8x8xbf16>
      %c2_143 = arith.constant 2 : index
      %c0_144 = arith.constant 0 : index
      %c0_145 = arith.constant 0 : index
      %248 = vector.load %arg18[%c2_143, %c0_144, %c0_145] : memref<4x8x8xbf16, #tpu.memory_space<vmem>>, vector<1x8x8xbf16>
      %249 = vector.shape_cast %248 : vector<1x8x8xbf16> to vector<8x8xbf16>
      %250 = vector.shape_cast %247 : vector<8x8xbf16> to vector<1x8x8xbf16>
      tpu.vector_store %arg18[%c2_143, %c0_144, %c0_145], %250 {strides = array<i32>} : memref<4x8x8xbf16, #tpu.memory_space<vmem>>, vector<1x8x8xbf16>,
      %251 = vector.extract_strided_slice %226 {offsets = [0, 24], sizes = [8, 8], strides = [1, 1]} : vector<8x64xbf16> to vector<8x8xbf16>
      %c3_146 = arith.constant 3 : index
      %c0_147 = arith.constant 0 : index
      %c0_148 = arith.constant 0 : index
      %252 = vector.load %arg17[%c3_146, %c0_147, %c0_148] : memref<4x8x8xbf16, #tpu.memory_space<vmem>>, vector<1x8x8xbf16>
      %253 = vector.shape_cast %252 : vector<1x8x8xbf16> to vector<8x8xbf16>
      %254 = vector.shape_cast %251 : vector<8x8xbf16> to vector<1x8x8xbf16>
      tpu.vector_store %arg17[%c3_146, %c0_147, %c0_148], %254 {strides = array<i32>} : memref<4x8x8xbf16, #tpu.memory_space<vmem>>, vector<1x8x8xbf16>,
      %255 = vector.extract_strided_slice %226 {offsets = [0, 56], sizes = [8, 8], strides = [1, 1]} : vector<8x64xbf16> to vector<8x8xbf16>
      %c3_149 = arith.constant 3 : index
      %c0_150 = arith.constant 0 : index
      %c0_151 = arith.constant 0 : index
      %256 = vector.load %arg18[%c3_149, %c0_150, %c0_151] : memref<4x8x8xbf16, #tpu.memory_space<vmem>>, vector<1x8x8xbf16>
      %257 = vector.shape_cast %256 : vector<1x8x8xbf16> to vector<8x8xbf16>
      %258 = vector.shape_cast %255 : vector<8x8xbf16> to vector<1x8x8xbf16>
      tpu.vector_store %arg18[%c3_149, %c0_150, %c0_151], %258 {strides = array<i32>} : memref<4x8x8xbf16, #tpu.memory_space<vmem>>, vector<1x8x8xbf16>,
    } else {
    }
    %c8_i32 = arith.constant 8 : i32
    %3 = arith.muli %arg1, %c8_i32 : i32
    %4 = tpu.assume_multiple %3, 8 : i32
    %c0 = arith.constant 0 : index
    %5 = arith.index_cast %4 : i32 to index
    %c0_1 = arith.constant 0 : index
    %6 = vector.load %arg2[%c0, %5, %c0_1] : memref<1x8x32xbf16, #tpu.memory_space<vmem>>, vector<1x8x32xbf16>
    %7 = vector.shape_cast %6 : vector<1x8x32xbf16> to vector<8x32xbf16>
    %8 = arith.extf %7 : vector<8x32xbf16> to vector<8x32xf32>
    %9 = arith.index_cast %4 : i32 to index
    %c0_2 = arith.constant 0 : index
    %10 = vector.load %arg16[%9, %c0_2] : memref<8x32xbf16, #tpu.memory_space<vmem>>, vector<8x32xbf16>
    %cst = arith.constant 0.000000e+00 : f32
    %11 = vector.broadcast %cst : f32 to vector<8x32xf32>
    %c0_3 = arith.constant 0 : index
    %c0_4 = arith.constant 0 : index
    %c0_5 = arith.constant 0 : index
    %12 = vector.load %arg5[%c0_3, %c0_4, %c0_5] : memref<4x32x8xbf16, #tpu.memory_space<vmem>>, vector<1x32x8xbf16>
    %13 = vector.shape_cast %12 : vector<1x32x8xbf16> to vector<32x8xbf16>
    %cst_6 = arith.constant dense<0.000000e+00> : vector<8x8xf32>
    %14 = tpu.matmul %10, %13, %cst_6 {dimension_numbers = #tpu.dot_dimension_numbers<[1], [0], [0], [1], [0, 0, 1, 1], [], []>} : vector<8x32xbf16>, vector<32x8xbf16>, vector<8x8xf32> -> vector<8x8xf32>
    %15 = arith.truncf %14 : vector<8x8xf32> to vector<8x8xbf16>
    %c0_7 = arith.constant 0 : index
    %c0_8 = arith.constant 0 : index
    %c0_9 = arith.constant 0 : index
    %16 = vector.load %arg17[%c0_7, %c0_8, %c0_9] : memref<4x8x8xbf16, #tpu.memory_space<vmem>>, vector<1x8x8xbf16>
    %17 = vector.shape_cast %16 : vector<1x8x8xbf16> to vector<8x8xbf16>
    %cst_10 = arith.constant dense<0.000000e+00> : vector<8x8xf32>
    %18 = tpu.matmul %15, %17, %cst_10 {dimension_numbers = #tpu.dot_dimension_numbers<[1], [1], [0], [0], [0, 0, 1, 0], [], []>} : vector<8x8xbf16>, vector<8x8xbf16>, vector<8x8xf32> -> vector<8x8xf32>
    %cst_11 = arith.constant dense<0xFF800000> : vector<8xf32>
    %19 = vector.multi_reduction <maximumf>, %18, %cst_11 [1] : vector<8x8xf32> to vector<8xf32>
    %20 = vector.shape_cast %19 : vector<8xf32> to vector<8x1xf32>
    %21 = vector.broadcast %20 : vector<8x1xf32> to vector<8x8xf32>
    %22 = arith.subf %18, %21 : vector<8x8xf32>
    %23 = math.exp %22 : vector<8x8xf32>
    %cst_12 = arith.constant dense<0.000000e+00> : vector<8xf32>
    %24 = vector.multi_reduction <add>, %23, %cst_12 [1] : vector<8x8xf32> to vector<8xf32>
    %25 = vector.shape_cast %24 : vector<8xf32> to vector<8x1xf32>
    %26 = tpu.reciprocal %25 {approx = true} : vector<8x1xf32> -> vector<8x1xf32>
    %27 = vector.broadcast %26 : vector<8x1xf32> to vector<8x8xf32>
    %28 = arith.mulf %23, %27 : vector<8x8xf32>
    %29 = arith.truncf %28 : vector<8x8xf32> to vector<8x8xbf16>
    %c0_13 = arith.constant 0 : index
    %c0_14 = arith.constant 0 : index
    %c0_15 = arith.constant 0 : index
    %30 = vector.load %arg18[%c0_13, %c0_14, %c0_15] : memref<4x8x8xbf16, #tpu.memory_space<vmem>>, vector<1x8x8xbf16>
    %31 = vector.shape_cast %30 : vector<1x8x8xbf16> to vector<8x8xbf16>
    %cst_16 = arith.constant dense<0.000000e+00> : vector<8x8xf32>
    %32 = tpu.matmul %29, %31, %cst_16 {dimension_numbers = #tpu.dot_dimension_numbers<[1], [0], [0], [1], [0, 0, 1, 1], [], []>} : vector<8x8xbf16>, vector<8x8xbf16>, vector<8x8xf32> -> vector<8x8xf32>
    %33 = arith.truncf %32 : vector<8x8xf32> to vector<8x8xbf16>
    %c0_17 = arith.constant 0 : index
    %c0_18 = arith.constant 0 : index
    %c0_19 = arith.constant 0 : index
    %34 = vector.load %arg7[%c0_17, %c0_18, %c0_19] : memref<4x8x32xbf16, #tpu.memory_space<vmem>>, vector<1x8x32xbf16>
    %35 = vector.shape_cast %34 : vector<1x8x32xbf16> to vector<8x32xbf16>
    %cst_20 = arith.constant dense<0.000000e+00> : vector<8x32xf32>
    %36 = tpu.matmul %33, %35, %cst_20 {dimension_numbers = #tpu.dot_dimension_numbers<[1], [0], [0], [1], [0, 0, 1, 1], [], []>} : vector<8x8xbf16>, vector<8x32xbf16>, vector<8x32xf32> -> vector<8x32xf32>
    %37 = arith.addf %11, %36 : vector<8x32xf32>
    %c1 = arith.constant 1 : index
    %c0_21 = arith.constant 0 : index
    %c0_22 = arith.constant 0 : index
    %38 = vector.load %arg5[%c1, %c0_21, %c0_22] : memref<4x32x8xbf16, #tpu.memory_space<vmem>>, vector<1x32x8xbf16>
    %39 = vector.shape_cast %38 : vector<1x32x8xbf16> to vector<32x8xbf16>
    %cst_23 = arith.constant dense<0.000000e+00> : vector<8x8xf32>
    %40 = tpu.matmul %10, %39, %cst_23 {dimension_numbers = #tpu.dot_dimension_numbers<[1], [0], [0], [1], [0, 0, 1, 1], [], []>} : vector<8x32xbf16>, vector<32x8xbf16>, vector<8x8xf32> -> vector<8x8xf32>
    %41 = arith.truncf %40 : vector<8x8xf32> to vector<8x8xbf16>
    %c1_24 = arith.constant 1 : index
    %c0_25 = arith.constant 0 : index
    %c0_26 = arith.constant 0 : index
    %42 = vector.load %arg17[%c1_24, %c0_25, %c0_26] : memref<4x8x8xbf16, #tpu.memory_space<vmem>>, vector<1x8x8xbf16>
    %43 = vector.shape_cast %42 : vector<1x8x8xbf16> to vector<8x8xbf16>
    %cst_27 = arith.constant dense<0.000000e+00> : vector<8x8xf32>
    %44 = tpu.matmul %41, %43, %cst_27 {dimension_numbers = #tpu.dot_dimension_numbers<[1], [1], [0], [0], [0, 0, 1, 0], [], []>} : vector<8x8xbf16>, vector<8x8xbf16>, vector<8x8xf32> -> vector<8x8xf32>
    %cst_28 = arith.constant dense<0xFF800000> : vector<8xf32>
    %45 = vector.multi_reduction <maximumf>, %44, %cst_28 [1] : vector<8x8xf32> to vector<8xf32>
    %46 = vector.shape_cast %45 : vector<8xf32> to vector<8x1xf32>
    %47 = vector.broadcast %46 : vector<8x1xf32> to vector<8x8xf32>
    %48 = arith.subf %44, %47 : vector<8x8xf32>
    %49 = math.exp %48 : vector<8x8xf32>
    %cst_29 = arith.constant dense<0.000000e+00> : vector<8xf32>
    %50 = vector.multi_reduction <add>, %49, %cst_29 [1] : vector<8x8xf32> to vector<8xf32>
    %51 = vector.shape_cast %50 : vector<8xf32> to vector<8x1xf32>
    %52 = tpu.reciprocal %51 {approx = true} : vector<8x1xf32> -> vector<8x1xf32>
    %53 = vector.broadcast %52 : vector<8x1xf32> to vector<8x8xf32>
    %54 = arith.mulf %49, %53 : vector<8x8xf32>
    %55 = arith.truncf %54 : vector<8x8xf32> to vector<8x8xbf16>
    %c1_30 = arith.constant 1 : index
    %c0_31 = arith.constant 0 : index
    %c0_32 = arith.constant 0 : index
    %56 = vector.load %arg18[%c1_30, %c0_31, %c0_32] : memref<4x8x8xbf16, #tpu.memory_space<vmem>>, vector<1x8x8xbf16>
    %57 = vector.shape_cast %56 : vector<1x8x8xbf16> to vector<8x8xbf16>
    %cst_33 = arith.constant dense<0.000000e+00> : vector<8x8xf32>
    %58 = tpu.matmul %55, %57, %cst_33 {dimension_numbers = #tpu.dot_dimension_numbers<[1], [0], [0], [1], [0, 0, 1, 1], [], []>} : vector<8x8xbf16>, vector<8x8xbf16>, vector<8x8xf32> -> vector<8x8xf32>
    %59 = arith.truncf %58 : vector<8x8xf32> to vector<8x8xbf16>
    %c1_34 = arith.constant 1 : index
    %c0_35 = arith.constant 0 : index
    %c0_36 = arith.constant 0 : index
    %60 = vector.load %arg7[%c1_34, %c0_35, %c0_36] : memref<4x8x32xbf16, #tpu.memory_space<vmem>>, vector<1x8x32xbf16>
    %61 = vector.shape_cast %60 : vector<1x8x32xbf16> to vector<8x32xbf16>
    %cst_37 = arith.constant dense<0.000000e+00> : vector<8x32xf32>
    %62 = tpu.matmul %59, %61, %cst_37 {dimension_numbers = #tpu.dot_dimension_numbers<[1], [0], [0], [1], [0, 0, 1, 1], [], []>} : vector<8x8xbf16>, vector<8x32xbf16>, vector<8x32xf32> -> vector<8x32xf32>
    %63 = arith.addf %37, %62 : vector<8x32xf32>
    %c2 = arith.constant 2 : index
    %c0_38 = arith.constant 0 : index
    %c0_39 = arith.constant 0 : index
    %64 = vector.load %arg5[%c2, %c0_38, %c0_39] : memref<4x32x8xbf16, #tpu.memory_space<vmem>>, vector<1x32x8xbf16>
    %65 = vector.shape_cast %64 : vector<1x32x8xbf16> to vector<32x8xbf16>
    %cst_40 = arith.constant dense<0.000000e+00> : vector<8x8xf32>
    %66 = tpu.matmul %10, %65, %cst_40 {dimension_numbers = #tpu.dot_dimension_numbers<[1], [0], [0], [1], [0, 0, 1, 1], [], []>} : vector<8x32xbf16>, vector<32x8xbf16>, vector<8x8xf32> -> vector<8x8xf32>
    %67 = arith.truncf %66 : vector<8x8xf32> to vector<8x8xbf16>
    %c2_41 = arith.constant 2 : index
    %c0_42 = arith.constant 0 : index
    %c0_43 = arith.constant 0 : index
    %68 = vector.load %arg17[%c2_41, %c0_42, %c0_43] : memref<4x8x8xbf16, #tpu.memory_space<vmem>>, vector<1x8x8xbf16>
    %69 = vector.shape_cast %68 : vector<1x8x8xbf16> to vector<8x8xbf16>
    %cst_44 = arith.constant dense<0.000000e+00> : vector<8x8xf32>
    %70 = tpu.matmul %67, %69, %cst_44 {dimension_numbers = #tpu.dot_dimension_numbers<[1], [1], [0], [0], [0, 0, 1, 0], [], []>} : vector<8x8xbf16>, vector<8x8xbf16>, vector<8x8xf32> -> vector<8x8xf32>
    %cst_45 = arith.constant dense<0xFF800000> : vector<8xf32>
    %71 = vector.multi_reduction <maximumf>, %70, %cst_45 [1] : vector<8x8xf32> to vector<8xf32>
    %72 = vector.shape_cast %71 : vector<8xf32> to vector<8x1xf32>
    %73 = vector.broadcast %72 : vector<8x1xf32> to vector<8x8xf32>
    %74 = arith.subf %70, %73 : vector<8x8xf32>
    %75 = math.exp %74 : vector<8x8xf32>
    %cst_46 = arith.constant dense<0.000000e+00> : vector<8xf32>
    %76 = vector.multi_reduction <add>, %75, %cst_46 [1] : vector<8x8xf32> to vector<8xf32>
    %77 = vector.shape_cast %76 : vector<8xf32> to vector<8x1xf32>
    %78 = tpu.reciprocal %77 {approx = true} : vector<8x1xf32> -> vector<8x1xf32>
    %79 = vector.broadcast %78 : vector<8x1xf32> to vector<8x8xf32>
    %80 = arith.mulf %75, %79 : vector<8x8xf32>
    %81 = arith.truncf %80 : vector<8x8xf32> to vector<8x8xbf16>
    %c2_47 = arith.constant 2 : index
    %c0_48 = arith.constant 0 : index
    %c0_49 = arith.constant 0 : index
    %82 = vector.load %arg18[%c2_47, %c0_48, %c0_49] : memref<4x8x8xbf16, #tpu.memory_space<vmem>>, vector<1x8x8xbf16>
    %83 = vector.shape_cast %82 : vector<1x8x8xbf16> to vector<8x8xbf16>
    %cst_50 = arith.constant dense<0.000000e+00> : vector<8x8xf32>
    %84 = tpu.matmul %81, %83, %cst_50 {dimension_numbers = #tpu.dot_dimension_numbers<[1], [0], [0], [1], [0, 0, 1, 1], [], []>} : vector<8x8xbf16>, vector<8x8xbf16>, vector<8x8xf32> -> vector<8x8xf32>
    %85 = arith.truncf %84 : vector<8x8xf32> to vector<8x8xbf16>
    %c2_51 = arith.constant 2 : index
    %c0_52 = arith.constant 0 : index
    %c0_53 = arith.constant 0 : index
    %86 = vector.load %arg7[%c2_51, %c0_52, %c0_53] : memref<4x8x32xbf16, #tpu.memory_space<vmem>>, vector<1x8x32xbf16>
    %87 = vector.shape_cast %86 : vector<1x8x32xbf16> to vector<8x32xbf16>
    %cst_54 = arith.constant dense<0.000000e+00> : vector<8x32xf32>
    %88 = tpu.matmul %85, %87, %cst_54 {dimension_numbers = #tpu.dot_dimension_numbers<[1], [0], [0], [1], [0, 0, 1, 1], [], []>} : vector<8x8xbf16>, vector<8x32xbf16>, vector<8x32xf32> -> vector<8x32xf32>
    %89 = arith.addf %63, %88 : vector<8x32xf32>
    %c3 = arith.constant 3 : index
    %c0_55 = arith.constant 0 : index
    %c0_56 = arith.constant 0 : index
    %90 = vector.load %arg5[%c3, %c0_55, %c0_56] : memref<4x32x8xbf16, #tpu.memory_space<vmem>>, vector<1x32x8xbf16>
    %91 = vector.shape_cast %90 : vector<1x32x8xbf16> to vector<32x8xbf16>
    %cst_57 = arith.constant dense<0.000000e+00> : vector<8x8xf32>
    %92 = tpu.matmul %10, %91, %cst_57 {dimension_numbers = #tpu.dot_dimension_numbers<[1], [0], [0], [1], [0, 0, 1, 1], [], []>} : vector<8x32xbf16>, vector<32x8xbf16>, vector<8x8xf32> -> vector<8x8xf32>
    %93 = arith.truncf %92 : vector<8x8xf32> to vector<8x8xbf16>
    %c3_58 = arith.constant 3 : index
    %c0_59 = arith.constant 0 : index
    %c0_60 = arith.constant 0 : index
    %94 = vector.load %arg17[%c3_58, %c0_59, %c0_60] : memref<4x8x8xbf16, #tpu.memory_space<vmem>>, vector<1x8x8xbf16>
    %95 = vector.shape_cast %94 : vector<1x8x8xbf16> to vector<8x8xbf16>
    %cst_61 = arith.constant dense<0.000000e+00> : vector<8x8xf32>
    %96 = tpu.matmul %93, %95, %cst_61 {dimension_numbers = #tpu.dot_dimension_numbers<[1], [1], [0], [0], [0, 0, 1, 0], [], []>} : vector<8x8xbf16>, vector<8x8xbf16>, vector<8x8xf32> -> vector<8x8xf32>
    %cst_62 = arith.constant dense<0xFF800000> : vector<8xf32>
    %97 = vector.multi_reduction <maximumf>, %96, %cst_62 [1] : vector<8x8xf32> to vector<8xf32>
    %98 = vector.shape_cast %97 : vector<8xf32> to vector<8x1xf32>
    %99 = vector.broadcast %98 : vector<8x1xf32> to vector<8x8xf32>
    %100 = arith.subf %96, %99 : vector<8x8xf32>
    %101 = math.exp %100 : vector<8x8xf32>
    %cst_63 = arith.constant dense<0.000000e+00> : vector<8xf32>
    %102 = vector.multi_reduction <add>, %101, %cst_63 [1] : vector<8x8xf32> to vector<8xf32>
    %103 = vector.shape_cast %102 : vector<8xf32> to vector<8x1xf32>
    %104 = tpu.reciprocal %103 {approx = true} : vector<8x1xf32> -> vector<8x1xf32>
    %105 = vector.broadcast %104 : vector<8x1xf32> to vector<8x8xf32>
    %106 = arith.mulf %101, %105 : vector<8x8xf32>
    %107 = arith.truncf %106 : vector<8x8xf32> to vector<8x8xbf16>
    %c3_64 = arith.constant 3 : index
    %c0_65 = arith.constant 0 : index
    %c0_66 = arith.constant 0 : index
    %108 = vector.load %arg18[%c3_64, %c0_65, %c0_66] : memref<4x8x8xbf16, #tpu.memory_space<vmem>>, vector<1x8x8xbf16>
    %109 = vector.shape_cast %108 : vector<1x8x8xbf16> to vector<8x8xbf16>
    %cst_67 = arith.constant dense<0.000000e+00> : vector<8x8xf32>
    %110 = tpu.matmul %107, %109, %cst_67 {dimension_numbers = #tpu.dot_dimension_numbers<[1], [0], [0], [1], [0, 0, 1, 1], [], []>} : vector<8x8xbf16>, vector<8x8xbf16>, vector<8x8xf32> -> vector<8x8xf32>
    %111 = arith.truncf %110 : vector<8x8xf32> to vector<8x8xbf16>
    %c3_68 = arith.constant 3 : index
    %c0_69 = arith.constant 0 : index
    %c0_70 = arith.constant 0 : index
    %112 = vector.load %arg7[%c3_68, %c0_69, %c0_70] : memref<4x8x32xbf16, #tpu.memory_space<vmem>>, vector<1x8x32xbf16>
    %113 = vector.shape_cast %112 : vector<1x8x32xbf16> to vector<8x32xbf16>
    %cst_71 = arith.constant dense<0.000000e+00> : vector<8x32xf32>
    %114 = tpu.matmul %111, %113, %cst_71 {dimension_numbers = #tpu.dot_dimension_numbers<[1], [0], [0], [1], [0, 0, 1, 1], [], []>} : vector<8x8xbf16>, vector<8x32xbf16>, vector<8x32xf32> -> vector<8x32xf32>
    %115 = arith.addf %89, %114 : vector<8x32xf32>
    %116 = arith.addf %8, %115 : vector<8x32xf32>
    %c0_72 = arith.constant 0 : index
    %c0_73 = arith.constant 0 : index
    %117 = vector.load %arg8[%c0_72, %c0_73] : memref<1x32xf32, #tpu.memory_space<vmem>>, vector<1x32xf32>
    %118 = vector.broadcast %117 : vector<1x32xf32> to vector<8x32xf32>
    %119 = arith.addf %116, %118 : vector<8x32xf32>
    %c0_74 = arith.constant 0 : index
    %c0_75 = arith.constant 0 : index
    %120 = vector.load %arg9[%c0_74, %c0_75] : memref<1x32xf32, #tpu.memory_space<vmem>>, vector<1x32xf32>
    %c0_76 = arith.constant 0 : index
    %c0_77 = arith.constant 0 : index
    %121 = vector.load %arg10[%c0_76, %c0_77] : memref<1x32xf32, #tpu.memory_space<vmem>>, vector<1x32xf32>
    %cst_78 = arith.constant dense<0.000000e+00> : vector<8xf32>
    %122 = vector.multi_reduction <add>, %119, %cst_78 [1] : vector<8x32xf32> to vector<8xf32>
    %123 = vector.shape_cast %122 : vector<8xf32> to vector<8x1xf32>
    %cst_79 = arith.constant 3.200000e+01 : f32
    %124 = vector.broadcast %cst_79 : f32 to vector<8x1xf32>
    %125 = arith.divf %123, %124 : vector<8x1xf32>
    %126 = vector.broadcast %125 : vector<8x1xf32> to vector<8x32xf32>
    %127 = arith.subf %119, %126 : vector<8x32xf32>
    %128 = arith.mulf %127, %127 : vector<8x32xf32>
    %cst_80 = arith.constant dense<0.000000e+00> : vector<8xf32>
    %129 = vector.multi_reduction <add>, %128, %cst_80 [1] : vector<8x32xf32> to vector<8xf32>
    %130 = vector.shape_cast %129 : vector<8xf32> to vector<8x1xf32>
    %cst_81 = arith.constant 3.200000e+01 : f32
    %131 = vector.broadcast %cst_81 : f32 to vector<8x1xf32>
    %132 = arith.divf %130, %131 : vector<8x1xf32>
    %cst_82 = arith.constant 9.99999974E-6 : f32
    %133 = vector.broadcast %cst_82 : f32 to vector<8x1xf32>
    %134 = arith.addf %132, %133 : vector<8x1xf32>
    %135 = math.rsqrt %134 : vector<8x1xf32>
    %136 = vector.broadcast %135 : vector<8x1xf32> to vector<8x32xf32>
    %137 = arith.mulf %127, %136 : vector<8x32xf32>
    %138 = vector.broadcast %120 : vector<1x32xf32> to vector<8x32xf32>
    %139 = arith.mulf %137, %138 : vector<8x32xf32>
    %140 = vector.broadcast %121 : vector<1x32xf32> to vector<8x32xf32>
    %141 = arith.addf %139, %140 : vector<8x32xf32>
    %142 = arith.truncf %141 : vector<8x32xf32> to vector<8x32xbf16>
    %c0_83 = arith.constant 0 : index
    %c0_84 = arith.constant 0 : index
    %143 = vector.load %arg11[%c0_83, %c0_84] : memref<32x128xbf16, #tpu.memory_space<vmem>>, vector<32x128xbf16>
    %cst_85 = arith.constant dense<0.000000e+00> : vector<8x128xf32>
    %144 = tpu.matmul %142, %143, %cst_85 {dimension_numbers = #tpu.dot_dimension_numbers<[1], [0], [0], [1], [0, 0, 1, 1], [], []>} : vector<8x32xbf16>, vector<32x128xbf16>, vector<8x128xf32> -> vector<8x128xf32>
    %c0_86 = arith.constant 0 : index
    %c0_87 = arith.constant 0 : index
    %145 = vector.load %arg12[%c0_86, %c0_87] : memref<1x128xf32, #tpu.memory_space<vmem>>, vector<1x128xf32>
    %146 = vector.broadcast %145 : vector<1x128xf32> to vector<8x128xf32>
    %147 = arith.addf %144, %146 : vector<8x128xf32>
    %cst_88 = arith.constant 5.000000e-01 : f32
    %148 = vector.broadcast %cst_88 : f32 to vector<8x128xf32>
    %149 = arith.mulf %148, %147 : vector<8x128xf32>
    %cst_89 = arith.constant 0.707106769 : f32
    %150 = vector.broadcast %cst_89 : f32 to vector<8x128xf32>
    %151 = arith.mulf %147, %150 : vector<8x128xf32>
    %152 = math.absf %151 : vector<8x128xf32>
    %cst_90 = arith.constant 0.327591091 : f32
    %153 = vector.broadcast %cst_90 : f32 to vector<8x128xf32>
    %154 = arith.mulf %153, %152 : vector<8x128xf32>
    %cst_91 = arith.constant 1.000000e+00 : f32
    %155 = vector.broadcast %cst_91 : f32 to vector<8x128xf32>
    %156 = arith.addf %155, %154 : vector<8x128xf32>
    %cst_92 = arith.constant 1.000000e+00 : f32
    %157 = vector.broadcast %cst_92 : f32 to vector<8x128xf32>
    %158 = arith.divf %157, %156 : vector<8x128xf32>
    %cst_93 = arith.constant 1.06140542 : f32
    %159 = vector.broadcast %cst_93 : f32 to vector<8x128xf32>
    %160 = arith.mulf %159, %158 : vector<8x128xf32>
    %cst_94 = arith.constant -1.45315206 : f32
    %161 = vector.broadcast %cst_94 : f32 to vector<8x128xf32>
    %162 = arith.addf %160, %161 : vector<8x128xf32>
    %163 = arith.mulf %162, %158 : vector<8x128xf32>
    %cst_95 = arith.constant 1.42141378 : f32
    %164 = vector.broadcast %cst_95 : f32 to vector<8x128xf32>
    %165 = arith.addf %163, %164 : vector<8x128xf32>
    %166 = arith.mulf %165, %158 : vector<8x128xf32>
    %cst_96 = arith.constant -0.284496725 : f32
    %167 = vector.broadcast %cst_96 : f32 to vector<8x128xf32>
    %168 = arith.addf %166, %167 : vector<8x128xf32>
    %169 = arith.mulf %168, %158 : vector<8x128xf32>
    %cst_97 = arith.constant 0.254829586 : f32
    %170 = vector.broadcast %cst_97 : f32 to vector<8x128xf32>
    %171 = arith.addf %169, %170 : vector<8x128xf32>
    %172 = arith.mulf %171, %158 : vector<8x128xf32>
    %cst_98 = arith.constant 0.000000e+00 : f32
    %173 = vector.broadcast %cst_98 : f32 to vector<8x128xf32>
    %174 = arith.subf %173, %152 : vector<8x128xf32>
    %175 = arith.mulf %174, %152 : vector<8x128xf32>
    %176 = math.exp %175 : vector<8x128xf32>
    %177 = arith.mulf %172, %176 : vector<8x128xf32>
    %cst_99 = arith.constant 1.000000e+00 : f32
    %178 = vector.broadcast %cst_99 : f32 to vector<8x128xf32>
    %179 = arith.subf %178, %177 : vector<8x128xf32>
    %cst_100 = arith.constant 0.000000e+00 : f32
    %180 = vector.broadcast %cst_100 : f32 to vector<8x128xf32>
    %181 = arith.cmpf oge, %151, %180 : vector<8x128xf32>
    %cst_101 = arith.constant 0.000000e+00 : f32
    %182 = vector.broadcast %cst_101 : f32 to vector<8x128xf32>
    %183 = arith.subf %182, %179 : vector<8x128xf32>
    %184 = arith.select %181, %179, %183 : vector<8x128xi1>, vector<8x128xf32>
    %cst_102 = arith.constant 1.000000e+00 : f32
    %185 = vector.broadcast %cst_102 : f32 to vector<8x128xf32>
    %186 = arith.addf %185, %184 : vector<8x128xf32>
    %187 = arith.mulf %149, %186 : vector<8x128xf32>
    %188 = arith.truncf %187 : vector<8x128xf32> to vector<8x128xbf16>
    %c0_103 = arith.constant 0 : index
    %c0_104 = arith.constant 0 : index
    %189 = vector.load %arg13[%c0_103, %c0_104] : memref<128x32xbf16, #tpu.memory_space<vmem>>, vector<128x32xbf16>
    %cst_105 = arith.constant dense<0.000000e+00> : vector<8x32xf32>
    %190 = tpu.matmul %188, %189, %cst_105 {dimension_numbers = #tpu.dot_dimension_numbers<[1], [0], [0], [1], [0, 0, 1, 1], [], []>} : vector<8x128xbf16>, vector<128x32xbf16>, vector<8x32xf32> -> vector<8x32xf32>
    %c0_106 = arith.constant 0 : index
    %c0_107 = arith.constant 0 : index
    %191 = vector.load %arg14[%c0_106, %c0_107] : memref<1x32xf32, #tpu.memory_space<vmem>>, vector<1x32xf32>
    %192 = vector.broadcast %191 : vector<1x32xf32> to vector<8x32xf32>
    %193 = arith.addf %190, %192 : vector<8x32xf32>
    %194 = arith.addf %119, %193 : vector<8x32xf32>
    %195 = vector.shape_cast %194 : vector<8x32xf32> to vector<1x8x32xf32>
    %c0_108 = arith.constant 0 : index
    %c0_109 = arith.constant 0 : index
    %c0_110 = arith.constant 0 : index
    %196 = vector.load %arg15[%c0_108, %c0_109, %c0_110] : memref<1x8x32xf32, #tpu.memory_space<vmem>>, vector<1x8x32xf32>
    tpu.vector_store %arg15[%c0_108, %c0_109, %c0_110], %195 {strides = array<i32>} : memref<1x8x32xf32, #tpu.memory_space<vmem>>, vector<1x8x32xf32>,
    return
  }
  func.func @transform_0(%arg0: i32, %arg1: i32) -> (i32, i32, i32) {
    %c0_i32 = arith.constant 0 : i32
    %c0_i32_0 = arith.constant 0 : i32
    %c0_i32_1 = arith.constant 0 : i32
    return %arg0, %c0_i32, %c0_i32_0 : i32, i32, i32
  }
  func.func @transform_1(%arg0: i32, %arg1: i32) -> (i32, i32) {
    %c0_i32 = arith.constant 0 : i32
    %c0_i32_0 = arith.constant 0 : i32
    %c0_i32_1 = arith.constant 0 : i32
    return %c0_i32, %c0_i32_0 : i32, i32
  }
  func.func @transform_2(%arg0: i32, %arg1: i32) -> (i32, i32) {
    %c0_i32 = arith.constant 0 : i32
    %c0_i32_0 = arith.constant 0 : i32
    %c0_i32_1 = arith.constant 0 : i32
    return %c0_i32, %c0_i32_0 : i32, i32
  }
  func.func @transform_3(%arg0: i32, %arg1: i32) -> (i32, i32, i32) {
    %c0_i32 = arith.constant 0 : i32
    %c0_i32_0 = arith.constant 0 : i32
    %c0_i32_1 = arith.constant 0 : i32
    %c0_i32_2 = arith.constant 0 : i32
    return %c0_i32, %c0_i32_0, %c0_i32_1 : i32, i32, i32
  }
  func.func @transform_4(%arg0: i32, %arg1: i32) -> (i32, i32) {
    %c0_i32 = arith.constant 0 : i32
    %c0_i32_0 = arith.constant 0 : i32
    %c0_i32_1 = arith.constant 0 : i32
    return %c0_i32, %c0_i32_0 : i32, i32
  }
  func.func @transform_5(%arg0: i32, %arg1: i32) -> (i32, i32, i32) {
    %c0_i32 = arith.constant 0 : i32
    %c0_i32_0 = arith.constant 0 : i32
    %c0_i32_1 = arith.constant 0 : i32
    %c0_i32_2 = arith.constant 0 : i32
    return %c0_i32, %c0_i32_0, %c0_i32_1 : i32, i32, i32
  }
  func.func @transform_6(%arg0: i32, %arg1: i32) -> (i32, i32) {
    %c0_i32 = arith.constant 0 : i32
    %c0_i32_0 = arith.constant 0 : i32
    %c0_i32_1 = arith.constant 0 : i32
    return %c0_i32, %c0_i32_0 : i32, i32
  }
  func.func @transform_7(%arg0: i32, %arg1: i32) -> (i32, i32) {
    %c0_i32 = arith.constant 0 : i32
    %c0_i32_0 = arith.constant 0 : i32
    %c0_i32_1 = arith.constant 0 : i32
    return %c0_i32, %c0_i32_0 : i32, i32
  }
  func.func @transform_8(%arg0: i32, %arg1: i32) -> (i32, i32) {
    %c0_i32 = arith.constant 0 : i32
    %c0_i32_0 = arith.constant 0 : i32
    %c0_i32_1 = arith.constant 0 : i32
    return %c0_i32, %c0_i32_0 : i32, i32
  }
  func.func @transform_9(%arg0: i32, %arg1: i32) -> (i32, i32) {
    %c0_i32 = arith.constant 0 : i32
    %c0_i32_0 = arith.constant 0 : i32
    %c0_i32_1 = arith.constant 0 : i32
    return %c0_i32, %c0_i32_0 : i32, i32
  }
  func.func @transform_10(%arg0: i32, %arg1: i32) -> (i32, i32) {
    %c0_i32 = arith.constant 0 : i32
    %c0_i32_0 = arith.constant 0 : i32
    %c0_i32_1 = arith.constant 0 : i32
    return %c0_i32, %c0_i32_0 : i32, i32
  }
  func.func @transform_11(%arg0: i32, %arg1: i32) -> (i32, i32) {
    %c0_i32 = arith.constant 0 : i32
    %c0_i32_0 = arith.constant 0 : i32
    %c0_i32_1 = arith.constant 0 : i32
    return %c0_i32, %c0_i32_0 : i32, i32
  }
  func.func @transform_12(%arg0: i32, %arg1: i32) -> (i32, i32) {
    %c0_i32 = arith.constant 0 : i32
    %c0_i32_0 = arith.constant 0 : i32
    %c0_i32_1 = arith.constant 0 : i32
    return %c0_i32, %c0_i32_0 : i32, i32
  }
  func.func @transform_13(%arg0: i32, %arg1: i32) -> (i32, i32, i32) {
    %c0_i32 = arith.constant 0 : i32
    %c0_i32_0 = arith.constant 0 : i32
    return %arg0, %arg1, %c0_i32 : i32, i32, i32
  }
}

module attributes {stable_mosaic.version = 11 : i64} {
  func.func @block_kernel(%arg0: i32, %arg1: i32, %arg2: memref<1x8x32xbf16, #tpu.memory_space<vmem>>, %arg3: memref<1x32xf32, #tpu.memory_space<vmem>>, %arg4: memref<1x32xf32, #tpu.memory_space<vmem>>, %arg5: memref<4x32x8xbf16, #tpu.memory_space<vmem>>, %arg6: memref<32x64xbf16, #tpu.memory_space<vmem>>, %arg7: memref<4x8x32xbf16, #tpu.memory_space<vmem>>, %arg8: memref<1x32xf32, #tpu.memory_space<vmem>>, %arg9: memref<1x32xf32, #tpu.memory_space<vmem>>, %arg10: memref<1x32xf32, #tpu.memory_space<vmem>>, %arg11: memref<32x128xbf16, #tpu.memory_space<vmem>>, %arg12: memref<1x128xf32, #tpu.memory_space<vmem>>, %arg13: memref<128x32xbf16, #tpu.memory_space<vmem>>, %arg14: memref<1x32xf32, #tpu.memory_space<vmem>>, %arg15: memref<1x8x32xf32, #tpu.memory_space<vmem>>, %arg16: memref<8x32xbf16, #tpu.memory_space<vmem>>, %arg17: memref<4x8x8xbf16, #tpu.memory_space<vmem>>, %arg18: memref<4x8x8xbf16, #tpu.memory_space<vmem>>) attributes {dimension_semantics = [#tpu.dimension_semantics<parallel>, #tpu.dimension_semantics<arbitrary>], iteration_bounds = array<i64: 2, 1>, scalar_prefetch = 0 : i64, scratch_operands = 3 : i64, tpu.core_type = #tpu.core_type<tc>, window_params = [{transform_indices = @transform_0, window_bounds = array<i64: 1, 8, 32>}, {pipeline_mode = #tpu.pipeline_mode<synchronous>, transform_indices = @transform_1, window_bounds = array<i64: 1, 32>}, {pipeline_mode = #tpu.pipeline_mode<synchronous>, transform_indices = @transform_2, window_bounds = array<i64: 1, 32>}, {pipeline_mode = #tpu.pipeline_mode<synchronous>, transform_indices = @transform_3, window_bounds = array<i64: 4, 32, 8>}, {pipeline_mode = #tpu.pipeline_mode<synchronous>, transform_indices = @transform_4, window_bounds = array<i64: 32, 64>}, {pipeline_mode = #tpu.pipeline_mode<synchronous>, transform_indices = @transform_5, window_bounds = array<i64: 4, 8, 32>}, {pipeline_mode = #tpu.pipeline_mode<synchronous>, transform_indices = @transform_6, window_bounds = array<i64: 1, 32>}, {pipeline_mode = #tpu.pipeline_mode<synchronous>, transform_indices = @transform_7, window_bounds = array<i64: 1, 32>}, {pipeline_mode = #tpu.pipeline_mode<synchronous>, transform_indices = @transform_8, window_bounds = array<i64: 1, 32>}, {pipeline_mode = #tpu.pipeline_mode<synchronous>, transform_indices = @transform_9, window_bounds = array<i64: 32, 128>}, {pipeline_mode = #tpu.pipeline_mode<synchronous>, transform_indices = @transform_10, window_bounds = array<i64: 1, 128>}, {pipeline_mode = #tpu.pipeline_mode<synchronous>, transform_indices = @transform_11, window_bounds = array<i64: 128, 32>}, {pipeline_mode = #tpu.pipeline_mode<synchronous>, transform_indices = @transform_12, window_bounds = array<i64: 1, 32>}, {transform_indices = @transform_13, window_bounds = array<i64: 1, 8, 32>}]} {
    %c0_i32 = arith.constant 0 : i32
    %0 = arith.cmpi eq, %arg1, %c0_i32 : i32
    %1 = arith.extui %0 : i1 to i32
    %c0_i32_0 = arith.constant 0 : i32
    %2 = arith.cmpi ne, %1, %c0_i32_0 : i32
    scf.if %2 {
      %c0_111 = arith.constant 0 : index
      %c0_112 = arith.constant 0 : index
      %c0_113 = arith.constant 0 : index
      %197 = vector.load %arg2[%c0_111, %c0_112, %c0_113] : memref<1x8x32xbf16, #tpu.memory_space<vmem>>, vector<1x8x32xbf16>
      %198 = vector.shape_cast %197 : vector<1x8x32xbf16> to vector<8x32xbf16>
      %199 = arith.extf %198 : vector<8x32xbf16> to vector<8x32xf32>
      %c0_114 = arith.constant 0 : index
      %c0_115 = arith.constant 0 : index
      %200 = vector.load %arg3[%c0_114, %c0_115] : memref<1x32xf32, #tpu.memory_space<vmem>>, vector<1x32xf32>
      %c0_116 = arith.constant 0 : index
      %c0_117 = arith.constant 0 : index
      %201 = vector.load %arg4[%c0_116, %c0_117] : memref<1x32xf32, #tpu.memory_space<vmem>>, vector<1x32xf32>
      %cst_118 = arith.constant dense<0.000000e+00> : vector<8xf32>
      %202 = vector.multi_reduction <add>, %199, %cst_118 [1] : vector<8x32xf32> to vector<8xf32>
      %203 = vector.shape_cast %202 : vector<8xf32> to vector<8x1xf32>
      %cst_119 = arith.constant 3.200000e+01 : f32
      %204 = vector.broadcast %cst_119 : f32 to vector<8x1xf32>
      %205 = arith.divf %203, %204 : vector<8x1xf32>
      %206 = vector.broadcast %205 : vector<8x1xf32> to vector<8x32xf32>
      %207 = arith.subf %199, %206 : vector<8x32xf32>
      %208 = arith.mulf %207, %207 : vector<8x32xf32>
      %cst_120 = arith.constant dense<0.000000e+00> : vector<8xf32>
      %209 = vector.multi_reduction <add>, %208, %cst_120 [1] : vector<8x32xf32> to vector<8xf32>
      %210 = vector.shape_cast %209 : vector<8xf32> to vector<8x1xf32>
      %cst_121 = arith.constant 3.200000e+01 : f32
      %211 = vector.broadcast %cst_121 : f32 to vector<8x1xf32>
      %212 = arith.divf %210, %211 : vector<8x1xf32>
      %cst_122 = arith.constant 9.99999974E-6 : f32
      %213 = vector.broadcast %cst_122 : f32 to vector<8x1xf32>
      %214 = arith.addf %212, %213 : vector<8x1xf32>
      %215 = math.rsqrt %214 : vector<8x1xf32>
      %216 = vector.broadcast %215 : vector<8x1xf32> to vector<8x32xf32>
      %217 = arith.mulf %207, %216 : vector<8x32xf32>
      %218 = vector.broadcast %200 : vector<1x32xf32> to vector<8x32xf32>
      %219 = arith.mulf %217, %218 : vector<8x32xf32>
      %220 = vector.broadcast %201 : vector<1x32xf32> to vector<8x32xf32>
      %221 = arith.addf %219, %220 : vector<8x32xf32>
      %222 = arith.truncf %221 : vector<8x32xf32> to vector<8x32xbf16>
      %c0_123 = arith.constant 0 : index
      %c0_124 = arith.constant 0 : index
      %223 = vector.load %arg16[%c0_123, %c0_124] : memref<8x32xbf16, #tpu.memory_space<vmem>>, vector<8x32xbf16>
      tpu.vector_store %arg16[%c0_123, %c0_124], %222 {strides = array<i32>} : memref<8x32xbf16, #tpu.memory_space<vmem>>, vector<8x32xbf16>,
      %c0_125 = arith.constant 0 : index
      %c0_126 = arith.constant 0 : index
      %224 = vector.load %arg6[%c0_125, %c0_126] : memref<32x64xbf16, #tpu.memory_space<vmem>>, vector<32x64xbf16>
      %cst_127 = arith.constant dense<0.000000e+00> : vector<8x64xf32>
      %225 = tpu.matmul %222, %224, %cst_127 {dimension_numbers = #tpu.dot_dimension_numbers<[1], [0], [0], [1], [0, 0, 1, 1], [], []>} : vector<8x32xbf16>, vector<32x64xbf16>, vector<8x64xf32> -> vector<8x64xf32>
      %226 = arith.truncf %225 : vector<8x64xf32> to vector<8x64xbf16>
      %227 = vector.extract_strided_slice %226 {offsets = [0, 0], sizes = [8, 8], strides = [1, 1]} : vector<8x64xbf16> to vector<8x8xbf16>
      %c0_128 = arith.constant 0 : index
      %c0_129 = arith.constant 0 : index
      %c0_130 = arith.constant 0 : index
      %228 = vector.load %arg17[%c0_128, %c0_129, %c0_130] : memref<4x8x8xbf16, #tpu.memory_space<vmem>>, vector<1x8x8xbf16>
      %229 = vector.shape_cast %228 : vector<1x8x8xbf16> to vector<8x8xbf16>
      %230 = vector.shape_cast %227 : vector<8x8xbf16> to vector<1x8x8xbf16>
      tpu.vector_store %arg17[%c0_128, %c0_129, %c0_130], %230 {strides = array<i32>} : memref<4x8x8xbf16, #tpu.memory_space<vmem>>, vector<1x8x8xbf16>,
      %231 = vector.extract_strided_slice %226 {offsets = [0, 32], sizes = [8, 8], strides = [1, 1]} : vector<8x64xbf16> to vector<8x8xbf16>
      %c0_131 = arith.constant 0 : index
      %c0_132 = arith.constant 0 : index
      %c0_133 = arith.constant 0 : index
      %232 = vector.load %arg18[%c0_131, %c0_132, %c0_133] : memref<4x8x8xbf16, #tpu.memory_space<vmem>>, vector<1x8x8xbf16>
      %233 = vector.shape_cast %232 : vector<1x8x8xbf16> to vector<8x8xbf16>
      %234 = vector.shape_cast %231 : vector<8x8xbf16> to vector<1x8x8xbf16>
      tpu.vector_store %arg18[%c0_131, %c0_132, %c0_133], %234 {strides = array<i32>} : memref<4x8x8xbf16, #tpu.memory_space<vmem>>, vector<1x8x8xbf16>,
      %235 = vector.extract_strided_slice %226 {offsets = [0, 8], sizes = [8, 8], strides = [1, 1]} : vector<8x64xbf16> to vector<8x8xbf16>
      %c1_134 = arith.constant 1 : index
      %c0_135 = arith.constant 0 : index
      %c0_136 = arith.constant 0 : index
      %236 = vector.load %arg17[%c1_134, %c0_135, %c0_136] : memref<4x8x8xbf16, #tpu.memory_space<vmem>>, vector<1x8x8xbf16>
      %237 = vector.shape_cast %236 : vector<1x8x8xbf16> to vector<8x8xbf16>
      %238 = vector.shape_cast %235 : vector<8x8xbf16> to vector<1x8x8xbf16>
      tpu.vector_store %arg17[%c1_134, %c0_135, %c0_136], %238 {strides = array<i32>} : memref<4x8x8xbf16, #tpu.memory_space<vmem>>, vector<1x8x8xbf16>,
      %239 = vector.extract_strided_slice %226 {offsets = [0, 40], sizes = [8, 8], strides = [1, 1]} : vector<8x64xbf16> to vector<8x8xbf16>
      %c1_137 = arith.constant 1 : index
      %c0_138 = arith.constant 0 : index
      %c0_139 = arith.constant 0 : index
      %240 = vector.load %arg18[%c1_137, %c0_138, %c0_139] : memref<4x8x8xbf16, #tpu.memory_space<vmem>>, vector<1x8x8xbf16>
      %241 = vector.shape_cast %240 : vector<1x8x8xbf16> to vector<8x8xbf16>
      %242 = vector.shape_cast %239 : vector<8x8xbf16> to vector<1x8x8xbf16>
      tpu.vector_store %arg18[%c1_137, %c0_138, %c0_139], %242 {strides = array<i32>} : memref<4x8x8xbf16, #tpu.memory_space<vmem>>, vector<1x8x8xbf16>,
      %243 = vector.extract_strided_slice %226 {offsets = [0, 16], sizes = [8, 8], strides = [1, 1]} : vector<8x64xbf16> to vector<8x8xbf16>
      %c2_140 = arith.constant 2 : index
      %c0_141 = arith.constant 0 : index
      %c0_142 = arith.constant 0 : index
      %244 = vector.load %arg17[%c2_140, %c0_141, %c0_142] : memref<4x8x8xbf16, #tpu.memory_space<vmem>>, vector<1x8x8xbf16>
      %245 = vector.shape_cast %244 : vector<1x8x8xbf16> to vector<8x8xbf16>
      %246 = vector.shape_cast %243 : vector<8x8xbf16> to vector<1x8x8xbf16>
      tpu.vector_store %arg17[%c2_140, %c0_141, %c0_142], %246 {strides = array<i32>} : memref<4x8x8xbf16, #tpu.memory_space<vmem>>, vector<1x8x8xbf16>,
      %247 = vector.extract_strided_slice %226 {offsets = [0, 48], sizes = [8, 8], strides = [1, 1]} : vector<8x64xbf16> to vector<8x8xbf16>
      %c2_143 = arith.constant 2 : index
      %c0_144 = arith.constant 0 : index
      %c0_145 = arith.constant 0 : index
      %248 = vector.load %arg18[%c2_143, %c0_144, %c0_145] : memref<4x8x8xbf16, #tpu.memory_space<vmem>>, vector<1x8x8xbf16>
      %249 = vector.shape_cast %248 : vector<1x8x8xbf16> to vector<8x8xbf16>
      %250 = vector.shape_cast %247 : vector<8x8xbf16> to vector<1x8x8xbf16>
      tpu.vector_store %arg18[%c2_143, %c0_144, %c0_145], %250 {strides = array<i32>} : memref<4x8x8xbf16, #tpu.memory_space<vmem>>, vector<1x8x8xbf16>,
      %251 = vector.extract_strided_slice %226 {offsets = [0, 24], sizes = [8, 8], strides = [1, 1]} : vector<8x64xbf16> to vector<8x8xbf16>
      %c3_146 = arith.constant 3 : index
      %c0_147 = arith.constant 0 : index
      %c0_148 = arith.constant 0 : index
      %252 = vector.load %arg17[%c3_146, %c0_147, %c0_148] : memref<4x8x8xbf16, #tpu.memory_space<vmem>>, vector<1x8x8xbf16>
      %253 = vector.shape_cast %252 : vector<1x8x8xbf16> to vector<8x8xbf16>
      %254 = vector.shape_cast %251 : vector<8x8xbf16> to vector<1x8x8xbf16>
      tpu.vector_store %arg17[%c3_146, %c0_147, %c0_148], %254 {strides = array<i32>} : memref<4x8x8xbf16, #tpu.memory_space<vmem>>, vector<1x8x8xbf16>,
      %255 = vector.extract_strided_slice %226 {offsets = [0, 56], sizes = [8, 8], strides = [1, 1]} : vector<8x64xbf16> to vector<8x8xbf16>
      %c3_149 = arith.constant 3 : index
      %c0_150 = arith.constant 0 : index
      %c0_151 = arith.constant 0 : index
      %256 = vector.load %arg18[%c3_149, %c0_150, %c0_151] : memref<4x8x8xbf16, #tpu.memory_space<vmem>>, vector<1x8x8xbf16>
      %257 = vector.shape_cast %256 : vector<1x8x8xbf16> to vector<8x8xbf16>
      %258 = vector.shape_cast %255 : vector<8x8xbf16> to vector<1x8x8xbf16>
      tpu.vector_store %arg18[%c3_149, %c0_150, %c0_151], %258 {strides = array<i32>} : memref<4x8x8xbf16, #tpu.memory_space<vmem>>, vector<1x8x8xbf16>,
    } else {
    }
    %c8_i32 = arith.constant 8 : i32
    %3 = arith.muli %arg1, %c8_i32 : i32
    %4 = tpu.assume_multiple %3, 8 : i32
    %c0 = arith.constant 0 : index
    %5 = arith.index_cast %4 : i32 to index
    %c0_1 = arith.constant 0 : index
    %6 = vector.load %arg2[%c0, %5, %c0_1] : memref<1x8x32xbf16, #tpu.memory_space<vmem>>, vector<1x8x32xbf16>
    %7 = vector.shape_cast %6 : vector<1x8x32xbf16> to vector<8x32xbf16>
    %8 = arith.extf %7 : vector<8x32xbf16> to vector<8x32xf32>
    %9 = arith.index_cast %4 : i32 to index
    %c0_2 = arith.constant 0 : index
    %10 = vector.load %arg16[%9, %c0_2] : memref<8x32xbf16, #tpu.memory_space<vmem>>, vector<8x32xbf16>
    %cst = arith.constant 0.000000e+00 : f32
    %11 = vector.broadcast %cst : f32 to vector<8x32xf32>
    %c0_3 = arith.constant 0 : index
    %c0_4 = arith.constant 0 : index
    %c0_5 = arith.constant 0 : index
    %12 = vector.load %arg5[%c0_3, %c0_4, %c0_5] : memref<4x32x8xbf16, #tpu.memory_space<vmem>>, vector<1x32x8xbf16>
    %13 = vector.shape_cast %12 : vector<1x32x8xbf16> to vector<32x8xbf16>
    %cst_6 = arith.constant dense<0.000000e+00> : vector<8x8xf32>
    %14 = tpu.matmul %10, %13, %cst_6 {dimension_numbers = #tpu.dot_dimension_numbers<[1], [0], [0], [1], [0, 0, 1, 1], [], []>} : vector<8x32xbf16>, vector<32x8xbf16>, vector<8x8xf32> -> vector<8x8xf32>
    %15 = arith.truncf %14 : vector<8x8xf32> to vector<8x8xbf16>
    %c0_7 = arith.constant 0 : index
    %c0_8 = arith.constant 0 : index
    %c0_9 = arith.constant 0 : index
    %16 = vector.load %arg17[%c0_7, %c0_8, %c0_9] : memref<4x8x8xbf16, #tpu.memory_space<vmem>>, vector<1x8x8xbf16>
    %17 = vector.shape_cast %16 : vector<1x8x8xbf16> to vector<8x8xbf16>
    %cst_10 = arith.constant dense<0.000000e+00> : vector<8x8xf32>
    %18 = tpu.matmul %15, %17, %cst_10 {dimension_numbers = #tpu.dot_dimension_numbers<[1], [1], [0], [0], [0, 0, 1, 0], [], []>} : vector<8x8xbf16>, vector<8x8xbf16>, vector<8x8xf32> -> vector<8x8xf32>
    %cst_11 = arith.constant dense<0xFF800000> : vector<8xf32>
    %19 = vector.multi_reduction <maximumf>, %18, %cst_11 [1] : vector<8x8xf32> to vector<8xf32>
    %20 = vector.shape_cast %19 : vector<8xf32> to vector<8x1xf32>
    %21 = vector.broadcast %20 : vector<8x1xf32> to vector<8x8xf32>
    %22 = arith.subf %18, %21 : vector<8x8xf32>
    %23 = math.exp %22 : vector<8x8xf32>
    %cst_12 = arith.constant dense<0.000000e+00> : vector<8xf32>
    %24 = vector.multi_reduction <add>, %23, %cst_12 [1] : vector<8x8xf32> to vector<8xf32>
    %25 = vector.shape_cast %24 : vector<8xf32> to vector<8x1xf32>
    %26 = tpu.reciprocal %25 {approx = true} : vector<8x1xf32> -> vector<8x1xf32>
    %27 = vector.broadcast %26 : vector<8x1xf32> to vector<8x8xf32>
    %28 = arith.mulf %23, %27 : vector<8x8xf32>
    %29 = arith.truncf %28 : vector<8x8xf32> to vector<8x8xbf16>
    %c0_13 = arith.constant 0 : index
    %c0_14 = arith.constant 0 : index
    %c0_15 = arith.constant 0 : index
    %30 = vector.load %arg18[%c0_13, %c0_14, %c0_15] : memref<4x8x8xbf16, #tpu.memory_space<vmem>>, vector<1x8x8xbf16>
    %31 = vector.shape_cast %30 : vector<1x8x8xbf16> to vector<8x8xbf16>
    %cst_16 = arith.constant dense<0.000000e+00> : vector<8x8xf32>
    %32 = tpu.matmul %29, %31, %cst_16 {dimension_numbers = #tpu.dot_dimension_numbers<[1], [0], [0], [1], [0, 0, 1, 1], [], []>} : vector<8x8xbf16>, vector<8x8xbf16>, vector<8x8xf32> -> vector<8x8xf32>
    %33 = arith.truncf %32 : vector<8x8xf32> to vector<8x8xbf16>
    %c0_17 = arith.constant 0 : index
    %c0_18 = arith.constant 0 : index
    %c0_19 = arith.constant 0 : index
    %34 = vector.load %arg7[%c0_17, %c0_18, %c0_19] : memref<4x8x32xbf16, #tpu.memory_space<vmem>>, vector<1x8x32xbf16>
    %35 = vector.shape_cast %34 : vector<1x8x32xbf16> to vector<8x32xbf16>
    %cst_20 = arith.constant dense<0.000000e+00> : vector<8x32xf32>
    %36 = tpu.matmul %33, %35, %cst_20 {dimension_numbers = #tpu.dot_dimension_numbers<[1], [0], [0], [1], [0, 0, 1, 1], [], []>} : vector<8x8xbf16>, vector<8x32xbf16>, vector<8x32xf32> -> vector<8x32xf32>
    %37 = arith.addf %11, %36 : vector<8x32xf32>
    %c1 = arith.constant 1 : index
    %c0_21 = arith.constant 0 : index
    %c0_22 = arith.constant 0 : index
    %38 = vector.load %arg5[%c1, %c0_21, %c0_22] : memref<4x32x8xbf16, #tpu.memory_space<vmem>>, vector<1x32x8xbf16>
    %39 = vector.shape_cast %38 : vector<1x32x8xbf16> to vector<32x8xbf16>
    %cst_23 = arith.constant dense<0.000000e+00> : vector<8x8xf32>
    %40 = tpu.matmul %10, %39, %cst_23 {dimension_numbers = #tpu.dot_dimension_numbers<[1], [0], [0], [1], [0, 0, 1, 1], [], []>} : vector<8x32xbf16>, vector<32x8xbf16>, vector<8x8xf32> -> vector<8x8xf32>
    %41 = arith.truncf %40 : vector<8x8xf32> to vector<8x8xbf16>
    %c1_24 = arith.constant 1 : index
    %c0_25 = arith.constant 0 : index
    %c0_26 = arith.constant 0 : index
    %42 = vector.load %arg17[%c1_24, %c0_25, %c0_26] : memref<4x8x8xbf16, #tpu.memory_space<vmem>>, vector<1x8x8xbf16>
    %43 = vector.shape_cast %42 : vector<1x8x8xbf16> to vector<8x8xbf16>
    %cst_27 = arith.constant dense<0.000000e+00> : vector<8x8xf32>
    %44 = tpu.matmul %41, %43, %cst_27 {dimension_numbers = #tpu.dot_dimension_numbers<[1], [1], [0], [0], [0, 0, 1, 0], [], []>} : vector<8x8xbf16>, vector<8x8xbf16>, vector<8x8xf32> -> vector<8x8xf32>
    %cst_28 = arith.constant dense<0xFF800000> : vector<8xf32>
    %45 = vector.multi_reduction <maximumf>, %44, %cst_28 [1] : vector<8x8xf32> to vector<8xf32>
    %46 = vector.shape_cast %45 : vector<8xf32> to vector<8x1xf32>
    %47 = vector.broadcast %46 : vector<8x1xf32> to vector<8x8xf32>
    %48 = arith.subf %44, %47 : vector<8x8xf32>
    %49 = math.exp %48 : vector<8x8xf32>
    %cst_29 = arith.constant dense<0.000000e+00> : vector<8xf32>
    %50 = vector.multi_reduction <add>, %49, %cst_29 [1] : vector<8x8xf32> to vector<8xf32>
    %51 = vector.shape_cast %50 : vector<8xf32> to vector<8x1xf32>
    %52 = tpu.reciprocal %51 {approx = true} : vector<8x1xf32> -> vector<8x1xf32>
    %53 = vector.broadcast %52 : vector<8x1xf32> to vector<8x8xf32>
    %54 = arith.mulf %49, %53 : vector<8x8xf32>
    %55 = arith.truncf %54 : vector<8x8xf32> to vector<8x8xbf16>
    %c1_30 = arith.constant 1 : index
    %c0_31 = arith.constant 0 : index
    %c0_32 = arith.constant 0 : index
    %56 = vector.load %arg18[%c1_30, %c0_31, %c0_32] : memref<4x8x8xbf16, #tpu.memory_space<vmem>>, vector<1x8x8xbf16>
    %57 = vector.shape_cast %56 : vector<1x8x8xbf16> to vector<8x8xbf16>
    %cst_33 = arith.constant dense<0.000000e+00> : vector<8x8xf32>
    %58 = tpu.matmul %55, %57, %cst_33 {dimension_numbers = #tpu.dot_dimension_numbers<[1], [0], [0], [1], [0, 0, 1, 1], [], []>} : vector<8x8xbf16>, vector<8x8xbf16>, vector<8x8xf32> -> vector<8x8xf32>
    %59 = arith.truncf %58 : vector<8x8xf32> to vector<8x8xbf16>
    %c1_34 = arith.constant 1 : index
    %c0_35 = arith.constant 0 : index
    %c0_36 = arith.constant 0 : index
    %60 = vector.load %arg7[%c1_34, %c0_35, %c0_36] : memref<4x8x32xbf16, #tpu.memory_space<vmem>>, vector<1x8x32xbf16>
    %61 = vector.shape_cast %60 : vector<1x8x32xbf16> to vector<8x32xbf16>
    %cst_37 = arith.constant dense<0.000000e+00> : vector<8x32xf32>
    %62 = tpu.matmul %59, %61, %cst_37 {dimension_numbers = #tpu.dot_dimension_numbers<[1], [0], [0], [1], [0, 0, 1, 1], [], []>} : vector<8x8xbf16>, vector<8x32xbf16>, vector<8x32xf32> -> vector<8x32xf32>
    %63 = arith.addf %37, %62 : vector<8x32xf32>
    %c2 = arith.constant 2 : index
    %c0_38 = arith.constant 0 : index
    %c0_39 = arith.constant 0 : index
    %64 = vector.load %arg5[%c2, %c0_38, %c0_39] : memref<4x32x8xbf16, #tpu.memory_space<vmem>>, vector<1x32x8xbf16>
    %65 = vector.shape_cast %64 : vector<1x32x8xbf16> to vector<32x8xbf16>
    %cst_40 = arith.constant dense<0.000000e+00> : vector<8x8xf32>
    %66 = tpu.matmul %10, %65, %cst_40 {dimension_numbers = #tpu.dot_dimension_numbers<[1], [0], [0], [1], [0, 0, 1, 1], [], []>} : vector<8x32xbf16>, vector<32x8xbf16>, vector<8x8xf32> -> vector<8x8xf32>
    %67 = arith.truncf %66 : vector<8x8xf32> to vector<8x8xbf16>
    %c2_41 = arith.constant 2 : index
    %c0_42 = arith.constant 0 : index
    %c0_43 = arith.constant 0 : index
    %68 = vector.load %arg17[%c2_41, %c0_42, %c0_43] : memref<4x8x8xbf16, #tpu.memory_space<vmem>>, vector<1x8x8xbf16>
    %69 = vector.shape_cast %68 : vector<1x8x8xbf16> to vector<8x8xbf16>
    %cst_44 = arith.constant dense<0.000000e+00> : vector<8x8xf32>
    %70 = tpu.matmul %67, %69, %cst_44 {dimension_numbers = #tpu.dot_dimension_numbers<[1], [1], [0], [0], [0, 0, 1, 0], [], []>} : vector<8x8xbf16>, vector<8x8xbf16>, vector<8x8xf32> -> vector<8x8xf32>
    %cst_45 = arith.constant dense<0xFF800000> : vector<8xf32>
    %71 = vector.multi_reduction <maximumf>, %70, %cst_45 [1] : vector<8x8xf32> to vector<8xf32>
    %72 = vector.shape_cast %71 : vector<8xf32> to vector<8x1xf32>
    %73 = vector.broadcast %72 : vector<8x1xf32> to vector<8x8xf32>
    %74 = arith.subf %70, %73 : vector<8x8xf32>
    %75 = math.exp %74 : vector<8x8xf32>
    %cst_46 = arith.constant dense<0.000000e+00> : vector<8xf32>
    %76 = vector.multi_reduction <add>, %75, %cst_46 [1] : vector<8x8xf32> to vector<8xf32>
    %77 = vector.shape_cast %76 : vector<8xf32> to vector<8x1xf32>
    %78 = tpu.reciprocal %77 {approx = true} : vector<8x1xf32> -> vector<8x1xf32>
    %79 = vector.broadcast %78 : vector<8x1xf32> to vector<8x8xf32>
    %80 = arith.mulf %75, %79 : vector<8x8xf32>
    %81 = arith.truncf %80 : vector<8x8xf32> to vector<8x8xbf16>
    %c2_47 = arith.constant 2 : index
    %c0_48 = arith.constant 0 : index
    %c0_49 = arith.constant 0 : index
    %82 = vector.load %arg18[%c2_47, %c0_48, %c0_49] : memref<4x8x8xbf16, #tpu.memory_space<vmem>>, vector<1x8x8xbf16>
    %83 = vector.shape_cast %82 : vector<1x8x8xbf16> to vector<8x8xbf16>
    %cst_50 = arith.constant dense<0.000000e+00> : vector<8x8xf32>
    %84 = tpu.matmul %81, %83, %cst_50 {dimension_numbers = #tpu.dot_dimension_numbers<[1], [0], [0], [1], [0, 0, 1, 1], [], []>} : vector<8x8xbf16>, vector<8x8xbf16>, vector<8x8xf32> -> vector<8x8xf32>
    %85 = arith.truncf %84 : vector<8x8xf32> to vector<8x8xbf16>
    %c2_51 = arith.constant 2 : index
    %c0_52 = arith.constant 0 : index
    %c0_53 = arith.constant 0 : index
    %86 = vector.load %arg7[%c2_51, %c0_52, %c0_53] : memref<4x8x32xbf16, #tpu.memory_space<vmem>>, vector<1x8x32xbf16>
    %87 = vector.shape_cast %86 : vector<1x8x32xbf16> to vector<8x32xbf16>
    %cst_54 = arith.constant dense<0.000000e+00> : vector<8x32xf32>
    %88 = tpu.matmul %85, %87, %cst_54 {dimension_numbers = #tpu.dot_dimension_numbers<[1], [0], [0], [1], [0, 0, 1, 1], [], []>} : vector<8x8xbf16>, vector<8x32xbf16>, vector<8x32xf32> -> vector<8x32xf32>
    %89 = arith.addf %63, %88 : vector<8x32xf32>
    %c3 = arith.constant 3 : index
    %c0_55 = arith.constant 0 : index
    %c0_56 = arith.constant 0 : index
    %90 = vector.load %arg5[%c3, %c0_55, %c0_56] : memref<4x32x8xbf16, #tpu.memory_space<vmem>>, vector<1x32x8xbf16>
    %91 = vector.shape_cast %90 : vector<1x32x8xbf16> to vector<32x8xbf16>
    %cst_57 = arith.constant dense<0.000000e+00> : vector<8x8xf32>
    %92 = tpu.matmul %10, %91, %cst_57 {dimension_numbers = #tpu.dot_dimension_numbers<[1], [0], [0], [1], [0, 0, 1, 1], [], []>} : vector<8x32xbf16>, vector<32x8xbf16>, vector<8x8xf32> -> vector<8x8xf32>
    %93 = arith.truncf %92 : vector<8x8xf32> to vector<8x8xbf16>
    %c3_58 = arith.constant 3 : index
    %c0_59 = arith.constant 0 : index
    %c0_60 = arith.constant 0 : index
    %94 = vector.load %arg17[%c3_58, %c0_59, %c0_60] : memref<4x8x8xbf16, #tpu.memory_space<vmem>>, vector<1x8x8xbf16>
    %95 = vector.shape_cast %94 : vector<1x8x8xbf16> to vector<8x8xbf16>
    %cst_61 = arith.constant dense<0.000000e+00> : vector<8x8xf32>
    %96 = tpu.matmul %93, %95, %cst_61 {dimension_numbers = #tpu.dot_dimension_numbers<[1], [1], [0], [0], [0, 0, 1, 0], [], []>} : vector<8x8xbf16>, vector<8x8xbf16>, vector<8x8xf32> -> vector<8x8xf32>
    %cst_62 = arith.constant dense<0xFF800000> : vector<8xf32>
    %97 = vector.multi_reduction <maximumf>, %96, %cst_62 [1] : vector<8x8xf32> to vector<8xf32>
    %98 = vector.shape_cast %97 : vector<8xf32> to vector<8x1xf32>
    %99 = vector.broadcast %98 : vector<8x1xf32> to vector<8x8xf32>
    %100 = arith.subf %96, %99 : vector<8x8xf32>
    %101 = math.exp %100 : vector<8x8xf32>
    %cst_63 = arith.constant dense<0.000000e+00> : vector<8xf32>
    %102 = vector.multi_reduction <add>, %101, %cst_63 [1] : vector<8x8xf32> to vector<8xf32>
    %103 = vector.shape_cast %102 : vector<8xf32> to vector<8x1xf32>
    %104 = tpu.reciprocal %103 {approx = true} : vector<8x1xf32> -> vector<8x1xf32>
    %105 = vector.broadcast %104 : vector<8x1xf32> to vector<8x8xf32>
    %106 = arith.mulf %101, %105 : vector<8x8xf32>
    %107 = arith.truncf %106 : vector<8x8xf32> to vector<8x8xbf16>
    %c3_64 = arith.constant 3 : index
    %c0_65 = arith.constant 0 : index
    %c0_66 = arith.constant 0 : index
    %108 = vector.load %arg18[%c3_64, %c0_65, %c0_66] : memref<4x8x8xbf16, #tpu.memory_space<vmem>>, vector<1x8x8xbf16>
    %109 = vector.shape_cast %108 : vector<1x8x8xbf16> to vector<8x8xbf16>
    %cst_67 = arith.constant dense<0.000000e+00> : vector<8x8xf32>
    %110 = tpu.matmul %107, %109, %cst_67 {dimension_numbers = #tpu.dot_dimension_numbers<[1], [0], [0], [1], [0, 0, 1, 1], [], []>} : vector<8x8xbf16>, vector<8x8xbf16>, vector<8x8xf32> -> vector<8x8xf32>
    %111 = arith.truncf %110 : vector<8x8xf32> to vector<8x8xbf16>
    %c3_68 = arith.constant 3 : index
    %c0_69 = arith.constant 0 : index
    %c0_70 = arith.constant 0 : index
    %112 = vector.load %arg7[%c3_68, %c0_69, %c0_70] : memref<4x8x32xbf16, #tpu.memory_space<vmem>>, vector<1x8x32xbf16>
    %113 = vector.shape_cast %112 : vector<1x8x32xbf16> to vector<8x32xbf16>
    %cst_71 = arith.constant dense<0.000000e+00> : vector<8x32xf32>
    %114 = tpu.matmul %111, %113, %cst_71 {dimension_numbers = #tpu.dot_dimension_numbers<[1], [0], [0], [1], [0, 0, 1, 1], [], []>} : vector<8x8xbf16>, vector<8x32xbf16>, vector<8x32xf32> -> vector<8x32xf32>
    %115 = arith.addf %89, %114 : vector<8x32xf32>
    %116 = arith.addf %8, %115 : vector<8x32xf32>
    %c0_72 = arith.constant 0 : index
    %c0_73 = arith.constant 0 : index
    %117 = vector.load %arg8[%c0_72, %c0_73] : memref<1x32xf32, #tpu.memory_space<vmem>>, vector<1x32xf32>
    %118 = vector.broadcast %117 : vector<1x32xf32> to vector<8x32xf32>
    %119 = arith.addf %116, %118 : vector<8x32xf32>
    %c0_74 = arith.constant 0 : index
    %c0_75 = arith.constant 0 : index
    %120 = vector.load %arg9[%c0_74, %c0_75] : memref<1x32xf32, #tpu.memory_space<vmem>>, vector<1x32xf32>
    %c0_76 = arith.constant 0 : index
    %c0_77 = arith.constant 0 : index
    %121 = vector.load %arg10[%c0_76, %c0_77] : memref<1x32xf32, #tpu.memory_space<vmem>>, vector<1x32xf32>
    %cst_78 = arith.constant dense<0.000000e+00> : vector<8xf32>
    %122 = vector.multi_reduction <add>, %119, %cst_78 [1] : vector<8x32xf32> to vector<8xf32>
    %123 = vector.shape_cast %122 : vector<8xf32> to vector<8x1xf32>
    %cst_79 = arith.constant 3.200000e+01 : f32
    %124 = vector.broadcast %cst_79 : f32 to vector<8x1xf32>
    %125 = arith.divf %123, %124 : vector<8x1xf32>
    %126 = vector.broadcast %125 : vector<8x1xf32> to vector<8x32xf32>
    %127 = arith.subf %119, %126 : vector<8x32xf32>
    %128 = arith.mulf %127, %127 : vector<8x32xf32>
    %cst_80 = arith.constant dense<0.000000e+00> : vector<8xf32>
    %129 = vector.multi_reduction <add>, %128, %cst_80 [1] : vector<8x32xf32> to vector<8xf32>
    %130 = vector.shape_cast %129 : vector<8xf32> to vector<8x1xf32>
    %cst_81 = arith.constant 3.200000e+01 : f32
    %131 = vector.broadcast %cst_81 : f32 to vector<8x1xf32>
    %132 = arith.divf %130, %131 : vector<8x1xf32>
    %cst_82 = arith.constant 9.99999974E-6 : f32
    %133 = vector.broadcast %cst_82 : f32 to vector<8x1xf32>
    %134 = arith.addf %132, %133 : vector<8x1xf32>
    %135 = math.rsqrt %134 : vector<8x1xf32>
    %136 = vector.broadcast %135 : vector<8x1xf32> to vector<8x32xf32>
    %137 = arith.mulf %127, %136 : vector<8x32xf32>
    %138 = vector.broadcast %120 : vector<1x32xf32> to vector<8x32xf32>
    %139 = arith.mulf %137, %138 : vector<8x32xf32>
    %140 = vector.broadcast %121 : vector<1x32xf32> to vector<8x32xf32>
    %141 = arith.addf %139, %140 : vector<8x32xf32>
    %142 = arith.truncf %141 : vector<8x32xf32> to vector<8x32xbf16>
    %c0_83 = arith.constant 0 : index
    %c0_84 = arith.constant 0 : index
    %143 = vector.load %arg11[%c0_83, %c0_84] : memref<32x128xbf16, #tpu.memory_space<vmem>>, vector<32x128xbf16>
    %cst_85 = arith.constant dense<0.000000e+00> : vector<8x128xf32>
    %144 = tpu.matmul %142, %143, %cst_85 {dimension_numbers = #tpu.dot_dimension_numbers<[1], [0], [0], [1], [0, 0, 1, 1], [], []>} : vector<8x32xbf16>, vector<32x128xbf16>, vector<8x128xf32> -> vector<8x128xf32>
    %c0_86 = arith.constant 0 : index
    %c0_87 = arith.constant 0 : index
    %145 = vector.load %arg12[%c0_86, %c0_87] : memref<1x128xf32, #tpu.memory_space<vmem>>, vector<1x128xf32>
    %146 = vector.broadcast %145 : vector<1x128xf32> to vector<8x128xf32>
    %147 = arith.addf %144, %146 : vector<8x128xf32>
    %cst_88 = arith.constant 5.000000e-01 : f32
    %148 = vector.broadcast %cst_88 : f32 to vector<8x128xf32>
    %149 = arith.mulf %148, %147 : vector<8x128xf32>
    %cst_89 = arith.constant 0.707106769 : f32
    %150 = vector.broadcast %cst_89 : f32 to vector<8x128xf32>
    %151 = arith.mulf %147, %150 : vector<8x128xf32>
    %152 = math.absf %151 : vector<8x128xf32>
    %cst_90 = arith.constant 0.327591091 : f32
    %153 = vector.broadcast %cst_90 : f32 to vector<8x128xf32>
    %154 = arith.mulf %153, %152 : vector<8x128xf32>
    %cst_91 = arith.constant 1.000000e+00 : f32
    %155 = vector.broadcast %cst_91 : f32 to vector<8x128xf32>
    %156 = arith.addf %155, %154 : vector<8x128xf32>
    %cst_92 = arith.constant 1.000000e+00 : f32
    %157 = vector.broadcast %cst_92 : f32 to vector<8x128xf32>
    %158 = arith.divf %157, %156 : vector<8x128xf32>
    %cst_93 = arith.constant 1.06140542 : f32
    %159 = vector.broadcast %cst_93 : f32 to vector<8x128xf32>
    %160 = arith.mulf %159, %158 : vector<8x128xf32>
    %cst_94 = arith.constant -1.45315206 : f32
    %161 = vector.broadcast %cst_94 : f32 to vector<8x128xf32>
    %162 = arith.addf %160, %161 : vector<8x128xf32>
    %163 = arith.mulf %162, %158 : vector<8x128xf32>
    %cst_95 = arith.constant 1.42141378 : f32
    %164 = vector.broadcast %cst_95 : f32 to vector<8x128xf32>
    %165 = arith.addf %163, %164 : vector<8x128xf32>
    %166 = arith.mulf %165, %158 : vector<8x128xf32>
    %cst_96 = arith.constant -0.284496725 : f32
    %167 = vector.broadcast %cst_96 : f32 to vector<8x128xf32>
    %168 = arith.addf %166, %167 : vector<8x128xf32>
    %169 = arith.mulf %168, %158 : vector<8x128xf32>
    %cst_97 = arith.constant 0.254829586 : f32
    %170 = vector.broadcast %cst_97 : f32 to vector<8x128xf32>
    %171 = arith.addf %169, %170 : vector<8x128xf32>
    %172 = arith.mulf %171, %158 : vector<8x128xf32>
    %cst_98 = arith.constant 0.000000e+00 : f32
    %173 = vector.broadcast %cst_98 : f32 to vector<8x128xf32>
    %174 = arith.subf %173, %152 : vector<8x128xf32>
    %175 = arith.mulf %174, %152 : vector<8x128xf32>
    %176 = math.exp %175 : vector<8x128xf32>
    %177 = arith.mulf %172, %176 : vector<8x128xf32>
    %cst_99 = arith.constant 1.000000e+00 : f32
    %178 = vector.broadcast %cst_99 : f32 to vector<8x128xf32>
    %179 = arith.subf %178, %177 : vector<8x128xf32>
    %cst_100 = arith.constant 0.000000e+00 : f32
    %180 = vector.broadcast %cst_100 : f32 to vector<8x128xf32>
    %181 = arith.cmpf oge, %151, %180 : vector<8x128xf32>
    %cst_101 = arith.constant 0.000000e+00 : f32
    %182 = vector.broadcast %cst_101 : f32 to vector<8x128xf32>
    %183 = arith.subf %182, %179 : vector<8x128xf32>
    %184 = arith.select %181, %179, %183 : vector<8x128xi1>, vector<8x128xf32>
    %cst_102 = arith.constant 1.000000e+00 : f32
    %185 = vector.broadcast %cst_102 : f32 to vector<8x128xf32>
    %186 = arith.addf %185, %184 : vector<8x128xf32>
    %187 = arith.mulf %149, %186 : vector<8x128xf32>
    %188 = arith.truncf %187 : vector<8x128xf32> to vector<8x128xbf16>
    %c0_103 = arith.constant 0 : index
    %c0_104 = arith.constant 0 : index
    %189 = vector.load %arg13[%c0_103, %c0_104] : memref<128x32xbf16, #tpu.memory_space<vmem>>, vector<128x32xbf16>
    %cst_105 = arith.constant dense<0.000000e+00> : vector<8x32xf32>
    %190 = tpu.matmul %188, %189, %cst_105 {dimension_numbers = #tpu.dot_dimension_numbers<[1], [0], [0], [1], [0, 0, 1, 1], [], []>} : vector<8x128xbf16>, vector<128x32xbf16>, vector<8x32xf32> -> vector<8x32xf32>
    %c0_106 = arith.constant 0 : index
    %c0_107 = arith.constant 0 : index
    %191 = vector.load %arg14[%c0_106, %c0_107] : memref<1x32xf32, #tpu.memory_space<vmem>>, vector<1x32xf32>
    %192 = vector.broadcast %191 : vector<1x32xf32> to vector<8x32xf32>
    %193 = arith.addf %190, %192 : vector<8x32xf32>
    %194 = arith.addf %119, %193 : vector<8x32xf32>
    %195 = vector.shape_cast %194 : vector<8x32xf32> to vector<1x8x32xf32>
    %c0_108 = arith.constant 0 : index
    %c0_109 = arith.constant 0 : index
    %c0_110 = arith.constant 0 : index
    %196 = vector.load %arg15[%c0_108, %c0_109, %c0_110] : memref<1x8x32xf32, #tpu.memory_space<vmem>>, vector<1x8x32xf32>
    tpu.vector_store %arg15[%c0_108, %c0_109, %c0_110], %195 {strides = array<i32>} : memref<1x8x32xf32, #tpu.memory_space<vmem>>, vector<1x8x32xf32>,
    return
  }
  func.func @transform_0(%arg0: i32, %arg1: i32) -> (i32, i32, i32) {
    %c0_i32 = arith.constant 0 : i32
    %c0_i32_0 = arith.constant 0 : i32
    %c0_i32_1 = arith.constant 0 : i32
    return %arg0, %c0_i32, %c0_i32_0 : i32, i32, i32
  }
  func.func @transform_1(%arg0: i32, %arg1: i32) -> (i32, i32) {
    %c0_i32 = arith.constant 0 : i32
    %c0_i32_0 = arith.constant 0 : i32
    %c0_i32_1 = arith.constant 0 : i32
    return %c0_i32, %c0_i32_0 : i32, i32
  }
  func.func @transform_2(%arg0: i32, %arg1: i32) -> (i32, i32) {
    %c0_i32 = arith.constant 0 : i32
    %c0_i32_0 = arith.constant 0 : i32
    %c0_i32_1 = arith.constant 0 : i32
    return %c0_i32, %c0_i32_0 : i32, i32
  }
  func.func @transform_3(%arg0: i32, %arg1: i32) -> (i32, i32, i32) {
    %c0_i32 = arith.constant 0 : i32
    %c0_i32_0 = arith.constant 0 : i32
    %c0_i32_1 = arith.constant 0 : i32
    %c0_i32_2 = arith.constant 0 : i32
    return %c0_i32, %c0_i32_0, %c0_i32_1 : i32, i32, i32
  }
  func.func @transform_4(%arg0: i32, %arg1: i32) -> (i32, i32) {
    %c0_i32 = arith.constant 0 : i32
    %c0_i32_0 = arith.constant 0 : i32
    %c0_i32_1 = arith.constant 0 : i32
    return %c0_i32, %c0_i32_0 : i32, i32
  }
  func.func @transform_5(%arg0: i32, %arg1: i32) -> (i32, i32, i32) {
    %c0_i32 = arith.constant 0 : i32
    %c0_i32_0 = arith.constant 0 : i32
    %c0_i32_1 = arith.constant 0 : i32
    %c0_i32_2 = arith.constant 0 : i32
    return %c0_i32, %c0_i32_0, %c0_i32_1 : i32, i32, i32
  }
  func.func @transform_6(%arg0: i32, %arg1: i32) -> (i32, i32) {
    %c0_i32 = arith.constant 0 : i32
    %c0_i32_0 = arith.constant 0 : i32
    %c0_i32_1 = arith.constant 0 : i32
    return %c0_i32, %c0_i32_0 : i32, i32
  }
  func.func @transform_7(%arg0: i32, %arg1: i32) -> (i32, i32) {
    %c0_i32 = arith.constant 0 : i32
    %c0_i32_0 = arith.constant 0 : i32
    %c0_i32_1 = arith.constant 0 : i32
    return %c0_i32, %c0_i32_0 : i32, i32
  }
  func.func @transform_8(%arg0: i32, %arg1: i32) -> (i32, i32) {
    %c0_i32 = arith.constant 0 : i32
    %c0_i32_0 = arith.constant 0 : i32
    %c0_i32_1 = arith.constant 0 : i32
    return %c0_i32, %c0_i32_0 : i32, i32
  }
  func.func @transform_9(%arg0: i32, %arg1: i32) -> (i32, i32) {
    %c0_i32 = arith.constant 0 : i32
    %c0_i32_0 = arith.constant 0 : i32
    %c0_i32_1 = arith.constant 0 : i32
    return %c0_i32, %c0_i32_0 : i32, i32
  }
  func.func @transform_10(%arg0: i32, %arg1: i32) -> (i32, i32) {
    %c0_i32 = arith.constant 0 : i32
    %c0_i32_0 = arith.constant 0 : i32
    %c0_i32_1 = arith.constant 0 : i32
    return %c0_i32, %c0_i32_0 : i32, i32
  }
  func.func @transform_11(%arg0: i32, %arg1: i32) -> (i32, i32) {
    %c0_i32 = arith.constant 0 : i32
    %c0_i32_0 = arith.constant 0 : i32
    %c0_i32_1 = arith.constant 0 : i32
    return %c0_i32, %c0_i32_0 : i32, i32
  }
  func.func @transform_12(%arg0: i32, %arg1: i32) -> (i32, i32) {
    %c0_i32 = arith.constant 0 : i32
    %c0_i32_0 = arith.constant 0 : i32
    %c0_i32_1 = arith.constant 0 : i32
    return %c0_i32, %c0_i32_0 : i32, i32
  }
  func.func @transform_13(%arg0: i32, %arg1: i32) -> (i32, i32, i32) {
    %c0_i32 = arith.constant 0 : i32
    %c0_i32_0 = arith.constant 0 : i32
    return %arg0, %arg1, %c0_i32 : i32, i32, i32
  }
}

</mosaic_0001>

<llo_original>
// kernel: tpu_custom_call.1
$region0: #{tpu_custom_call.1}
  #allocation0 [shape = 'u32[]', space=smem, size = 0x4, offset = 0x4, fixed_abs, tag = 'smem constant byte address 0x4 - core index']
  #allocation1 [shape = 'u32[144,128]{1,0:T(1,128)}', space=vmem, size = 0x12000, scoped, tag = 'internal scratch']
  #allocation2 [shape = 'bf16[8,32]{1,0:T(8,128)(2,1)}', space=vmem, size = 0x800, scoped, tag = 'scratch operand']
  #allocation3 [shape = 'bf16[4,8,8]{2,1,0:T(8,128)(2,1)}', space=vmem, size = 0x2000, scoped, tag = 'scratch operand']
  #allocation4 [shape = 'bf16[4,8,8]{2,1,0:T(8,128)(2,1)}', space=vmem, size = 0x2000, scoped, tag = 'scratch operand']
  %s0 = inlined_call_operand.vmem [shape: bf16[2,8,32], index: 0, kind: input, shape index: {}]
  %s1 = inlined_call_operand.vmem [shape: f32[1,32], index: 1, kind: input, shape index: {}]
  %s2 = inlined_call_operand.vmem [shape: f32[1,32], index: 2, kind: input, shape index: {}]
  %s3 = inlined_call_operand.vmem [shape: bf16[4,32,8], index: 3, kind: input, shape index: {}]
  %s4 = inlined_call_operand.vmem [shape: bf16[32,64], index: 4, kind: input, shape index: {}]
  %s5 = inlined_call_operand.vmem [shape: bf16[4,8,32], index: 5, kind: input, shape index: {}]
  %s6 = inlined_call_operand.vmem [shape: f32[1,32], index: 6, kind: input, shape index: {}]
  %s7 = inlined_call_operand.vmem [shape: f32[1,32], index: 7, kind: input, shape index: {}]
  %s8 = inlined_call_operand.vmem [shape: f32[1,32], index: 8, kind: input, shape index: {}]
  %s9 = inlined_call_operand.vmem [shape: bf16[32,128], index: 9, kind: input, shape index: {}]
  %s10 = inlined_call_operand.vmem [shape: f32[1,128], index: 10, kind: input, shape index: {}]
  %s11 = inlined_call_operand.vmem [shape: bf16[128,32], index: 11, kind: input, shape index: {}]
  %s12 = inlined_call_operand.vmem [shape: f32[1,32], index: 12, kind: input, shape index: {}]
  %s13 = inlined_call_operand.hbm [shape: f32[2,8,32], index: 13, kind: output, shape index: {}]
  %s14 = sld [smem:[#allocation0]]
  $region89: #{tpu_custom_call.1} parent=0
    _
  %s16 = ssub.s32 1, %s14
  %s17 = scalar_select 0, %s16, %s14
  $region1: #{tpu_custom_call.1} parent=0
    #allocation5 [shape = 'u8[8192]{0}', space=vmem, size = 0x2000, scoped, tag = 'output window, operand 0']
    #allocation6 [shape = 's32[2]{0}', space=sflag, size = 0x8, scoped, tag = 'scoped memory for tpu_custom_call.1']
    %18 = vsyncpa [#allocation6], 0
    %s19 = scalar_lea.sflag [#allocation6], 1
    %20 = vsyncpa %s19, 0
    loop: start=0, step=1, limit=4
    $region2: #{tpu_custom_call.1} parent=1 // loop_pre_header
      _
    $region3: #{tpu_custom_call.1} parent=1 // loop_header
      %s22 = sphi 0, %s26
      %p23 = scmp.ge.s32.totalorder %s22, 4
      %s29 = sphi 0, %s41
      %s30 = sphi 0, %s37
      %s31 = sphi 0, %s29
      %s32 = sphi 0, %s30
      %s33 = sphi 0, %s31
      %s34 = sphi 0, %s32
      %s44 = sphi 0, %s46
      %s47 = sphi 0, %s44
      %s48 = sphi 0, %s47
      %s64 = sphi 0, %s48
      %s68 = sphi 0, %s68
      %s70 = sphi 0, %s68
      %s71 = sphi 0, %s70
      %s85 = sphi 0, %s71
      %s89 = sphi 0, %s89
      %s91 = sphi 0, %s89
      %s92 = sphi 0, %s91
      %s106 = sphi 0, %s92
      %s110 = sphi 0, %s110
      %s112 = sphi 0, %s110
      %s113 = sphi 0, %s112
      %s127 = sphi 0, %s113
      %s131 = sphi 0, %s131
      %s133 = sphi 0, %s131
      %s134 = sphi 0, %s133
      %s148 = sphi 0, %s134
      %s152 = sphi 0, %s152
      %s154 = sphi 0, %s152
      %s155 = sphi 0, %s154
      %s169 = sphi 0, %s155
      %s173 = sphi 0, %s173
      %s175 = sphi 0, %s173
      %s176 = sphi 0, %s175
      %s190 = sphi 0, %s176
      %s194 = sphi 0, %s194
      %s196 = sphi 0, %s194
      %s197 = sphi 0, %s196
      %s211 = sphi 0, %s197
      %s215 = sphi 0, %s215
      %s217 = sphi 0, %s215
      %s218 = sphi 0, %s217
      %s232 = sphi 0, %s218
      %s236 = sphi 0, %s236
      %s238 = sphi 0, %s236
      %s239 = sphi 0, %s238
      %s253 = sphi 0, %s239
      %s257 = sphi 0, %s257
      %s259 = sphi 0, %s257
      %s260 = sphi 0, %s259
      %s274 = sphi 0, %s260
      %s278 = sphi 0, %s278
      %s280 = sphi 0, %s278
      %s281 = sphi 0, %s280
      %s295 = sphi 0, %s281
      %s299 = sphi 0, %s299
      %s301 = sphi 0, %s299
      %s302 = sphi 0, %s301
      %s316 = sphi 0, %s302
      %s324 = sphi 0, %s326
      %s327 = sphi 0, %s324
      %s328 = sphi 0, %s327
      %s344 = sphi 0, %s328
    $region4: #{tpu_custom_call.1} parent=1 // loop_header_branch
      %25 = sbr.rel (%p23) target = $region8
    $region5: #{tpu_custom_call.1} parent=1 // loop_body
      %s27 = ssub.s32 %s22, 1
      %s28 = ssub.s32 %s22, 2
      %s35 = sadd.s32 1, %s30
      %p36 = scmp.ge.s32.totalorder %s35, 1
      %s37 = scalar_select %p36, 0, %s35
      %s38 = sadd.s32 1, %s29
      %s39 = scalar_select %p36, %s38, %s29
      %p40 = scmp.ge.s32.totalorder %s39, 2
      %s41 = scalar_select %p40, 0, %s39
      %s42 = ssub.s32 %s29, %s41
      %p43 = scmp.eq.s32.totalorder %s42, 0
      %s45 = sadd.s32 %s44, 1
      %s46 = scalar_select %p43, %s44, %s45
      %p49 = pneg %p43
      %p50 = scmp.eq.s32.totalorder %s22, 1
      %p51 = por %p49, %p50
      %p52 = scmp.ne.s32.totalorder %s44, %s47
      %p53 = scmp.eq.s32.totalorder %s22, 0
      %p54 = por %p52, %p53
      %p55 = scmp.ne.s32.totalorder %s44, %s47
      %p56 = scmp.eq.s32.totalorder %s27, 1
      %p57 = por %p55, %p56
      %p58 = scmp.ne.s32.totalorder %s47, %s48
      %p59 = scmp.eq.s32.totalorder %s27, 0
      %p60 = por %p58, %p59
      %p61 = scmp.ne.s32.totalorder %s47, %s48
      %p62 = scmp.eq.s32.totalorder %s28, 1
      %p63 = por %p61, %p62
      %p65 = scmp.ne.s32.totalorder %s48, %s64
      %p66 = scmp.eq.s32.totalorder %s28, 0
      %p67 = por %p65, %p66
      %s69 = sadd.s32 %s68, 1
      %p72 = scmp.eq.s32.totalorder %s22, 1
      %p73 = scmp.ne.s32.totalorder %s68, %s70
      %p74 = scmp.eq.s32.totalorder %s22, 0
      %p75 = por %p73, %p74
      %p76 = scmp.ne.s32.totalorder %s68, %s70
      %p77 = scmp.eq.s32.totalorder %s27, 1
      %p78 = por %p76, %p77
      %p79 = scmp.ne.s32.totalorder %s70, %s71
      %p80 = scmp.eq.s32.totalorder %s27, 0
      %p81 = por %p79, %p80
      %p82 = scmp.ne.s32.totalorder %s70, %s71
      %p83 = scmp.eq.s32.totalorder %s28, 1
      %p84 = por %p82, %p83
      %p86 = scmp.ne.s32.totalorder %s71, %s85
      %p87 = scmp.eq.s32.totalorder %s28, 0
      %p88 = por %p86, %p87
      %s90 = sadd.s32 %s89, 1
      %p93 = scmp.eq.s32.totalorder %s22, 1
      %p94 = scmp.ne.s32.totalorder %s89, %s91
      %p95 = scmp.eq.s32.totalorder %s22, 0
      %p96 = por %p94, %p95
      %p97 = scmp.ne.s32.totalorder %s89, %s91
      %p98 = scmp.eq.s32.totalorder %s27, 1
      %p99 = por %p97, %p98
      %p100 = scmp.ne.s32.totalorder %s91, %s92
      %p101 = scmp.eq.s32.totalorder %s27, 0
      %p102 = por %p100, %p101
      %p103 = scmp.ne.s32.totalorder %s91, %s92
      %p104 = scmp.eq.s32.totalorder %s28, 1
      %p105 = por %p103, %p104
      %p107 = scmp.ne.s32.totalorder %s92, %s106
      %p108 = scmp.eq.s32.totalorder %s28, 0
      %p109 = por %p107, %p108
      %s111 = sadd.s32 %s110, 1
      %p114 = scmp.eq.s32.totalorder %s22, 1
      %p115 = scmp.ne.s32.totalorder %s110, %s112
      %p116 = scmp.eq.s32.totalorder %s22, 0
      %p117 = por %p115, %p116
      %p118 = scmp.ne.s32.totalorder %s110, %s112
      %p119 = scmp.eq.s32.totalorder %s27, 1
      %p120 = por %p118, %p119
      %p121 = scmp.ne.s32.totalorder %s112, %s113
      %p122 = scmp.eq.s32.totalorder %s27, 0
      %p123 = por %p121, %p122
      %p124 = scmp.ne.s32.totalorder %s112, %s113
      %p125 = scmp.eq.s32.totalorder %s28, 1
      %p126 = por %p124, %p125
      %p128 = scmp.ne.s32.totalorder %s113, %s127
      %p129 = scmp.eq.s32.totalorder %s28, 0
      %p130 = por %p128, %p129
      %s132 = sadd.s32 %s131, 1
      %p135 = scmp.eq.s32.totalorder %s22, 1
      %p136 = scmp.ne.s32.totalorder %s131, %s133
      %p137 = scmp.eq.s32.totalorder %s22, 0
      %p138 = por %p136, %p137
      %p139 = scmp.ne.s32.totalorder %s131, %s133
      %p140 = scmp.eq.s32.totalorder %s27, 1
      %p141 = por %p139, %p140
      %p142 = scmp.ne.s32.totalorder %s133, %s134
      %p143 = scmp.eq.s32.totalorder %s27, 0
      %p144 = por %p142, %p143
      %p145 = scmp.ne.s32.totalorder %s133, %s134
      %p146 = scmp.eq.s32.totalorder %s28, 1
      %p147 = por %p145, %p146
      %p149 = scmp.ne.s32.totalorder %s134, %s148
      %p150 = scmp.eq.s32.totalorder %s28, 0
      %p151 = por %p149, %p150
      %s153 = sadd.s32 %s152, 1
      %p156 = scmp.eq.s32.totalorder %s22, 1
      %p157 = scmp.ne.s32.totalorder %s152, %s154
      %p158 = scmp.eq.s32.totalorder %s22, 0
      %p159 = por %p157, %p158
      %p160 = scmp.ne.s32.totalorder %s152, %s154
      %p161 = scmp.eq.s32.totalorder %s27, 1
      %p162 = por %p160, %p161
      %p163 = scmp.ne.s32.totalorder %s154, %s155
      %p164 = scmp.eq.s32.totalorder %s27, 0
      %p165 = por %p163, %p164
      %p166 = scmp.ne.s32.totalorder %s154, %s155
      %p167 = scmp.eq.s32.totalorder %s28, 1
      %p168 = por %p166, %p167
      %p170 = scmp.ne.s32.totalorder %s155, %s169
      %p171 = scmp.eq.s32.totalorder %s28, 0
      %p172 = por %p170, %p171
      %s174 = sadd.s32 %s173, 1
      %p177 = scmp.eq.s32.totalorder %s22, 1
      %p178 = scmp.ne.s32.totalorder %s173, %s175
      %p179 = scmp.eq.s32.totalorder %s22, 0
      %p180 = por %p178, %p179
      %p181 = scmp.ne.s32.totalorder %s173, %s175
      %p182 = scmp.eq.s32.totalorder %s27, 1
      %p183 = por %p181, %p182
      %p184 = scmp.ne.s32.totalorder %s175, %s176
      %p185 = scmp.eq.s32.totalorder %s27, 0
      %p186 = por %p184, %p185
      %p187 = scmp.ne.s32.totalorder %s175, %s176
      %p188 = scmp.eq.s32.totalorder %s28, 1
      %p189 = por %p187, %p188
      %p191 = scmp.ne.s32.totalorder %s176, %s190
      %p192 = scmp.eq.s32.totalorder %s28, 0
      %p193 = por %p191, %p192
      %s195 = sadd.s32 %s194, 1
      %p198 = scmp.eq.s32.totalorder %s22, 1
      %p199 = scmp.ne.s32.totalorder %s194, %s196
      %p200 = scmp.eq.s32.totalorder %s22, 0
      %p201 = por %p199, %p200
      %p202 = scmp.ne.s32.totalorder %s194, %s196
      %p203 = scmp.eq.s32.totalorder %s27, 1
      %p204 = por %p202, %p203
      %p205 = scmp.ne.s32.totalorder %s196, %s197
      %p206 = scmp.eq.s32.totalorder %s27, 0
      %p207 = por %p205, %p206
      %p208 = scmp.ne.s32.totalorder %s196, %s197
      %p209 = scmp.eq.s32.totalorder %s28, 1
      %p210 = por %p208, %p209
      %p212 = scmp.ne.s32.totalorder %s197, %s211
      %p213 = scmp.eq.s32.totalorder %s28, 0
      %p214 = por %p212, %p213
      %s216 = sadd.s32 %s215, 1
      %p219 = scmp.eq.s32.totalorder %s22, 1
      %p220 = scmp.ne.s32.totalorder %s215, %s217
      %p221 = scmp.eq.s32.totalorder %s22, 0
      %p222 = por %p220, %p221
      %p223 = scmp.ne.s32.totalorder %s215, %s217
      %p224 = scmp.eq.s32.totalorder %s27, 1
      %p225 = por %p223, %p224
      %p226 = scmp.ne.s32.totalorder %s217, %s218
      %p227 = scmp.eq.s32.totalorder %s27, 0
      %p228 = por %p226, %p227
      %p229 = scmp.ne.s32.totalorder %s217, %s218
      %p230 = scmp.eq.s32.totalorder %s28, 1
      %p231 = por %p229, %p230
      %p233 = scmp.ne.s32.totalorder %s218, %s232
      %p234 = scmp.eq.s32.totalorder %s28, 0
      %p235 = por %p233, %p234
      %s237 = sadd.s32 %s236, 1
      %p240 = scmp.eq.s32.totalorder %s22, 1
      %p241 = scmp.ne.s32.totalorder %s236, %s238
      %p242 = scmp.eq.s32.totalorder %s22, 0
      %p243 = por %p241, %p242
      %p244 = scmp.ne.s32.totalorder %s236, %s238
      %p245 = scmp.eq.s32.totalorder %s27, 1
      %p246 = por %p244, %p245
      %p247 = scmp.ne.s32.totalorder %s238, %s239
      %p248 = scmp.eq.s32.totalorder %s27, 0
      %p249 = por %p247, %p248
      %p250 = scmp.ne.s32.totalorder %s238, %s239
      %p251 = scmp.eq.s32.totalorder %s28, 1
      %p252 = por %p250, %p251
      %p254 = scmp.ne.s32.totalorder %s239, %s253
      %p255 = scmp.eq.s32.totalorder %s28, 0
      %p256 = por %p254, %p255
      %s258 = sadd.s32 %s257, 1
      %p261 = scmp.eq.s32.totalorder %s22, 1
      %p262 = scmp.ne.s32.totalorder %s257, %s259
      %p263 = scmp.eq.s32.totalorder %s22, 0
      %p264 = por %p262, %p263
      %p265 = scmp.ne.s32.totalorder %s257, %s259
      %p266 = scmp.eq.s32.totalorder %s27, 1
      %p267 = por %p265, %p266
      %p268 = scmp.ne.s32.totalorder %s259, %s260
      %p269 = scmp.eq.s32.totalorder %s27, 0
      %p270 = por %p268, %p269
      %p271 = scmp.ne.s32.totalorder %s259, %s260
      %p272 = scmp.eq.s32.totalorder %s28, 1
      %p273 = por %p271, %p272
      %p275 = scmp.ne.s32.totalorder %s260, %s274
      %p276 = scmp.eq.s32.totalorder %s28, 0
      %p277 = por %p275, %p276
      %s279 = sadd.s32 %s278, 1
      %p282 = scmp.eq.s32.totalorder %s22, 1
      %p283 = scmp.ne.s32.totalorder %s278, %s280
      %p284 = scmp.eq.s32.totalorder %s22, 0
      %p285 = por %p283, %p284
      %p286 = scmp.ne.s32.totalorder %s278, %s280
      %p287 = scmp.eq.s32.totalorder %s27, 1
      %p288 = por %p286, %p287
      %p289 = scmp.ne.s32.totalorder %s280, %s281
      %p290 = scmp.eq.s32.totalorder %s27, 0
      %p291 = por %p289, %p290
      %p292 = scmp.ne.s32.totalorder %s280, %s281
      %p293 = scmp.eq.s32.totalorder %s28, 1
      %p294 = por %p292, %p293
      %p296 = scmp.ne.s32.totalorder %s281, %s295
      %p297 = scmp.eq.s32.totalorder %s28, 0
      %p298 = por %p296, %p297
      %s300 = sadd.s32 %s299, 1
      %p303 = scmp.eq.s32.totalorder %s22, 1
      %p304 = scmp.ne.s32.totalorder %s299, %s301
      %p305 = scmp.eq.s32.totalorder %s22, 0
      %p306 = por %p304, %p305
      %p307 = scmp.ne.s32.totalorder %s299, %s301
      %p308 = scmp.eq.s32.totalorder %s27, 1
      %p309 = por %p307, %p308
      %p310 = scmp.ne.s32.totalorder %s301, %s302
      %p311 = scmp.eq.s32.totalorder %s27, 0
      %p312 = por %p310, %p311
      %p313 = scmp.ne.s32.totalorder %s301, %s302
      %p314 = scmp.eq.s32.totalorder %s28, 1
      %p315 = por %p313, %p314
      %p317 = scmp.ne.s32.totalorder %s302, %s316
      %p318 = scmp.eq.s32.totalorder %s28, 0
      %p319 = por %p317, %p318
      %s320 = ssub.s32 %s29, %s41
      %s321 = ssub.s32 %s30, %s37
      %s322 = sor.u32 %s320, %s321
      %p323 = scmp.eq.s32.totalorder %s322, 0
      %s325 = sadd.s32 %s324, 1
      %s326 = scalar_select %p323, %s324, %s325
      %p329 = pneg %p323
      %p330 = scmp.eq.s32.totalorder %s22, 1
      %p331 = por %p329, %p330
      %p332 = scmp.ne.s32.totalorder %s324, %s327
      %p333 = scmp.eq.s32.totalorder %s22, 0
      %p334 = por %p332, %p333
      %p335 = scmp.ne.s32.totalorder %s324, %s327
      %p336 = scmp.eq.s32.totalorder %s27, 1
      %p337 = por %p335, %p336
      %p338 = scmp.ne.s32.totalorder %s327, %s328
      %p339 = scmp.eq.s32.totalorder %s27, 0
      %p340 = por %p338, %p339
      %p341 = scmp.ne.s32.totalorder %s327, %s328
      %p342 = scmp.eq.s32.totalorder %s28, 1
      %p343 = por %p341, %p342
      %p345 = scmp.ne.s32.totalorder %s328, %s344
      %p346 = scmp.eq.s32.totalorder %s28, 0
      %p347 = por %p345, %p346
      %p348 = scmp.le.s32.totalorder 1, %s22
      %p349 = scmp.lt.s32.totalorder %s22, 3
      %p350 = pnand %p348, %p349
      %p351 = pneg %p350
      // Predicated region
      $region9: #{tpu_custom_call.1} parent=5 // pred_check
        _
      $region10: #{tpu_custom_call.1} parent=5 // pred_check_branch
        %353 = sbr.rel (%p350) target = $region12
      $region11: #{tpu_custom_call.1} parent=5 // pred_region
        %s354 = ssub.s32 %s22, 1
        // Predicated region
        $region13: #{tpu_custom_call.1} parent=11 // pred_check
          %p355 = pneg %p81
        $region14: #{tpu_custom_call.1} parent=11 // pred_check_branch
          %357 = sbr.rel (%p355) target = $region16
        $region15: #{tpu_custom_call.1} parent=11 // pred_region
          _
        $region16: #{tpu_custom_call.1} parent=11 // pred_fallthru
          _
        // Predicated region
        $region17: #{tpu_custom_call.1} parent=11 // pred_check
          %p358 = pneg %p102
        $region18: #{tpu_custom_call.1} parent=11 // pred_check_branch
          %360 = sbr.rel (%p358) target = $region20
        $region19: #{tpu_custom_call.1} parent=11 // pred_region
          _
        $region20: #{tpu_custom_call.1} parent=11 // pred_fallthru
          _
        // Predicated region
        $region21: #{tpu_custom_call.1} parent=11 // pred_check
          %p361 = pneg %p123
        $region22: #{tpu_custom_call.1} parent=11 // pred_check_branch
          %363 = sbr.rel (%p361) target = $region24
        $region23: #{tpu_custom_call.1} parent=11 // pred_region
          _
        $region24: #{tpu_custom_call.1} parent=11 // pred_fallthru
          _
        // Predicated region
        $region25: #{tpu_custom_call.1} parent=11 // pred_check
          %p364 = pneg %p144
        $region26: #{tpu_custom_call.1} parent=11 // pred_check_branch
          %366 = sbr.rel (%p364) target = $region28
        $region27: #{tpu_custom_call.1} parent=11 // pred_region
          _
        $region28: #{tpu_custom_call.1} parent=11 // pred_fallthru
          _
        // Predicated region
        $region29: #{tpu_custom_call.1} parent=11 // pred_check
          %p367 = pneg %p165
        $region30: #{tpu_custom_call.1} parent=11 // pred_check_branch
          %369 = sbr.rel (%p367) target = $region32
        $region31: #{tpu_custom_call.1} parent=11 // pred_region
          _
        $region32: #{tpu_custom_call.1} parent=11 // pred_fallthru
          _
        // Predicated region
        $region33: #{tpu_custom_call.1} parent=11 // pred_check
          %p370 = pneg %p186
        $region34: #{tpu_custom_call.1} parent=11 // pred_check_branch
          %372 = sbr.rel (%p370) target = $region36
        $region35: #{tpu_custom_call.1} parent=11 // pred_region
          _
        $region36: #{tpu_custom_call.1} parent=11 // pred_fallthru
          _
        // Predicated region
        $region37: #{tpu_custom_call.1} parent=11 // pred_check
          %p373 = pneg %p207
        $region38: #{tpu_custom_call.1} parent=11 // pred_check_branch
          %375 = sbr.rel (%p373) target = $region40
        $region39: #{tpu_custom_call.1} parent=11 // pred_region
          _
        $region40: #{tpu_custom_call.1} parent=11 // pred_fallthru
          _
        // Predicated region
        $region41: #{tpu_custom_call.1} parent=11 // pred_check
          %p376 = pneg %p228
        $region42: #{tpu_custom_call.1} parent=11 // pred_check_branch
          %378 = sbr.rel (%p376) target = $region44
        $region43: #{tpu_custom_call.1} parent=11 // pred_region
          _
        $region44: #{tpu_custom_call.1} parent=11 // pred_fallthru
          _
        // Predicated region
        $region45: #{tpu_custom_call.1} parent=11 // pred_check
          %p379 = pneg %p249
        $region46: #{tpu_custom_call.1} parent=11 // pred_check_branch
          %381 = sbr.rel (%p379) target = $region48
        $region47: #{tpu_custom_call.1} parent=11 // pred_region
          _
        $region48: #{tpu_custom_call.1} parent=11 // pred_fallthru
          _
        // Predicated region
        $region49: #{tpu_custom_call.1} parent=11 // pred_check
          %p382 = pneg %p270
        $region50: #{tpu_custom_call.1} parent=11 // pred_check_branch
          %384 = sbr.rel (%p382) target = $region52
        $region51: #{tpu_custom_call.1} parent=11 // pred_region
          _
        $region52: #{tpu_custom_call.1} parent=11 // pred_fallthru
          _
        // Predicated region
        $region53: #{tpu_custom_call.1} parent=11 // pred_check
          %p385 = pneg %p291
        $region54: #{tpu_custom_call.1} parent=11 // pred_check_branch
          %387 = sbr.rel (%p385) target = $region56
        $region55: #{tpu_custom_call.1} parent=11 // pred_region
          _
        $region56: #{tpu_custom_call.1} parent=11 // pred_fallthru
          _
        // Predicated region
        $region57: #{tpu_custom_call.1} parent=11 // pred_check
          %p388 = pneg %p312
        $region58: #{tpu_custom_call.1} parent=11 // pred_check_branch
          %390 = sbr.rel (%p388) target = $region60
        $region59: #{tpu_custom_call.1} parent=11 // pred_region
          _
        $region60: #{tpu_custom_call.1} parent=11 // pred_fallthru
          _
      $region12: #{tpu_custom_call.1} parent=5 // pred_fallthru
        _
      %p391 = scmp.lt.s32.totalorder %s22, 2
      // Predicated region
      $region61: #{tpu_custom_call.1} parent=5 // pred_check
        %p392 = pneg %p391
      $region62: #{tpu_custom_call.1} parent=5 // pred_check_branch
        %394 = sbr.rel (%p392) target = $region64
      $region63: #{tpu_custom_call.1} parent=5 // pred_region
        // Predicated region
        $region65: #{tpu_custom_call.1} parent=63 // pred_check
          %p395 = pneg %p54
        $region66: #{tpu_custom_call.1} parent=63 // pred_check_branch
          %397 = sbr.rel (%p395) target = $region68
        $region67: #{tpu_custom_call.1} parent=63 // pred_region
          %p398 = scmp.lt.s32.totalorder %s29, 1
          %s399 = scalar_select %p398, %s29, 1
          %s400 = smul.addr %s399, 4
          %s401 = scalar_lea.vmem %s0, %s400
        $region68: #{tpu_custom_call.1} parent=63 // pred_fallthru
          _
      $region64: #{tpu_custom_call.1} parent=5 // pred_fallthru
        _
      %p402 = scmp.le.s32.totalorder 1, %s22
      %p403 = scmp.lt.s32.totalorder %s22, 3
      %p404 = pnand %p402, %p403
      %p405 = pneg %p404
      // Predicated region
      $region69: #{tpu_custom_call.1} parent=5 // pred_check
        _
      $region70: #{tpu_custom_call.1} parent=5 // pred_check_branch
        %407 = sbr.rel (%p404) target = $region72
      $region71: #{tpu_custom_call.1} parent=5 // pred_region
        %s408 = ssub.s32 %s22, 1
        %p409 = scmp.lt.s32.totalorder %s31, 1
        %s410 = scalar_select %p409, %s31, 1
        %s411 = smul.addr %s410, 4
        %s412 = scalar_lea.vmem %s0, %s411
        %p413 = pneg %p60
        %p414 = pneg %p57
        %p415 = pneg %p81
        %p416 = pneg %p78
        %p417 = pneg %p102
        %p418 = pneg %p99
        %p419 = pneg %p123
        %p420 = pneg %p120
        %p421 = pneg %p144
        %p422 = pneg %p141
        %p423 = pneg %p165
        %p424 = pneg %p162
        %p425 = pneg %p186
        %p426 = pneg %p183
        %p427 = pneg %p207
        %p428 = pneg %p204
        %p429 = pneg %p228
        %p430 = pneg %p225
        %p431 = pneg %p249
        %p432 = pneg %p246
        %p433 = pneg %p270
        %p434 = pneg %p267
        %p435 = pneg %p291
        %p436 = pneg %p288
        %p437 = pneg %p312
        %p438 = pneg %p309
        %p439 = pneg %p340
        %p440 = pneg %p337
        %s441 = sand.u32 %s327, 1
        %s442 = scalar_lea.sflag [#allocation6], %s441
        %s443 = sand.u32 %s327, 1
        %s444 = smul.addr %s443, 8
        %s445 = scalar_lea.vmem [#allocation5], %s444
        %p446 = scmp.lt.s32.totalorder %s31, 1
        %s447 = scalar_select %p446, %s31, 1
        %s448 = smul.addr %s447, 4
        %s449 = scalar_lea.vmem %s0, %s448
        %p451 = scmp.eq.s32.totalorder %s32, 0
        // Predicated region
        $region73: #{tpu_custom_call.1} parent=71 // pred_check
          %p452 = pneg %p451
        $region74: #{tpu_custom_call.1} parent=71 // pred_check_branch
          %454 = sbr.rel (%p452) target = $region76
        $region75: #{tpu_custom_call.1} parent=71 // pred_region
          %v455 = vld [vmem:[%s449] sm:$0xf]
          %v456 = vunpack.c.l.bf16 %v455
          %v457 = vld [vmem:[%s1] sm:$0x1]
          %v458 = vld [vmem:[%s2] sm:$0x1]
          %vm459 = vcmask 261120
          %v460 = vsel %vm459, %v456, 0.0
          %461 = vadd.xlane.f32.xlu0 %v460
          %v462 = vpop.xlane.xlu0 %461
          %v463 = vrcp.pop 32.0
          %v464 = vmul.f32 %v462, %v463
          %v465 = vsub.f32 %v456, %v464
          %v466 = vmul.f32 %v465, %v465
          %v467 = vsel %vm459, %v466, 0.0
          %468 = vadd.xlane.f32.xlu0 %v467
          %v469 = vpop.xlane.xlu0 %468
          %v470 = vmul.f32 %v469, %v463
          %v471 = vadd.f32 %v470, 1e-05
          %v472 = vrsqrt.pop %v471
          %v473 = vmul.f32 %v465, %v472
          %v475 = vlaneseq
          %v476 = vshrl.u32 %v475, 7
          %v477 = vsub.s32 0, %v476
          %v478 = vrot.slane %v457, %v477
          %v480 = vmul.f32 %v473, %v478
          %v482 = vlaneseq
          %v483 = vshrl.u32 %v482, 7
          %v484 = vsub.s32 0, %v483
          %v485 = vrot.slane %v458, %v484
          %v487 = vadd.f32 %v480, %v485
          %v488 = vpack.c.bf16 %v487, %v487
          %vm489 = vcmask 257024
          %490 = vst.msk [vmem:[#allocation2] sm:$0xf] %vm489, %v488
          %v491 = vld [vmem:[%s4] sm:$0xf]
          %v492 = vld [vmem:[%s4 + $0x4] sm:$0xf]
          %v493 = vld [vmem:[%s4 + $0x8] sm:$0xf]
          %v494 = vld [vmem:[%s4 + $0xc] sm:$0xf]
          %v499 = vunpack.c.l.b16 %v491
          %v500 = vunpack.c.l.b16 %v492
          %v501 = vunpack.c.l.b16 %v493
          %v502 = vunpack.c.l.b16 %v494
          %v503 = vpack.c.b16 %v500, %v499
          %v504 = vpack.c.b16 %v502, %v501
          %v508 = vsel %vm459, %v488, 0
          %510 = vmatprep.subr.bf16.mxu0 0
          %511 = vmatpush1.bf16.msra.mxu0 %v503
          %512 = vmatprep.subr.bf16.mxu0 0
          %513 = vmatpush1.bf16.msra.mxu0 %v504
          %514 = vmatprep.subr.bf16.mxu0 0
          %515 = vmatpush1.bf16.msra.mxu0 0
          %516 = vmatprep.subr.bf16.mxu0 0
          %517 = vmatpush1.bf16.msra.mxu0 0
          %518 = vmatprep.subr.bf16.mxu0 0
          %519 = vmatpush1.bf16.msra.mxu0 0
          %520 = vmatprep.subr.bf16.mxu0 0
          %521 = vmatpush1.bf16.msra.mxu0 0
          %522 = vmatprep.subr.bf16.mxu0 0
          %523 = vmatpush1.bf16.msra.mxu0 0
          %524 = vmatprep.subr.bf16.mxu0 0
          %525 = vmatpush1.bf16.msra.mxu0 0
          %526 = vmatprep.subr.bf16.mxu0 0
          %527 = vmatpush1.bf16.msra.mxu0 0
          %528 = vmatprep.subr.bf16.mxu0 0
          %529 = vmatpush1.bf16.msra.mxu0 0
          %530 = vmatprep.subr.bf16.mxu0 0
          %531 = vmatpush1.bf16.msra.mxu0 0
          %532 = vmatprep.subr.bf16.mxu0 0
          %533 = vmatpush1.bf16.msra.mxu0 0
          %534 = vmatprep.subr.bf16.mxu0 0
          %535 = vmatpush1.bf16.msra.mxu0 0
          %536 = vmatprep.subr.bf16.mxu0 0
          %537 = vmatpush1.bf16.msra.mxu0 0
          %538 = vmatprep.subr.bf16.mxu0 0
          %539 = vmatpush1.bf16.msra.mxu0 0
          %540 = vmatprep.subr.bf16.mxu0 0
          %541 = vmatpush1.bf16.msra.mxu0 0
          %542 = vmatprep.mubr.bf16.mxu0 0
          %543 = vmatmul.mubr.bf16.gmra.mrb[0].mxu0 %v508
          %v544 = vpop.f32.mrb[0].mxu0
          %v545 = vadd.f32 0.0, %v544
          %v546 = vpop.f32.mrb[0].mxu0
          %v547 = vpop.f32.mrb[0].mxu0
          %v548 = vpop.f32.mrb[0].mxu0
          %549 = vdwg.mxu0
          %v550 = vpack.c.bf16 %v545, %v545
          %vm551 = vcmask 60416
          %552 = vst.msk [vmem:[#allocation3] sm:$0xf] %vm551, %v550
          %v554 = vunpack.c.l.b16 %v550
          %v555 = vpack.c.b16 %v554, %v554
          %556 = vrot.lane.b32.xlu0 %v555, 96
          %v557 = vpop.permute.xlu0 %556
          %559 = vst.msk [vmem:[#allocation4] sm:$0xf] %vm551, %v557
          %560 = vrot.lane.b32.xlu0 %v555, 120
          %v561 = vpop.permute.xlu0 %560
          %s563 = scalar_lea.vmem [#allocation3], 4
          %564 = vst.msk [vmem:[%s563] sm:$0xf] %vm551, %v561
          %565 = vrot.lane.b32.xlu0 %v555, 88
          %v566 = vpop.permute.xlu0 %565
          %s568 = scalar_lea.vmem [#allocation4], 4
          %569 = vst.msk [vmem:[%s568] sm:$0xf] %vm551, %v566
          %570 = vrot.lane.b32.xlu0 %v555, 112
          %v571 = vpop.permute.xlu0 %570
          %s573 = scalar_lea.vmem [#allocation3], 8
          %574 = vst.msk [vmem:[%s573] sm:$0xf] %vm551, %v571
          %575 = vrot.lane.b32.xlu0 %v555, 80
          %v576 = vpop.permute.xlu0 %575
          %s578 = scalar_lea.vmem [#allocation4], 8
          %579 = vst.msk [vmem:[%s578] sm:$0xf] %vm551, %v576
          %580 = vrot.lane.b32.xlu0 %v555, 104
          %v581 = vpop.permute.xlu0 %580
          %s583 = scalar_lea.vmem [#allocation3], 12
          %584 = vst.msk [vmem:[%s583] sm:$0xf] %vm551, %v581
          %585 = vrot.lane.b32.xlu0 %v555, 72
          %v586 = vpop.permute.xlu0 %585
          %s588 = scalar_lea.vmem [#allocation4], 12
          %589 = vst.msk [vmem:[%s588] sm:$0xf] %vm551, %v586
        $region76: #{tpu_custom_call.1} parent=71 // pred_fallthru
          _
        %s590 = smul.u32 %s32, 8
        %s591 = sshra.s32 %s590, 3
        %s592 = sand.u32 %s590, 7
        %s593 = smul.addr %s591, 4
        %s594 = scalar_lea.vmem %s449, %s593
        %v595 = vld [vmem:[%s594] sm:$0xf]
        %v596 = vunpack.c.l.bf16 %v595
        %s597 = smul.addr %s591, 4
        %s598 = scalar_lea.vmem [#allocation2], %s597
        %v599 = vld [vmem:[%s598] sm:$0xf]
        %v600 = vld [vmem:[%s3] sm:$0xf]
        %v601 = vld [vmem:[%s3 + $0x4] sm:$0xf]
        %v602 = vld [vmem:[%s3 + $0x8] sm:$0xf]
        %v603 = vld [vmem:[%s3 + $0xc] sm:$0xf]
        %v608 = vunpack.c.l.b16 %v600
        %v609 = vunpack.c.l.b16 %v601
        %v610 = vunpack.c.l.b16 %v602
        %v611 = vunpack.c.l.b16 %v603
        %v612 = vpack.c.b16 %v609, %v608
        %v613 = vpack.c.b16 %v611, %v610
        %vm616 = vcmask 261120
        %v618 = vsel %vm616, %v599, 0
        %620 = vmatprep.subr.bf16.mxu0 0
        %621 = vmatpush1.bf16.msra.mxu0 %v612
        %622 = vmatprep.subr.bf16.mxu0 0
        %623 = vmatpush1.bf16.msra.mxu0 %v613
        %624 = vmatprep.subr.bf16.mxu0 0
        %625 = vmatpush1.bf16.msra.mxu0 0
        %626 = vmatprep.subr.bf16.mxu0 0
        %627 = vmatpush1.bf16.msra.mxu0 0
        %628 = vmatprep.subr.bf16.mxu0 0
        %629 = vmatpush1.bf16.msra.mxu0 0
        %630 = vmatprep.subr.bf16.mxu0 0
        %631 = vmatpush1.bf16.msra.mxu0 0
        %632 = vmatprep.subr.bf16.mxu0 0
        %633 = vmatpush1.bf16.msra.mxu0 0
        %634 = vmatprep.subr.bf16.mxu0 0
        %635 = vmatpush1.bf16.msra.mxu0 0
        %636 = vmatprep.subr.bf16.mxu0 0
        %637 = vmatpush1.bf16.msra.mxu0 0
        %638 = vmatprep.subr.bf16.mxu0 0
        %639 = vmatpush1.bf16.msra.mxu0 0
        %640 = vmatprep.subr.bf16.mxu0 0
        %641 = vmatpush1.bf16.msra.mxu0 0
        %642 = vmatprep.subr.bf16.mxu0 0
        %643 = vmatpush1.bf16.msra.mxu0 0
        %644 = vmatprep.subr.bf16.mxu0 0
        %645 = vmatpush1.bf16.msra.mxu0 0
        %646 = vmatprep.subr.bf16.mxu0 0
        %647 = vmatpush1.bf16.msra.mxu0 0
        %648 = vmatprep.subr.bf16.mxu0 0
        %649 = vmatpush1.bf16.msra.mxu0 0
        %650 = vmatprep.subr.bf16.mxu0 0
        %651 = vmatpush1.bf16.msra.mxu0 0
        %652 = vmatprep.mubr.bf16.mxu0 0
        %653 = vmatmul.mubr.bf16.gmra.mrb[0].mxu0 %v618
        %v654 = vpop.f32.mrb[0].mxu0
        %v655 = vadd.f32 0.0, %v654
        %v656 = vpop.f32.mrb[0].mxu0
        %v657 = vpop.f32.mrb[0].mxu0
        %v658 = vpop.f32.mrb[0].mxu0
        %659 = vdwg.mxu0
        %v660 = vpack.c.bf16 %v655, %v655
        %v661 = vld [vmem:[#allocation3] sm:$0xf]
        %vm662 = vcmask 64512
        %v664 = vsel %vm662, %v660, 0
        %v667 = vsel %vm662, %v661, 0
        %669 = vmatprep.subr.bf16.mxu0 0
        %670 = vmatpush1.bf16.xpose.msra.mxu0 %v667
        %671 = vmatprep.subr.bf16.mxu0 0
        %672 = vmatpush1.bf16.xpose.msra.mxu0 0
        %673 = vmatprep.subr.bf16.mxu0 0
        %674 = vmatpush1.bf16.xpose.msra.mxu0 0
        %675 = vmatprep.subr.bf16.mxu0 0
        %676 = vmatpush1.bf16.xpose.msra.mxu0 0
        %677 = vmatprep.subr.bf16.mxu0 0
        %678 = vmatpush1.bf16.xpose.msra.mxu0 0
        %679 = vmatprep.subr.bf16.mxu0 0
        %680 = vmatpush1.bf16.xpose.msra.mxu0 0
        %681 = vmatprep.subr.bf16.mxu0 0
        %682 = vmatpush1.bf16.xpose.msra.mxu0 0
        %683 = vmatprep.subr.bf16.mxu0 0
        %684 = vmatpush1.bf16.xpose.msra.mxu0 0
        %685 = vmatprep.subr.bf16.mxu0 0
        %686 = vmatpush1.bf16.xpose.msra.mxu0 0
        %687 = vmatprep.subr.bf16.mxu0 0
        %688 = vmatpush1.bf16.xpose.msra.mxu0 0
        %689 = vmatprep.subr.bf16.mxu0 0
        %690 = vmatpush1.bf16.xpose.msra.mxu0 0
        %691 = vmatprep.subr.bf16.mxu0 0
        %692 = vmatpush1.bf16.xpose.msra.mxu0 0
        %693 = vmatprep.subr.bf16.mxu0 0
        %694 = vmatpush1.bf16.xpose.msra.mxu0 0
        %695 = vmatprep.subr.bf16.mxu0 0
        %696 = vmatpush1.bf16.xpose.msra.mxu0 0
        %697 = vmatprep.subr.bf16.mxu0 0
        %698 = vmatpush1.bf16.xpose.msra.mxu0 0
        %699 = vmatprep.subr.bf16.mxu0 0
        %700 = vmatpush1.bf16.xpose.msra.mxu0 0
        %701 = vmatprep.mubr.bf16.mxu0 0
        %702 = vmatmul.mubr.bf16.gmra.mrb[0].mxu0 %v664
        %v703 = vpop.f32.mrb[0].mxu0
        %v704 = vadd.f32 0.0, %v703
        %v705 = vpop.f32.mrb[0].mxu0
        %v706 = vpop.f32.mrb[0].mxu0
        %v707 = vpop.f32.mrb[0].mxu0
        %708 = vdwg.mxu0
        %v709 = vsel %vm662, %v704, -inf
        %710 = vmax.xlane.f32.xlu0 %v709
        %v711 = vpop.xlane.xlu0 %710
        %v712 = vsub.f32 %v704, %v711
        %v713 = vmul.f32 %v712, 1.442695
        %v714 = vpow.pop %v713
        %v715 = vsel %vm662, %v714, 0.0
        %716 = vadd.xlane.f32.xlu0 %v715
        %v717 = vpop.xlane.xlu0 %716
        %v718 = vrcp.pop %v717
        %v719 = vmul.f32 %v714, %v718
        %v720 = vpack.c.bf16 %v719, %v719
        %v721 = vld [vmem:[#allocation4] sm:$0xf]
        %v723 = vsel %vm662, %v720, 0
        %vm725 = vcmask 1043456
        %v727 = vsel %vm725, %v721, 0
        %729 = vmatprep.subr.bf16.mxu0 0
        %730 = vmatpush1.bf16.msra.mxu0 %v727
        %731 = vmatprep.subr.bf16.mxu0 0
        %732 = vmatpush1.bf16.msra.mxu0 0
        %733 = vmatprep.subr.bf16.mxu0 0
        %734 = vmatpush1.bf16.msra.mxu0 0
        %735 = vmatprep.subr.bf16.mxu0 0
        %736 = vmatpush1.bf16.msra.mxu0 0
        %737 = vmatprep.subr.bf16.mxu0 0
        %738 = vmatpush1.bf16.msra.mxu0 0
        %739 = vmatprep.subr.bf16.mxu0 0
        %740 = vmatpush1.bf16.msra.mxu0 0
        %741 = vmatprep.subr.bf16.mxu0 0
        %742 = vmatpush1.bf16.msra.mxu0 0
        %743 = vmatprep.subr.bf16.mxu0 0
        %744 = vmatpush1.bf16.msra.mxu0 0
        %745 = vmatprep.subr.bf16.mxu0 0
        %746 = vmatpush1.bf16.msra.mxu0 0
        %747 = vmatprep.subr.bf16.mxu0 0
        %748 = vmatpush1.bf16.msra.mxu0 0
        %749 = vmatprep.subr.bf16.mxu0 0
        %750 = vmatpush1.bf16.msra.mxu0 0
        %751 = vmatprep.subr.bf16.mxu0 0
        %752 = vmatpush1.bf16.msra.mxu0 0
        %753 = vmatprep.subr.bf16.mxu0 0
        %754 = vmatpush1.bf16.msra.mxu0 0
        %755 = vmatprep.subr.bf16.mxu0 0
        %756 = vmatpush1.bf16.msra.mxu0 0
        %757 = vmatprep.subr.bf16.mxu0 0
        %758 = vmatpush1.bf16.msra.mxu0 0
        %759 = vmatprep.subr.bf16.mxu0 0
        %760 = vmatpush1.bf16.msra.mxu0 0
        %761 = vmatprep.mubr.bf16.mxu0 0
        %762 = vmatmul.mubr.bf16.gmra.mrb[0].mxu0 %v723
        %v763 = vpop.f32.mrb[0].mxu0
        %v764 = vadd.f32 0.0, %v763
        %v765 = vpop.f32.mrb[0].mxu0
        %v766 = vpop.f32.mrb[0].mxu0
        %v767 = vpop.f32.mrb[0].mxu0
        %768 = vdwg.mxu0
        %v769 = vpack.c.bf16 %v764, %v764
        %v770 = vld [vmem:[%s5] sm:$0xf]
        %s771 = scalar_lea.vmem %s3, 16
        %v772 = vld [vmem:[%s771] sm:$0xf]
        %v773 = vld [vmem:[%s771 + $0x4] sm:$0xf]
        %v774 = vld [vmem:[%s771 + $0x8] sm:$0xf]
        %v775 = vld [vmem:[%s771 + $0xc] sm:$0xf]
        %v780 = vunpack.c.l.b16 %v772
        %v781 = vunpack.c.l.b16 %v773
        %v782 = vunpack.c.l.b16 %v774
        %v783 = vunpack.c.l.b16 %v775
        %v784 = vpack.c.b16 %v781, %v780
        %v785 = vpack.c.b16 %v783, %v782
        %788 = vmatprep.subr.bf16.mxu0 0
        %789 = vmatpush1.bf16.msra.mxu0 %v784
        %790 = vmatprep.subr.bf16.mxu0 0
        %791 = vmatpush1.bf16.msra.mxu0 %v785
        %792 = vmatprep.subr.bf16.mxu0 0
        %793 = vmatpush1.bf16.msra.mxu0 0
        %794 = vmatprep.subr.bf16.mxu0 0
        %795 = vmatpush1.bf16.msra.mxu0 0
        %796 = vmatprep.subr.bf16.mxu0 0
        %797 = vmatpush1.bf16.msra.mxu0 0
        %798 = vmatprep.subr.bf16.mxu0 0
        %799 = vmatpush1.bf16.msra.mxu0 0
        %800 = vmatprep.subr.bf16.mxu0 0
        %801 = vmatpush1.bf16.msra.mxu0 0
        %802 = vmatprep.subr.bf16.mxu0 0
        %803 = vmatpush1.bf16.msra.mxu0 0
        %804 = vmatprep.subr.bf16.mxu0 0
        %805 = vmatpush1.bf16.msra.mxu0 0
        %806 = vmatprep.subr.bf16.mxu0 0
        %807 = vmatpush1.bf16.msra.mxu0 0
        %808 = vmatprep.subr.bf16.mxu0 0
        %809 = vmatpush1.bf16.msra.mxu0 0
        %810 = vmatprep.subr.bf16.mxu0 0
        %811 = vmatpush1.bf16.msra.mxu0 0
        %812 = vmatprep.subr.bf16.mxu0 0
        %813 = vmatpush1.bf16.msra.mxu0 0
        %814 = vmatprep.subr.bf16.mxu0 0
        %815 = vmatpush1.bf16.msra.mxu0 0
        %816 = vmatprep.subr.bf16.mxu0 0
        %817 = vmatpush1.bf16.msra.mxu0 0
        %818 = vmatprep.subr.bf16.mxu0 0
        %819 = vmatpush1.bf16.msra.mxu0 0
        %820 = vmatprep.mubr.bf16.mxu0 0
        %821 = vmatmul.mubr.bf16.gmra.mrb[0].mxu0 %v618
        %v822 = vpop.f32.mrb[0].mxu0
        %v823 = vadd.f32 0.0, %v822
        %v824 = vpop.f32.mrb[0].mxu0
        %v825 = vpop.f32.mrb[0].mxu0
        %v826 = vpop.f32.mrb[0].mxu0
        %827 = vdwg.mxu0
        %v828 = vpack.c.bf16 %v823, %v823
        %s829 = scalar_lea.vmem [#allocation3], 4
        %v830 = vld [vmem:[%s829] sm:$0xf]
        %v832 = vsel %vm662, %v828, 0
        %v835 = vsel %vm662, %v830, 0
        %837 = vmatprep.subr.bf16.mxu0 0
        %838 = vmatpush1.bf16.xpose.msra.mxu0 %v835
        %839 = vmatprep.subr.bf16.mxu0 0
        %840 = vmatpush1.bf16.xpose.msra.mxu0 0
        %841 = vmatprep.subr.bf16.mxu0 0
        %842 = vmatpush1.bf16.xpose.msra.mxu0 0
        %843 = vmatprep.subr.bf16.mxu0 0
        %844 = vmatpush1.bf16.xpose.msra.mxu0 0
        %845 = vmatprep.subr.bf16.mxu0 0
        %846 = vmatpush1.bf16.xpose.msra.mxu0 0
        %847 = vmatprep.subr.bf16.mxu0 0
        %848 = vmatpush1.bf16.xpose.msra.mxu0 0
        %849 = vmatprep.subr.bf16.mxu0 0
        %850 = vmatpush1.bf16.xpose.msra.mxu0 0
        %851 = vmatprep.subr.bf16.mxu0 0
        %852 = vmatpush1.bf16.xpose.msra.mxu0 0
        %853 = vmatprep.subr.bf16.mxu0 0
        %854 = vmatpush1.bf16.xpose.msra.mxu0 0
        %855 = vmatprep.subr.bf16.mxu0 0
        %856 = vmatpush1.bf16.xpose.msra.mxu0 0
        %857 = vmatprep.subr.bf16.mxu0 0
        %858 = vmatpush1.bf16.xpose.msra.mxu0 0
        %859 = vmatprep.subr.bf16.mxu0 0
        %860 = vmatpush1.bf16.xpose.msra.mxu0 0
        %861 = vmatprep.subr.bf16.mxu0 0
        %862 = vmatpush1.bf16.xpose.msra.mxu0 0
        %863 = vmatprep.subr.bf16.mxu0 0
        %864 = vmatpush1.bf16.xpose.msra.mxu0 0
        %865 = vmatprep.subr.bf16.mxu0 0
        %866 = vmatpush1.bf16.xpose.msra.mxu0 0
        %867 = vmatprep.subr.bf16.mxu0 0
        %868 = vmatpush1.bf16.xpose.msra.mxu0 0
        %869 = vmatprep.mubr.bf16.mxu0 0
        %870 = vmatmul.mubr.bf16.gmra.mrb[0].mxu0 %v832
        %v871 = vpop.f32.mrb[0].mxu0
        %v872 = vadd.f32 0.0, %v871
        %v873 = vpop.f32.mrb[0].mxu0
        %v874 = vpop.f32.mrb[0].mxu0
        %v875 = vpop.f32.mrb[0].mxu0
        %876 = vdwg.mxu0
        %v877 = vsel %vm662, %v872, -inf
        %878 = vmax.xlane.f32.xlu0 %v877
        %v879 = vpop.xlane.xlu0 %878
        %v880 = vsub.f32 %v872, %v879
        %v881 = vmul.f32 %v880, 1.442695
        %v882 = vpow.pop %v881
        %v883 = vsel %vm662, %v882, 0.0
        %884 = vadd.xlane.f32.xlu0 %v883
        %v885 = vpop.xlane.xlu0 %884
        %v886 = vrcp.pop %v885
        %v887 = vmul.f32 %v882, %v886
        %v888 = vpack.c.bf16 %v887, %v887
        %s889 = scalar_lea.vmem [#allocation4], 4
        %v890 = vld [vmem:[%s889] sm:$0xf]
        %v892 = vsel %vm662, %v888, 0
        %v895 = vsel %vm725, %v890, 0
        %897 = vmatprep.subr.bf16.mxu0 0
        %898 = vmatpush1.bf16.msra.mxu0 %v895
        %899 = vmatprep.subr.bf16.mxu0 0
        %900 = vmatpush1.bf16.msra.mxu0 0
        %901 = vmatprep.subr.bf16.mxu0 0
        %902 = vmatpush1.bf16.msra.mxu0 0
        %903 = vmatprep.subr.bf16.mxu0 0
        %904 = vmatpush1.bf16.msra.mxu0 0
        %905 = vmatprep.subr.bf16.mxu0 0
        %906 = vmatpush1.bf16.msra.mxu0 0
        %907 = vmatprep.subr.bf16.mxu0 0
        %908 = vmatpush1.bf16.msra.mxu0 0
        %909 = vmatprep.subr.bf16.mxu0 0
        %910 = vmatpush1.bf16.msra.mxu0 0
        %911 = vmatprep.subr.bf16.mxu0 0
        %912 = vmatpush1.bf16.msra.mxu0 0
        %913 = vmatprep.subr.bf16.mxu0 0
        %914 = vmatpush1.bf16.msra.mxu0 0
        %915 = vmatprep.subr.bf16.mxu0 0
        %916 = vmatpush1.bf16.msra.mxu0 0
        %917 = vmatprep.subr.bf16.mxu0 0
        %918 = vmatpush1.bf16.msra.mxu0 0
        %919 = vmatprep.subr.bf16.mxu0 0
        %920 = vmatpush1.bf16.msra.mxu0 0
        %921 = vmatprep.subr.bf16.mxu0 0
        %922 = vmatpush1.bf16.msra.mxu0 0
        %923 = vmatprep.subr.bf16.mxu0 0
        %924 = vmatpush1.bf16.msra.mxu0 0
        %925 = vmatprep.subr.bf16.mxu0 0
        %926 = vmatpush1.bf16.msra.mxu0 0
        %927 = vmatprep.subr.bf16.mxu0 0
        %928 = vmatpush1.bf16.msra.mxu0 0
        %929 = vmatprep.mubr.bf16.mxu0 0
        %930 = vmatmul.mubr.bf16.gmra.mrb[0].mxu0 %v892
        %v931 = vpop.f32.mrb[0].mxu0
        %v932 = vadd.f32 0.0, %v931
        %v933 = vpop.f32.mrb[0].mxu0
        %v934 = vpop.f32.mrb[0].mxu0
        %v935 = vpop.f32.mrb[0].mxu0
        %936 = vdwg.mxu0
        %v937 = vpack.c.bf16 %v932, %v932
        %s938 = scalar_lea.vmem %s5, 4
        %v939 = vld [vmem:[%s938] sm:$0xf]
        %v941 = vsel %vm662, %v937, 0
        %v944 = vsel %vm725, %v939, 0
        %946 = vmatprep.subr.bf16.mxu0 0
        %947 = vmatpush1.bf16.msra.mxu0 %v944
        %948 = vmatprep.subr.bf16.mxu0 0
        %949 = vmatpush1.bf16.msra.mxu0 0
        %950 = vmatprep.subr.bf16.mxu0 0
        %951 = vmatpush1.bf16.msra.mxu0 0
        %952 = vmatprep.subr.bf16.mxu0 0
        %953 = vmatpush1.bf16.msra.mxu0 0
        %954 = vmatprep.subr.bf16.mxu0 0
        %955 = vmatpush1.bf16.msra.mxu0 0
        %956 = vmatprep.subr.bf16.mxu0 0
        %957 = vmatpush1.bf16.msra.mxu0 0
        %958 = vmatprep.subr.bf16.mxu0 0
        %959 = vmatpush1.bf16.msra.mxu0 0
        %960 = vmatprep.subr.bf16.mxu0 0
        %961 = vmatpush1.bf16.msra.mxu0 0
        %962 = vmatprep.subr.bf16.mxu0 0
        %963 = vmatpush1.bf16.msra.mxu0 0
        %964 = vmatprep.subr.bf16.mxu0 0
        %965 = vmatpush1.bf16.msra.mxu0 0
        %966 = vmatprep.subr.bf16.mxu0 0
        %967 = vmatpush1.bf16.msra.mxu0 0
        %968 = vmatprep.subr.bf16.mxu0 0
        %969 = vmatpush1.bf16.msra.mxu0 0
        %970 = vmatprep.subr.bf16.mxu0 0
        %971 = vmatpush1.bf16.msra.mxu0 0
        %972 = vmatprep.subr.bf16.mxu0 0
        %973 = vmatpush1.bf16.msra.mxu0 0
        %974 = vmatprep.subr.bf16.mxu0 0
        %975 = vmatpush1.bf16.msra.mxu0 0
        %976 = vmatprep.subr.bf16.mxu0 0
        %977 = vmatpush1.bf16.msra.mxu0 0
        %978 = vmatprep.mubr.bf16.mxu0 0
        %979 = vmatmul.mubr.bf16.gmra.mrb[0].mxu0 %v941
        %v980 = vpop.f32.mrb[0].mxu0
        %v981 = vadd.f32 0.0, %v980
        %v982 = vpop.f32.mrb[0].mxu0
        %v983 = vpop.f32.mrb[0].mxu0
        %v984 = vpop.f32.mrb[0].mxu0
        %985 = vdwg.mxu0
        %v987 = vsel %vm662, %v769, 0
        %v990 = vsel %vm725, %v770, 0
        %992 = vmatprep.subr.bf16.mxu0 0
        %993 = vmatpush1.bf16.msra.mxu0 %v990
        %994 = vmatprep.subr.bf16.mxu0 0
        %995 = vmatpush1.bf16.msra.mxu0 0
        %996 = vmatprep.subr.bf16.mxu0 0
        %997 = vmatpush1.bf16.msra.mxu0 0
        %998 = vmatprep.subr.bf16.mxu0 0
        %999 = vmatpush1.bf16.msra.mxu0 0
        %1000 = vmatprep.subr.bf16.mxu0 0
        %1001 = vmatpush1.bf16.msra.mxu0 0
        %1002 = vmatprep.subr.bf16.mxu0 0
        %1003 = vmatpush1.bf16.msra.mxu0 0
        %1004 = vmatprep.subr.bf16.mxu0 0
        %1005 = vmatpush1.bf16.msra.mxu0 0
        %1006 = vmatprep.subr.bf16.mxu0 0
        %1007 = vmatpush1.bf16.msra.mxu0 0
        %1008 = vmatprep.subr.bf16.mxu0 0
        %1009 = vmatpush1.bf16.msra.mxu0 0
        %1010 = vmatprep.subr.bf16.mxu0 0
        %1011 = vmatpush1.bf16.msra.mxu0 0
        %1012 = vmatprep.subr.bf16.mxu0 0
        %1013 = vmatpush1.bf16.msra.mxu0 0
        %1014 = vmatprep.subr.bf16.mxu0 0
        %1015 = vmatpush1.bf16.msra.mxu0 0
        %1016 = vmatprep.subr.bf16.mxu0 0
        %1017 = vmatpush1.bf16.msra.mxu0 0
        %1018 = vmatprep.subr.bf16.mxu0 0
        %1019 = vmatpush1.bf16.msra.mxu0 0
        %1020 = vmatprep.subr.bf16.mxu0 0
        %1021 = vmatpush1.bf16.msra.mxu0 0
        %1022 = vmatprep.subr.bf16.mxu0 0
        %1023 = vmatpush1.bf16.msra.mxu0 0
        %1024 = vmatprep.mubr.bf16.mxu0 0
        %1025 = vmatmul.mubr.bf16.gmra.mrb[0].mxu0 %v987
        %v1026 = vpop.f32.mrb[0].mxu0
        %v1027 = vadd.f32 %v981, %v1026
        %v1028 = vpop.f32.mrb[0].mxu0
        %v1029 = vpop.f32.mrb[0].mxu0
        %v1030 = vpop.f32.mrb[0].mxu0
        %1031 = vdwg.mxu0
        %s1032 = scalar_lea.vmem %s3, 32
        %v1033 = vld [vmem:[%s1032] sm:$0xf]
        %v1034 = vld [vmem:[%s1032 + $0x4] sm:$0xf]
        %v1035 = vld [vmem:[%s1032 + $0x8] sm:$0xf]
        %v1036 = vld [vmem:[%s1032 + $0xc] sm:$0xf]
        %v1041 = vunpack.c.l.b16 %v1033
        %v1042 = vunpack.c.l.b16 %v1034
        %v1043 = vunpack.c.l.b16 %v1035
        %v1044 = vunpack.c.l.b16 %v1036
        %v1045 = vpack.c.b16 %v1042, %v1041
        %v1046 = vpack.c.b16 %v1044, %v1043
        %1049 = vmatprep.subr.bf16.mxu0 0
        %1050 = vmatpush1.bf16.msra.mxu0 %v1045
        %1051 = vmatprep.subr.bf16.mxu0 0
        %1052 = vmatpush1.bf16.msra.mxu0 %v1046
        %1053 = vmatprep.subr.bf16.mxu0 0
        %1054 = vmatpush1.bf16.msra.mxu0 0
        %1055 = vmatprep.subr.bf16.mxu0 0
        %1056 = vmatpush1.bf16.msra.mxu0 0
        %1057 = vmatprep.subr.bf16.mxu0 0
        %1058 = vmatpush1.bf16.msra.mxu0 0
        %1059 = vmatprep.subr.bf16.mxu0 0
        %1060 = vmatpush1.bf16.msra.mxu0 0
        %1061 = vmatprep.subr.bf16.mxu0 0
        %1062 = vmatpush1.bf16.msra.mxu0 0
        %1063 = vmatprep.subr.bf16.mxu0 0
        %1064 = vmatpush1.bf16.msra.mxu0 0
        %1065 = vmatprep.subr.bf16.mxu0 0
        %1066 = vmatpush1.bf16.msra.mxu0 0
        %1067 = vmatprep.subr.bf16.mxu0 0
        %1068 = vmatpush1.bf16.msra.mxu0 0
        %1069 = vmatprep.subr.bf16.mxu0 0
        %1070 = vmatpush1.bf16.msra.mxu0 0
        %1071 = vmatprep.subr.bf16.mxu0 0
        %1072 = vmatpush1.bf16.msra.mxu0 0
        %1073 = vmatprep.subr.bf16.mxu0 0
        %1074 = vmatpush1.bf16.msra.mxu0 0
        %1075 = vmatprep.subr.bf16.mxu0 0
        %1076 = vmatpush1.bf16.msra.mxu0 0
        %1077 = vmatprep.subr.bf16.mxu0 0
        %1078 = vmatpush1.bf16.msra.mxu0 0
        %1079 = vmatprep.subr.bf16.mxu0 0
        %1080 = vmatpush1.bf16.msra.mxu0 0
        %1081 = vmatprep.mubr.bf16.mxu0 0
        %1082 = vmatmul.mubr.bf16.gmra.mrb[0].mxu0 %v618
        %v1083 = vpop.f32.mrb[0].mxu0
        %v1084 = vadd.f32 0.0, %v1083
        %v1085 = vpop.f32.mrb[0].mxu0
        %v1086 = vpop.f32.mrb[0].mxu0
        %v1087 = vpop.f32.mrb[0].mxu0
        %1088 = vdwg.mxu0
        %v1089 = vpack.c.bf16 %v1084, %v1084
        %s1090 = scalar_lea.vmem [#allocation3], 8
        %v1091 = vld [vmem:[%s1090] sm:$0xf]
        %v1093 = vsel %vm662, %v1089, 0
        %v1096 = vsel %vm662, %v1091, 0
        %1098 = vmatprep.subr.bf16.mxu0 0
        %1099 = vmatpush1.bf16.xpose.msra.mxu0 %v1096
        %1100 = vmatprep.subr.bf16.mxu0 0
        %1101 = vmatpush1.bf16.xpose.msra.mxu0 0
        %1102 = vmatprep.subr.bf16.mxu0 0
        %1103 = vmatpush1.bf16.xpose.msra.mxu0 0
        %1104 = vmatprep.subr.bf16.mxu0 0
        %1105 = vmatpush1.bf16.xpose.msra.mxu0 0
        %1106 = vmatprep.subr.bf16.mxu0 0
        %1107 = vmatpush1.bf16.xpose.msra.mxu0 0
        %1108 = vmatprep.subr.bf16.mxu0 0
        %1109 = vmatpush1.bf16.xpose.msra.mxu0 0
        %1110 = vmatprep.subr.bf16.mxu0 0
        %1111 = vmatpush1.bf16.xpose.msra.mxu0 0
        %1112 = vmatprep.subr.bf16.mxu0 0
        %1113 = vmatpush1.bf16.xpose.msra.mxu0 0
        %1114 = vmatprep.subr.bf16.mxu0 0
        %1115 = vmatpush1.bf16.xpose.msra.mxu0 0
        %1116 = vmatprep.subr.bf16.mxu0 0
        %1117 = vmatpush1.bf16.xpose.msra.mxu0 0
        %1118 = vmatprep.subr.bf16.mxu0 0
        %1119 = vmatpush1.bf16.xpose.msra.mxu0 0
        %1120 = vmatprep.subr.bf16.mxu0 0
        %1121 = vmatpush1.bf16.xpose.msra.mxu0 0
        %1122 = vmatprep.subr.bf16.mxu0 0
        %1123 = vmatpush1.bf16.xpose.msra.mxu0 0
        %1124 = vmatprep.subr.bf16.mxu0 0
        %1125 = vmatpush1.bf16.xpose.msra.mxu0 0
        %1126 = vmatprep.subr.bf16.mxu0 0
        %1127 = vmatpush1.bf16.xpose.msra.mxu0 0
        %1128 = vmatprep.subr.bf16.mxu0 0
        %1129 = vmatpush1.bf16.xpose.msra.mxu0 0
        %1130 = vmatprep.mubr.bf16.mxu0 0
        %1131 = vmatmul.mubr.bf16.gmra.mrb[0].mxu0 %v1093
        %v1132 = vpop.f32.mrb[0].mxu0
        %v1133 = vadd.f32 0.0, %v1132
        %v1134 = vpop.f32.mrb[0].mxu0
        %v1135 = vpop.f32.mrb[0].mxu0
        %v1136 = vpop.f32.mrb[0].mxu0
        %1137 = vdwg.mxu0
        %v1138 = vsel %vm662, %v1133, -inf
        %1139 = vmax.xlane.f32.xlu0 %v1138
        %v1140 = vpop.xlane.xlu0 %1139
        %v1141 = vsub.f32 %v1133, %v1140
        %v1142 = vmul.f32 %v1141, 1.442695
        %v1143 = vpow.pop %v1142
        %v1144 = vsel %vm662, %v1143, 0.0
        %1145 = vadd.xlane.f32.xlu0 %v1144
        %v1146 = vpop.xlane.xlu0 %1145
        %v1147 = vrcp.pop %v1146
        %v1148 = vmul.f32 %v1143, %v1147
        %v1149 = vpack.c.bf16 %v1148, %v1148
        %s1150 = scalar_lea.vmem [#allocation4], 8
        %v1151 = vld [vmem:[%s1150] sm:$0xf]
        %v1153 = vsel %vm662, %v1149, 0
        %v1156 = vsel %vm725, %v1151, 0
        %1158 = vmatprep.subr.bf16.mxu0 0
        %1159 = vmatpush1.bf16.msra.mxu0 %v1156
        %1160 = vmatprep.subr.bf16.mxu0 0
        %1161 = vmatpush1.bf16.msra.mxu0 0
        %1162 = vmatprep.subr.bf16.mxu0 0
        %1163 = vmatpush1.bf16.msra.mxu0 0
        %1164 = vmatprep.subr.bf16.mxu0 0
        %1165 = vmatpush1.bf16.msra.mxu0 0
        %1166 = vmatprep.subr.bf16.mxu0 0
        %1167 = vmatpush1.bf16.msra.mxu0 0
        %1168 = vmatprep.subr.bf16.mxu0 0
        %1169 = vmatpush1.bf16.msra.mxu0 0
        %1170 = vmatprep.subr.bf16.mxu0 0
        %1171 = vmatpush1.bf16.msra.mxu0 0
        %1172 = vmatprep.subr.bf16.mxu0 0
        %1173 = vmatpush1.bf16.msra.mxu0 0
        %1174 = vmatprep.subr.bf16.mxu0 0
        %1175 = vmatpush1.bf16.msra.mxu0 0
        %1176 = vmatprep.subr.bf16.mxu0 0
        %1177 = vmatpush1.bf16.msra.mxu0 0
        %1178 = vmatprep.subr.bf16.mxu0 0
        %1179 = vmatpush1.bf16.msra.mxu0 0
        %1180 = vmatprep.subr.bf16.mxu0 0
        %1181 = vmatpush1.bf16.msra.mxu0 0
        %1182 = vmatprep.subr.bf16.mxu0 0
        %1183 = vmatpush1.bf16.msra.mxu0 0
        %1184 = vmatprep.subr.bf16.mxu0 0
        %1185 = vmatpush1.bf16.msra.mxu0 0
        %1186 = vmatprep.subr.bf16.mxu0 0
        %1187 = vmatpush1.bf16.msra.mxu0 0
        %1188 = vmatprep.subr.bf16.mxu0 0
        %1189 = vmatpush1.bf16.msra.mxu0 0
        %1190 = vmatprep.mubr.bf16.mxu0 0
        %1191 = vmatmul.mubr.bf16.gmra.mrb[0].mxu0 %v1153
        %v1192 = vpop.f32.mrb[0].mxu0
        %v1193 = vadd.f32 0.0, %v1192
        %v1194 = vpop.f32.mrb[0].mxu0
        %v1195 = vpop.f32.mrb[0].mxu0
        %v1196 = vpop.f32.mrb[0].mxu0
        %1197 = vdwg.mxu0
        %v1198 = vpack.c.bf16 %v1193, %v1193
        %s1199 = scalar_lea.vmem %s5, 8
        %v1200 = vld [vmem:[%s1199] sm:$0xf]
        %v1202 = vsel %vm662, %v1198, 0
        %v1205 = vsel %vm725, %v1200, 0
        %1207 = vmatprep.subr.bf16.mxu0 0
        %1208 = vmatpush1.bf16.msra.mxu0 %v1205
        %1209 = vmatprep.subr.bf16.mxu0 0
        %1210 = vmatpush1.bf16.msra.mxu0 0
        %1211 = vmatprep.subr.bf16.mxu0 0
        %1212 = vmatpush1.bf16.msra.mxu0 0
        %1213 = vmatprep.subr.bf16.mxu0 0
        %1214 = vmatpush1.bf16.msra.mxu0 0
        %1215 = vmatprep.subr.bf16.mxu0 0
        %1216 = vmatpush1.bf16.msra.mxu0 0
        %1217 = vmatprep.subr.bf16.mxu0 0
        %1218 = vmatpush1.bf16.msra.mxu0 0
        %1219 = vmatprep.subr.bf16.mxu0 0
        %1220 = vmatpush1.bf16.msra.mxu0 0
        %1221 = vmatprep.subr.bf16.mxu0 0
        %1222 = vmatpush1.bf16.msra.mxu0 0
        %1223 = vmatprep.subr.bf16.mxu0 0
        %1224 = vmatpush1.bf16.msra.mxu0 0
        %1225 = vmatprep.subr.bf16.mxu0 0
        %1226 = vmatpush1.bf16.msra.mxu0 0
        %1227 = vmatprep.subr.bf16.mxu0 0
        %1228 = vmatpush1.bf16.msra.mxu0 0
        %1229 = vmatprep.subr.bf16.mxu0 0
        %1230 = vmatpush1.bf16.msra.mxu0 0
        %1231 = vmatprep.subr.bf16.mxu0 0
        %1232 = vmatpush1.bf16.msra.mxu0 0
        %1233 = vmatprep.subr.bf16.mxu0 0
        %1234 = vmatpush1.bf16.msra.mxu0 0
        %1235 = vmatprep.subr.bf16.mxu0 0
        %1236 = vmatpush1.bf16.msra.mxu0 0
        %1237 = vmatprep.subr.bf16.mxu0 0
        %1238 = vmatpush1.bf16.msra.mxu0 0
        %1239 = vmatprep.mubr.bf16.mxu0 0
        %1240 = vmatmul.mubr.bf16.gmra.mrb[0].mxu0 %v1202
        %v1241 = vpop.f32.mrb[0].mxu0
        %v1242 = vadd.f32 0.0, %v1241
        %v1243 = vpop.f32.mrb[0].mxu0
        %v1244 = vpop.f32.mrb[0].mxu0
        %v1245 = vpop.f32.mrb[0].mxu0
        %1246 = vdwg.mxu0
        %v1247 = vadd.f32 %v1027, %v1242
        %s1248 = scalar_lea.vmem %s3, 48
        %v1249 = vld [vmem:[%s1248] sm:$0xf]
        %v1250 = vld [vmem:[%s1248 + $0x4] sm:$0xf]
        %v1251 = vld [vmem:[%s1248 + $0x8] sm:$0xf]
        %v1252 = vld [vmem:[%s1248 + $0xc] sm:$0xf]
        %v1257 = vunpack.c.l.b16 %v1249
        %v1258 = vunpack.c.l.b16 %v1250
        %v1259 = vunpack.c.l.b16 %v1251
        %v1260 = vunpack.c.l.b16 %v1252
        %v1261 = vpack.c.b16 %v1258, %v1257
        %v1262 = vpack.c.b16 %v1260, %v1259
        %1265 = vmatprep.subr.bf16.mxu0 0
        %1266 = vmatpush1.bf16.msra.mxu0 %v1261
        %1267 = vmatprep.subr.bf16.mxu0 0
        %1268 = vmatpush1.bf16.msra.mxu0 %v1262
        %1269 = vmatprep.subr.bf16.mxu0 0
        %1270 = vmatpush1.bf16.msra.mxu0 0
        %1271 = vmatprep.subr.bf16.mxu0 0
        %1272 = vmatpush1.bf16.msra.mxu0 0
        %1273 = vmatprep.subr.bf16.mxu0 0
        %1274 = vmatpush1.bf16.msra.mxu0 0
        %1275 = vmatprep.subr.bf16.mxu0 0
        %1276 = vmatpush1.bf16.msra.mxu0 0
        %1277 = vmatprep.subr.bf16.mxu0 0
        %1278 = vmatpush1.bf16.msra.mxu0 0
        %1279 = vmatprep.subr.bf16.mxu0 0
        %1280 = vmatpush1.bf16.msra.mxu0 0
        %1281 = vmatprep.subr.bf16.mxu0 0
        %1282 = vmatpush1.bf16.msra.mxu0 0
        %1283 = vmatprep.subr.bf16.mxu0 0
        %1284 = vmatpush1.bf16.msra.mxu0 0
        %1285 = vmatprep.subr.bf16.mxu0 0
        %1286 = vmatpush1.bf16.msra.mxu0 0
        %1287 = vmatprep.subr.bf16.mxu0 0
        %1288 = vmatpush1.bf16.msra.mxu0 0
        %1289 = vmatprep.subr.bf16.mxu0 0
        %1290 = vmatpush1.bf16.msra.mxu0 0
        %1291 = vmatprep.subr.bf16.mxu0 0
        %1292 = vmatpush1.bf16.msra.mxu0 0
        %1293 = vmatprep.subr.bf16.mxu0 0
        %1294 = vmatpush1.bf16.msra.mxu0 0
        %1295 = vmatprep.subr.bf16.mxu0 0
        %1296 = vmatpush1.bf16.msra.mxu0 0
        %1297 = vmatprep.mubr.bf16.mxu0 0
        %1298 = vmatmul.mubr.bf16.gmra.mrb[0].mxu0 %v618
        %v1299 = vpop.f32.mrb[0].mxu0
        %v1300 = vadd.f32 0.0, %v1299
        %v1301 = vpop.f32.mrb[0].mxu0
        %v1302 = vpop.f32.mrb[0].mxu0
        %v1303 = vpop.f32.mrb[0].mxu0
        %1304 = vdwg.mxu0
        %v1305 = vpack.c.bf16 %v1300, %v1300
        %s1306 = scalar_lea.vmem [#allocation3], 12
        %v1307 = vld [vmem:[%s1306] sm:$0xf]
        %v1309 = vsel %vm662, %v1305, 0
        %v1312 = vsel %vm662, %v1307, 0
        %1314 = vmatprep.subr.bf16.mxu0 0
        %1315 = vmatpush1.bf16.xpose.msra.mxu0 %v1312
        %1316 = vmatprep.subr.bf16.mxu0 0
        %1317 = vmatpush1.bf16.xpose.msra.mxu0 0
        %1318 = vmatprep.subr.bf16.mxu0 0
        %1319 = vmatpush1.bf16.xpose.msra.mxu0 0
        %1320 = vmatprep.subr.bf16.mxu0 0
        %1321 = vmatpush1.bf16.xpose.msra.mxu0 0
        %1322 = vmatprep.subr.bf16.mxu0 0
        %1323 = vmatpush1.bf16.xpose.msra.mxu0 0
        %1324 = vmatprep.subr.bf16.mxu0 0
        %1325 = vmatpush1.bf16.xpose.msra.mxu0 0
        %1326 = vmatprep.subr.bf16.mxu0 0
        %1327 = vmatpush1.bf16.xpose.msra.mxu0 0
        %1328 = vmatprep.subr.bf16.mxu0 0
        %1329 = vmatpush1.bf16.xpose.msra.mxu0 0
        %1330 = vmatprep.subr.bf16.mxu0 0
        %1331 = vmatpush1.bf16.xpose.msra.mxu0 0
        %1332 = vmatprep.subr.bf16.mxu0 0
        %1333 = vmatpush1.bf16.xpose.msra.mxu0 0
        %1334 = vmatprep.subr.bf16.mxu0 0
        %1335 = vmatpush1.bf16.xpose.msra.mxu0 0
        %1336 = vmatprep.subr.bf16.mxu0 0
        %1337 = vmatpush1.bf16.xpose.msra.mxu0 0
        %1338 = vmatprep.subr.bf16.mxu0 0
        %1339 = vmatpush1.bf16.xpose.msra.mxu0 0
        %1340 = vmatprep.subr.bf16.mxu0 0
        %1341 = vmatpush1.bf16.xpose.msra.mxu0 0
        %1342 = vmatprep.subr.bf16.mxu0 0
        %1343 = vmatpush1.bf16.xpose.msra.mxu0 0
        %1344 = vmatprep.subr.bf16.mxu0 0
        %1345 = vmatpush1.bf16.xpose.msra.mxu0 0
        %1346 = vmatprep.mubr.bf16.mxu0 0
        %1347 = vmatmul.mubr.bf16.gmra.mrb[0].mxu0 %v1309
        %v1348 = vpop.f32.mrb[0].mxu0
        %v1349 = vadd.f32 0.0, %v1348
        %v1350 = vpop.f32.mrb[0].mxu0
        %v1351 = vpop.f32.mrb[0].mxu0
        %v1352 = vpop.f32.mrb[0].mxu0
        %1353 = vdwg.mxu0
        %v1354 = vsel %vm662, %v1349, -inf
        %1355 = vmax.xlane.f32.xlu0 %v1354
        %v1356 = vpop.xlane.xlu0 %1355
        %v1357 = vsub.f32 %v1349, %v1356
        %v1358 = vmul.f32 %v1357, 1.442695
        %v1359 = vpow.pop %v1358
        %v1360 = vsel %vm662, %v1359, 0.0
        %1361 = vadd.xlane.f32.xlu0 %v1360
        %v1362 = vpop.xlane.xlu0 %1361
        %v1363 = vrcp.pop %v1362
        %v1364 = vmul.f32 %v1359, %v1363
        %v1365 = vpack.c.bf16 %v1364, %v1364
        %s1366 = scalar_lea.vmem [#allocation4], 12
        %v1367 = vld [vmem:[%s1366] sm:$0xf]
        %v1369 = vsel %vm662, %v1365, 0
        %v1372 = vsel %vm725, %v1367, 0
        %1374 = vmatprep.subr.bf16.mxu0 0
        %1375 = vmatpush1.bf16.msra.mxu0 %v1372
        %1376 = vmatprep.subr.bf16.mxu0 0
        %1377 = vmatpush1.bf16.msra.mxu0 0
        %1378 = vmatprep.subr.bf16.mxu0 0
        %1379 = vmatpush1.bf16.msra.mxu0 0
        %1380 = vmatprep.subr.bf16.mxu0 0
        %1381 = vmatpush1.bf16.msra.mxu0 0
        %1382 = vmatprep.subr.bf16.mxu0 0
        %1383 = vmatpush1.bf16.msra.mxu0 0
        %1384 = vmatprep.subr.bf16.mxu0 0
        %1385 = vmatpush1.bf16.msra.mxu0 0
        %1386 = vmatprep.subr.bf16.mxu0 0
        %1387 = vmatpush1.bf16.msra.mxu0 0
        %1388 = vmatprep.subr.bf16.mxu0 0
        %1389 = vmatpush1.bf16.msra.mxu0 0
        %1390 = vmatprep.subr.bf16.mxu0 0
        %1391 = vmatpush1.bf16.msra.mxu0 0
        %1392 = vmatprep.subr.bf16.mxu0 0
        %1393 = vmatpush1.bf16.msra.mxu0 0
        %1394 = vmatprep.subr.bf16.mxu0 0
        %1395 = vmatpush1.bf16.msra.mxu0 0
        %1396 = vmatprep.subr.bf16.mxu0 0
        %1397 = vmatpush1.bf16.msra.mxu0 0
        %1398 = vmatprep.subr.bf16.mxu0 0
        %1399 = vmatpush1.bf16.msra.mxu0 0
        %1400 = vmatprep.subr.bf16.mxu0 0
        %1401 = vmatpush1.bf16.msra.mxu0 0
        %1402 = vmatprep.subr.bf16.mxu0 0
        %1403 = vmatpush1.bf16.msra.mxu0 0
        %1404 = vmatprep.subr.bf16.mxu0 0
        %1405 = vmatpush1.bf16.msra.mxu0 0
        %1406 = vmatprep.mubr.bf16.mxu0 0
        %1407 = vmatmul.mubr.bf16.gmra.mrb[0].mxu0 %v1369
        %v1408 = vpop.f32.mrb[0].mxu0
        %v1409 = vadd.f32 0.0, %v1408
        %v1410 = vpop.f32.mrb[0].mxu0
        %v1411 = vpop.f32.mrb[0].mxu0
        %v1412 = vpop.f32.mrb[0].mxu0
        %1413 = vdwg.mxu0
        %v1414 = vpack.c.bf16 %v1409, %v1409
        %s1415 = scalar_lea.vmem %s5, 12
        %v1416 = vld [vmem:[%s1415] sm:$0xf]
        %v1418 = vsel %vm662, %v1414, 0
        %v1421 = vsel %vm725, %v1416, 0
        %1423 = vmatprep.subr.bf16.mxu0 0
        %1424 = vmatpush1.bf16.msra.mxu0 %v1421
        %1425 = vmatprep.subr.bf16.mxu0 0
        %1426 = vmatpush1.bf16.msra.mxu0 0
        %1427 = vmatprep.subr.bf16.mxu0 0
        %1428 = vmatpush1.bf16.msra.mxu0 0
        %1429 = vmatprep.subr.bf16.mxu0 0
        %1430 = vmatpush1.bf16.msra.mxu0 0
        %1431 = vmatprep.subr.bf16.mxu0 0
        %1432 = vmatpush1.bf16.msra.mxu0 0
        %1433 = vmatprep.subr.bf16.mxu0 0
        %1434 = vmatpush1.bf16.msra.mxu0 0
        %1435 = vmatprep.subr.bf16.mxu0 0
        %1436 = vmatpush1.bf16.msra.mxu0 0
        %1437 = vmatprep.subr.bf16.mxu0 0
        %1438 = vmatpush1.bf16.msra.mxu0 0
        %1439 = vmatprep.subr.bf16.mxu0 0
        %1440 = vmatpush1.bf16.msra.mxu0 0
        %1441 = vmatprep.subr.bf16.mxu0 0
        %1442 = vmatpush1.bf16.msra.mxu0 0
        %1443 = vmatprep.subr.bf16.mxu0 0
        %1444 = vmatpush1.bf16.msra.mxu0 0
        %1445 = vmatprep.subr.bf16.mxu0 0
        %1446 = vmatpush1.bf16.msra.mxu0 0
        %1447 = vmatprep.subr.bf16.mxu0 0
        %1448 = vmatpush1.bf16.msra.mxu0 0
        %1449 = vmatprep.subr.bf16.mxu0 0
        %1450 = vmatpush1.bf16.msra.mxu0 0
        %1451 = vmatprep.subr.bf16.mxu0 0
        %1452 = vmatpush1.bf16.msra.mxu0 0
        %1453 = vmatprep.subr.bf16.mxu0 0
        %1454 = vmatpush1.bf16.msra.mxu0 0
        %1455 = vmatprep.mubr.bf16.mxu0 0
        %1456 = vmatmul.mubr.bf16.gmra.mrb[0].mxu0 %v1418
        %v1457 = vpop.f32.mrb[0].mxu0
        %v1458 = vadd.f32 0.0, %v1457
        %v1459 = vpop.f32.mrb[0].mxu0
        %v1460 = vpop.f32.mrb[0].mxu0
        %v1461 = vpop.f32.mrb[0].mxu0
        %1462 = vdwg.mxu0
        %v1463 = vadd.f32 %v1247, %v1458
        %v1464 = vadd.f32 %v596, %v1463
        %v1465 = vld [vmem:[%s6] sm:$0x1]
        %v1467 = vlaneseq
        %v1468 = vshrl.u32 %v1467, 7
        %v1469 = vsub.s32 0, %v1468
        %v1470 = vrot.slane %v1465, %v1469
        %v1472 = vadd.f32 %v1464, %v1470
        %v1473 = vld [vmem:[%s7] sm:$0x1]
        %v1474 = vld [vmem:[%s8] sm:$0x1]
        %v1475 = vsel %vm616, %v1472, 0.0
        %1476 = vadd.xlane.f32.xlu0 %v1475
        %v1477 = vpop.xlane.xlu0 %1476
        %v1478 = vrcp.pop 32.0
        %v1479 = vmul.f32 %v1477, %v1478
        %v1480 = vsub.f32 %v1472, %v1479
        %v1481 = vmul.f32 %v1480, %v1480
        %v1482 = vsel %vm616, %v1481, 0.0
        %1483 = vadd.xlane.f32.xlu0 %v1482
        %v1484 = vpop.xlane.xlu0 %1483
        %v1485 = vmul.f32 %v1484, %v1478
        %v1486 = vadd.f32 %v1485, 1e-05
        %v1487 = vrsqrt.pop %v1486
        %v1488 = vmul.f32 %v1480, %v1487
        %v1490 = vlaneseq
        %v1491 = vshrl.u32 %v1490, 7
        %v1492 = vsub.s32 0, %v1491
        %v1493 = vrot.slane %v1473, %v1492
        %v1495 = vmul.f32 %v1488, %v1493
        %v1497 = vlaneseq
        %v1498 = vshrl.u32 %v1497, 7
        %v1499 = vsub.s32 0, %v1498
        %v1500 = vrot.slane %v1474, %v1499
        %v1502 = vadd.f32 %v1495, %v1500
        %v1503 = vpack.c.bf16 %v1502, %v1502
        %v1504 = vld [vmem:[%s9] sm:$0xf]
        %v1505 = vld [vmem:[%s9 + $0x4] sm:$0xf]
        %v1506 = vld [vmem:[%s9 + $0x8] sm:$0xf]
        %v1507 = vld [vmem:[%s9 + $0xc] sm:$0xf]
        %v1508 = vld [vmem:[%s10] sm:$0x1]
        %v1510 = vlaneseq
        %v1511 = vshrl.u32 %v1510, 7
        %v1512 = vsub.s32 0, %v1511
        %v1513 = vrot.slane %v1508, %v1512
        %v1519 = vunpack.c.l.b16 %v1504
        %v1520 = vunpack.c.l.b16 %v1505
        %v1521 = vunpack.c.l.b16 %v1506
        %v1522 = vunpack.c.l.b16 %v1507
        %v1523 = vpack.c.b16 %v1520, %v1519
        %v1524 = vpack.c.b16 %v1522, %v1521
        %v1528 = vsel %vm616, %v1503, 0
        %1530 = vmatprep.subr.bf16.mxu0 0
        %1531 = vmatpush1.bf16.msra.mxu0 %v1523
        %1532 = vmatprep.subr.bf16.mxu0 0
        %1533 = vmatpush1.bf16.msra.mxu0 %v1524
        %1534 = vmatprep.subr.bf16.mxu0 0
        %1535 = vmatpush1.bf16.msra.mxu0 0
        %1536 = vmatprep.subr.bf16.mxu0 0
        %1537 = vmatpush1.bf16.msra.mxu0 0
        %1538 = vmatprep.subr.bf16.mxu0 0
        %1539 = vmatpush1.bf16.msra.mxu0 0
        %1540 = vmatprep.subr.bf16.mxu0 0
        %1541 = vmatpush1.bf16.msra.mxu0 0
        %1542 = vmatprep.subr.bf16.mxu0 0
        %1543 = vmatpush1.bf16.msra.mxu0 0
        %1544 = vmatprep.subr.bf16.mxu0 0
        %1545 = vmatpush1.bf16.msra.mxu0 0
        %1546 = vmatprep.subr.bf16.mxu0 0
        %1547 = vmatpush1.bf16.msra.mxu0 0
        %1548 = vmatprep.subr.bf16.mxu0 0
        %1549 = vmatpush1.bf16.msra.mxu0 0
        %1550 = vmatprep.subr.bf16.mxu0 0
        %1551 = vmatpush1.bf16.msra.mxu0 0
        %1552 = vmatprep.subr.bf16.mxu0 0
        %1553 = vmatpush1.bf16.msra.mxu0 0
        %1554 = vmatprep.subr.bf16.mxu0 0
        %1555 = vmatpush1.bf16.msra.mxu0 0
        %1556 = vmatprep.subr.bf16.mxu0 0
        %1557 = vmatpush1.bf16.msra.mxu0 0
        %1558 = vmatprep.subr.bf16.mxu0 0
        %1559 = vmatpush1.bf16.msra.mxu0 0
        %1560 = vmatprep.subr.bf16.mxu0 0
        %1561 = vmatpush1.bf16.msra.mxu0 0
        %1562 = vmatprep.mubr.bf16.mxu0 0
        %1563 = vmatmul.mubr.bf16.gmra.mrb[0].mxu0 %v1528
        %v1564 = vpop.f32.mrb[0].mxu0
        %v1565 = vadd.f32 %v1513, %v1564
        %v1566 = vpop.f32.mrb[0].mxu0
        %v1567 = vpop.f32.mrb[0].mxu0
        %v1568 = vpop.f32.mrb[0].mxu0
        %1569 = vdwg.mxu0
        %v1570 = vmul.f32 %v1565, 0.5
        %v1571 = vmul.f32 %v1565, 0.70710677
        %v1572 = vand.u32 2147483647, %v1571
        %v1573 = vmul.f32 %v1572, 0.3275911
        %v1574 = vadd.f32 %v1573, 1.0
        %v1575 = vrcp.pop %v1574
        %v1576 = vmul.f32 1.0, %v1575
        %v1577 = vmul.f32 %v1576, 1.0614054
        %v1578 = vadd.f32 %v1577, -1.4531521
        %v1579 = vmul.f32 %v1578, %v1576
        %v1580 = vadd.f32 %v1579, 1.4214138
        %v1581 = vmul.f32 %v1580, %v1576
        %v1582 = vadd.f32 %v1581, -0.28449672
        %v1583 = vmul.f32 %v1582, %v1576
        %v1584 = vadd.f32 %v1583, 0.2548296
        %v1585 = vmul.f32 %v1584, %v1576
        %v1586 = vsub.f32 0.0, %v1572
        %v1587 = vmul.f32 %v1586, %v1572
        %v1588 = vmul.f32 %v1587, 1.442695
        %v1589 = vpow.pop %v1588
        %v1590 = vmul.f32 %v1585, %v1589
        %v1591 = vsub.f32 1.0, %v1590
        %vm1592 = vcmp.ge.f32.partialorder %v1571, 0.0
        %v1593 = vsub.f32 0.0, %v1591
        %v1594 = vsel %vm1592, %v1591, %v1593
        %v1595 = vadd.f32 %v1594, 1.0
        %v1596 = vmul.f32 %v1570, %v1595
        %v1597 = vpack.c.bf16 %v1596, %v1596
        %v1598 = vld [vmem:[%s11] sm:$0xf]
        %v1599 = vld [vmem:[%s11 + $0x4] sm:$0xf]
        %v1600 = vld [vmem:[%s11 + $0x8] sm:$0xf]
        %v1601 = vld [vmem:[%s11 + $0xc] sm:$0xf]
        %v1602 = vld [vmem:[%s11 + $0x10] sm:$0xf]
        %v1603 = vld [vmem:[%s11 + $0x14] sm:$0xf]
        %v1604 = vld [vmem:[%s11 + $0x18] sm:$0xf]
        %v1605 = vld [vmem:[%s11 + $0x1c] sm:$0xf]
        %v1606 = vld [vmem:[%s11 + $0x20] sm:$0xf]
        %v1607 = vld [vmem:[%s11 + $0x24] sm:$0xf]
        %v1608 = vld [vmem:[%s11 + $0x28] sm:$0xf]
        %v1609 = vld [vmem:[%s11 + $0x2c] sm:$0xf]
        %v1610 = vld [vmem:[%s11 + $0x30] sm:$0xf]
        %v1611 = vld [vmem:[%s11 + $0x34] sm:$0xf]
        %v1612 = vld [vmem:[%s11 + $0x38] sm:$0xf]
        %v1613 = vld [vmem:[%s11 + $0x3c] sm:$0xf]
        %v1614 = vld [vmem:[%s12] sm:$0x1]
        %v1616 = vlaneseq
        %v1617 = vshrl.u32 %v1616, 7
        %v1618 = vsub.s32 0, %v1617
        %v1619 = vrot.slane %v1614, %v1618
        %v1637 = vunpack.c.l.b16 %v1598
        %v1638 = vunpack.c.l.b16 %v1599
        %v1639 = vunpack.c.l.b16 %v1600
        %v1640 = vunpack.c.l.b16 %v1601
        %v1641 = vunpack.c.l.b16 %v1602
        %v1642 = vunpack.c.l.b16 %v1603
        %v1643 = vunpack.c.l.b16 %v1604
        %v1644 = vunpack.c.l.b16 %v1605
        %v1645 = vunpack.c.l.b16 %v1606
        %v1646 = vunpack.c.l.b16 %v1607
        %v1647 = vunpack.c.l.b16 %v1608
        %v1648 = vunpack.c.l.b16 %v1609
        %v1649 = vunpack.c.l.b16 %v1610
        %v1650 = vunpack.c.l.b16 %v1611
        %v1651 = vunpack.c.l.b16 %v1612
        %v1652 = vunpack.c.l.b16 %v1613
        %v1653 = vpack.c.b16 %v1638, %v1637
        %v1654 = vpack.c.b16 %v1640, %v1639
        %v1655 = vpack.c.b16 %v1642, %v1641
        %v1656 = vpack.c.b16 %v1644, %v1643
        %v1657 = vpack.c.b16 %v1646, %v1645
        %v1658 = vpack.c.b16 %v1648, %v1647
        %v1659 = vpack.c.b16 %v1650, %v1649
        %v1660 = vpack.c.b16 %v1652, %v1651
        %1669 = vmatprep.subr.bf16.mxu0 0
        %1670 = vmatpush1.bf16.msra.mxu0 %v1653
        %1671 = vmatprep.subr.bf16.mxu0 0
        %1672 = vmatpush1.bf16.msra.mxu0 %v1654
        %1673 = vmatprep.subr.bf16.mxu0 0
        %1674 = vmatpush1.bf16.msra.mxu0 %v1655
        %1675 = vmatprep.subr.bf16.mxu0 0
        %1676 = vmatpush1.bf16.msra.mxu0 %v1656
        %1677 = vmatprep.subr.bf16.mxu0 0
        %1678 = vmatpush1.bf16.msra.mxu0 %v1657
        %1679 = vmatprep.subr.bf16.mxu0 0
        %1680 = vmatpush1.bf16.msra.mxu0 %v1658
        %1681 = vmatprep.subr.bf16.mxu0 0
        %1682 = vmatpush1.bf16.msra.mxu0 %v1659
        %1683 = vmatprep.subr.bf16.mxu0 0
        %1684 = vmatpush1.bf16.msra.mxu0 %v1660
        %1685 = vmatprep.subr.bf16.mxu0 0
        %1686 = vmatpush1.bf16.msra.mxu0 0
        %1687 = vmatprep.subr.bf16.mxu0 0
        %1688 = vmatpush1.bf16.msra.mxu0 0
        %1689 = vmatprep.subr.bf16.mxu0 0
        %1690 = vmatpush1.bf16.msra.mxu0 0
        %1691 = vmatprep.subr.bf16.mxu0 0
        %1692 = vmatpush1.bf16.msra.mxu0 0
        %1693 = vmatprep.subr.bf16.mxu0 0
        %1694 = vmatpush1.bf16.msra.mxu0 0
        %1695 = vmatprep.subr.bf16.mxu0 0
        %1696 = vmatpush1.bf16.msra.mxu0 0
        %1697 = vmatprep.subr.bf16.mxu0 0
        %1698 = vmatpush1.bf16.msra.mxu0 0
        %1699 = vmatprep.subr.bf16.mxu0 0
        %1700 = vmatpush1.bf16.msra.mxu0 0
        %1701 = vmatprep.mubr.bf16.mxu0 0
        %1702 = vmatmul.mubr.bf16.gmra.mrb[0].mxu0 %v1597
        %v1703 = vpop.f32.mrb[0].mxu0
        %v1704 = vadd.f32 %v1619, %v1703
        %v1705 = vpop.f32.mrb[0].mxu0
        %v1706 = vpop.f32.mrb[0].mxu0
        %v1707 = vpop.f32.mrb[0].mxu0
        %1708 = vdwg.mxu0
        %v1709 = vadd.f32 %v1472, %v1704
        %1710 = vst.msk [vmem:[%s445] sm:$0xff] %vm616, %v1709
        %s1711 = sand.u32 %s327, 1
        %s1712 = scalar_lea.sflag [#allocation6], %s1711
        %s1713 = sand.u32 %s327, 1
        %s1714 = smul.addr %s1713, 8
        %s1715 = scalar_lea.vmem [#allocation5], %s1714
        // Predicated region
        $region77: #{tpu_custom_call.1} parent=71 // pred_check
          %p1716 = pneg %p337
        $region78: #{tpu_custom_call.1} parent=71 // pred_check_branch
          %1718 = sbr.rel (%p1716) target = $region80
        $region79: #{tpu_custom_call.1} parent=71 // pred_region
          %s1720 = ssub.s32 128, 128
          %1721 = vsyncadd %s1712, %s1720
          %s1722 = sadd.s32 %s32, %s31
          %s1723 = smul.addr %s1722, 128
          %s1724 = scalar_lea.hbm %s13, %s1723
          %s1726 = sshll.u32 %s1715, 4
          %s1727 = int_to_ptr.vmem [resolvable:$true] %s1726
          %1729 = dma.vmem_to_hbm [thread:$0]  %s1727, 128, %s1724, %s1712
        $region80: #{tpu_custom_call.1} parent=71 // pred_fallthru
          _
      $region72: #{tpu_custom_call.1} parent=5 // pred_fallthru
        _
      %p1730 = scmp.le.s32.totalorder 2, %s22
      // Predicated region
      $region81: #{tpu_custom_call.1} parent=5 // pred_check
        %p1731 = pneg %p1730
      $region82: #{tpu_custom_call.1} parent=5 // pred_check_branch
        %1733 = sbr.rel (%p1731) target = $region84
      $region83: #{tpu_custom_call.1} parent=5 // pred_region
        %s1734 = ssub.s32 %s22, 2
        // Predicated region
        $region85: #{tpu_custom_call.1} parent=83 // pred_check
          %p1735 = pneg %p343
        $region86: #{tpu_custom_call.1} parent=83 // pred_check_branch
          %1737 = sbr.rel (%p1735) target = $region88
        $region87: #{tpu_custom_call.1} parent=83 // pred_region
          %s1738 = sand.u32 %s328, 1
          %s1739 = scalar_lea.sflag [#allocation6], %s1738
          %s1740 = sand.u32 %s328, 1
          %s1741 = smul.addr %s1740, 8
          %s1742 = scalar_lea.vmem [#allocation5], %s1741
          %1743 = dma.done %s1739, 128
        $region88: #{tpu_custom_call.1} parent=83 // pred_fallthru
          _
      $region84: #{tpu_custom_call.1} parent=5 // pred_fallthru
        _
    $region6: #{tpu_custom_call.1} parent=1 // loop_footer
      %s26 = sadd.s32 1, %s22
    $region7: #{tpu_custom_call.1} parent=1 // loop_footer_branch
      %21 = sbr.rel target = $region3
    $region8: #{tpu_custom_call.1} parent=1 // loop_exit
      _
    %1744 = vsyncpa [#allocation6], 1
    %s1745 = scalar_lea.sflag [#allocation6], 1
    %1746 = vsyncpa %s1745, 1

// kernel: tpu_custom_call.1
$region0: #{tpu_custom_call.1}
  #allocation0 [shape = 'u32[]', space=smem, size = 0x4, offset = 0x4, fixed_abs, tag = 'smem constant byte address 0x4 - core index']
  #allocation1 [shape = 'u32[144,128]{1,0:T(1,128)}', space=vmem, size = 0x12000, scoped, tag = 'internal scratch']
  #allocation2 [shape = 'bf16[8,32]{1,0:T(8,128)(2,1)}', space=vmem, size = 0x800, scoped, tag = 'scratch operand']
  #allocation3 [shape = 'bf16[4,8,8]{2,1,0:T(8,128)(2,1)}', space=vmem, size = 0x2000, scoped, tag = 'scratch operand']
  #allocation4 [shape = 'bf16[4,8,8]{2,1,0:T(8,128)(2,1)}', space=vmem, size = 0x2000, scoped, tag = 'scratch operand']
  %s0 = inlined_call_operand.vmem [shape: bf16[2,8,32], index: 0, kind: input, shape index: {}]
  %s1 = inlined_call_operand.vmem [shape: f32[1,32], index: 1, kind: input, shape index: {}]
  %s2 = inlined_call_operand.vmem [shape: f32[1,32], index: 2, kind: input, shape index: {}]
  %s3 = inlined_call_operand.vmem [shape: bf16[4,32,8], index: 3, kind: input, shape index: {}]
  %s4 = inlined_call_operand.vmem [shape: bf16[32,64], index: 4, kind: input, shape index: {}]
  %s5 = inlined_call_operand.vmem [shape: bf16[4,8,32], index: 5, kind: input, shape index: {}]
  %s6 = inlined_call_operand.vmem [shape: f32[1,32], index: 6, kind: input, shape index: {}]
  %s7 = inlined_call_operand.vmem [shape: f32[1,32], index: 7, kind: input, shape index: {}]
  %s8 = inlined_call_operand.vmem [shape: f32[1,32], index: 8, kind: input, shape index: {}]
  %s9 = inlined_call_operand.vmem [shape: bf16[32,128], index: 9, kind: input, shape index: {}]
  %s10 = inlined_call_operand.vmem [shape: f32[1,128], index: 10, kind: input, shape index: {}]
  %s11 = inlined_call_operand.vmem [shape: bf16[128,32], index: 11, kind: input, shape index: {}]
  %s12 = inlined_call_operand.vmem [shape: f32[1,32], index: 12, kind: input, shape index: {}]
  %s13 = inlined_call_operand.hbm [shape: f32[2,8,32], index: 13, kind: output, shape index: {}]
  %s14 = sld [smem:[#allocation0]]
  $region89: #{tpu_custom_call.1} parent=0
    _
  %s16 = ssub.s32 1, %s14
  %s17 = scalar_select 0, %s16, %s14
  $region1: #{tpu_custom_call.1} parent=0
    #allocation5 [shape = 'u8[8192]{0}', space=vmem, size = 0x2000, scoped, tag = 'output window, operand 0']
    #allocation6 [shape = 's32[2]{0}', space=sflag, size = 0x8, scoped, tag = 'scoped memory for tpu_custom_call.1']
    %18 = vsyncpa [#allocation6], 0
    %s19 = scalar_lea.sflag [#allocation6], 1
    %20 = vsyncpa %s19, 0
    loop: start=0, step=1, limit=4
    $region2: #{tpu_custom_call.1} parent=1 // loop_pre_header
      _
    $region3: #{tpu_custom_call.1} parent=1 // loop_header
      %s22 = sphi 0, %s26
      %p23 = scmp.ge.s32.totalorder %s22, 4
      %s29 = sphi 0, %s41
      %s30 = sphi 0, %s37
      %s31 = sphi 0, %s29
      %s32 = sphi 0, %s30
      %s33 = sphi 0, %s31
      %s34 = sphi 0, %s32
      %s44 = sphi 0, %s46
      %s47 = sphi 0, %s44
      %s48 = sphi 0, %s47
      %s64 = sphi 0, %s48
      %s68 = sphi 0, %s68
      %s70 = sphi 0, %s68
      %s71 = sphi 0, %s70
      %s85 = sphi 0, %s71
      %s89 = sphi 0, %s89
      %s91 = sphi 0, %s89
      %s92 = sphi 0, %s91
      %s106 = sphi 0, %s92
      %s110 = sphi 0, %s110
      %s112 = sphi 0, %s110
      %s113 = sphi 0, %s112
      %s127 = sphi 0, %s113
      %s131 = sphi 0, %s131
      %s133 = sphi 0, %s131
      %s134 = sphi 0, %s133
      %s148 = sphi 0, %s134
      %s152 = sphi 0, %s152
      %s154 = sphi 0, %s152
      %s155 = sphi 0, %s154
      %s169 = sphi 0, %s155
      %s173 = sphi 0, %s173
      %s175 = sphi 0, %s173
      %s176 = sphi 0, %s175
      %s190 = sphi 0, %s176
      %s194 = sphi 0, %s194
      %s196 = sphi 0, %s194
      %s197 = sphi 0, %s196
      %s211 = sphi 0, %s197
      %s215 = sphi 0, %s215
      %s217 = sphi 0, %s215
      %s218 = sphi 0, %s217
      %s232 = sphi 0, %s218
      %s236 = sphi 0, %s236
      %s238 = sphi 0, %s236
      %s239 = sphi 0, %s238
      %s253 = sphi 0, %s239
      %s257 = sphi 0, %s257
      %s259 = sphi 0, %s257
      %s260 = sphi 0, %s259
      %s274 = sphi 0, %s260
      %s278 = sphi 0, %s278
      %s280 = sphi 0, %s278
      %s281 = sphi 0, %s280
      %s295 = sphi 0, %s281
      %s299 = sphi 0, %s299
      %s301 = sphi 0, %s299
      %s302 = sphi 0, %s301
      %s316 = sphi 0, %s302
      %s324 = sphi 0, %s326
      %s327 = sphi 0, %s324
      %s328 = sphi 0, %s327
      %s344 = sphi 0, %s328
    $region4: #{tpu_custom_call.1} parent=1 // loop_header_branch
      %25 = sbr.rel (%p23) target = $region8
    $region5: #{tpu_custom_call.1} parent=1 // loop_body
      %s27 = ssub.s32 %s22, 1
      %s28 = ssub.s32 %s22, 2
      %s35 = sadd.s32 1, %s30
      %p36 = scmp.ge.s32.totalorder %s35, 1
      %s37 = scalar_select %p36, 0, %s35
      %s38 = sadd.s32 1, %s29
      %s39 = scalar_select %p36, %s38, %s29
      %p40 = scmp.ge.s32.totalorder %s39, 2
      %s41 = scalar_select %p40, 0, %s39
      %s42 = ssub.s32 %s29, %s41
      %p43 = scmp.eq.s32.totalorder %s42, 0
      %s45 = sadd.s32 %s44, 1
      %s46 = scalar_select %p43, %s44, %s45
      %p49 = pneg %p43
      %p50 = scmp.eq.s32.totalorder %s22, 1
      %p51 = por %p49, %p50
      %p52 = scmp.ne.s32.totalorder %s44, %s47
      %p53 = scmp.eq.s32.totalorder %s22, 0
      %p54 = por %p52, %p53
      %p55 = scmp.ne.s32.totalorder %s44, %s47
      %p56 = scmp.eq.s32.totalorder %s27, 1
      %p57 = por %p55, %p56
      %p58 = scmp.ne.s32.totalorder %s47, %s48
      %p59 = scmp.eq.s32.totalorder %s27, 0
      %p60 = por %p58, %p59
      %p61 = scmp.ne.s32.totalorder %s47, %s48
      %p62 = scmp.eq.s32.totalorder %s28, 1
      %p63 = por %p61, %p62
      %p65 = scmp.ne.s32.totalorder %s48, %s64
      %p66 = scmp.eq.s32.totalorder %s28, 0
      %p67 = por %p65, %p66
      %s69 = sadd.s32 %s68, 1
      %p72 = scmp.eq.s32.totalorder %s22, 1
      %p73 = scmp.ne.s32.totalorder %s68, %s70
      %p74 = scmp.eq.s32.totalorder %s22, 0
      %p75 = por %p73, %p74
      %p76 = scmp.ne.s32.totalorder %s68, %s70
      %p77 = scmp.eq.s32.totalorder %s27, 1
      %p78 = por %p76, %p77
      %p79 = scmp.ne.s32.totalorder %s70, %s71
      %p80 = scmp.eq.s32.totalorder %s27, 0
      %p81 = por %p79, %p80
      %p82 = scmp.ne.s32.totalorder %s70, %s71
      %p83 = scmp.eq.s32.totalorder %s28, 1
      %p84 = por %p82, %p83
      %p86 = scmp.ne.s32.totalorder %s71, %s85
      %p87 = scmp.eq.s32.totalorder %s28, 0
      %p88 = por %p86, %p87
      %s90 = sadd.s32 %s89, 1
      %p93 = scmp.eq.s32.totalorder %s22, 1
      %p94 = scmp.ne.s32.totalorder %s89, %s91
      %p95 = scmp.eq.s32.totalorder %s22, 0
      %p96 = por %p94, %p95
      %p97 = scmp.ne.s32.totalorder %s89, %s91
      %p98 = scmp.eq.s32.totalorder %s27, 1
      %p99 = por %p97, %p98
      %p100 = scmp.ne.s32.totalorder %s91, %s92
      %p101 = scmp.eq.s32.totalorder %s27, 0
      %p102 = por %p100, %p101
      %p103 = scmp.ne.s32.totalorder %s91, %s92
      %p104 = scmp.eq.s32.totalorder %s28, 1
      %p105 = por %p103, %p104
      %p107 = scmp.ne.s32.totalorder %s92, %s106
      %p108 = scmp.eq.s32.totalorder %s28, 0
      %p109 = por %p107, %p108
      %s111 = sadd.s32 %s110, 1
      %p114 = scmp.eq.s32.totalorder %s22, 1
      %p115 = scmp.ne.s32.totalorder %s110, %s112
      %p116 = scmp.eq.s32.totalorder %s22, 0
      %p117 = por %p115, %p116
      %p118 = scmp.ne.s32.totalorder %s110, %s112
      %p119 = scmp.eq.s32.totalorder %s27, 1
      %p120 = por %p118, %p119
      %p121 = scmp.ne.s32.totalorder %s112, %s113
      %p122 = scmp.eq.s32.totalorder %s27, 0
      %p123 = por %p121, %p122
      %p124 = scmp.ne.s32.totalorder %s112, %s113
      %p125 = scmp.eq.s32.totalorder %s28, 1
      %p126 = por %p124, %p125
      %p128 = scmp.ne.s32.totalorder %s113, %s127
      %p129 = scmp.eq.s32.totalorder %s28, 0
      %p130 = por %p128, %p129
      %s132 = sadd.s32 %s131, 1
      %p135 = scmp.eq.s32.totalorder %s22, 1
      %p136 = scmp.ne.s32.totalorder %s131, %s133
      %p137 = scmp.eq.s32.totalorder %s22, 0
      %p138 = por %p136, %p137
      %p139 = scmp.ne.s32.totalorder %s131, %s133
      %p140 = scmp.eq.s32.totalorder %s27, 1
      %p141 = por %p139, %p140
      %p142 = scmp.ne.s32.totalorder %s133, %s134
      %p143 = scmp.eq.s32.totalorder %s27, 0
      %p144 = por %p142, %p143
      %p145 = scmp.ne.s32.totalorder %s133, %s134
      %p146 = scmp.eq.s32.totalorder %s28, 1
      %p147 = por %p145, %p146
      %p149 = scmp.ne.s32.totalorder %s134, %s148
      %p150 = scmp.eq.s32.totalorder %s28, 0
      %p151 = por %p149, %p150
      %s153 = sadd.s32 %s152, 1
      %p156 = scmp.eq.s32.totalorder %s22, 1
      %p157 = scmp.ne.s32.totalorder %s152, %s154
      %p158 = scmp.eq.s32.totalorder %s22, 0
      %p159 = por %p157, %p158
      %p160 = scmp.ne.s32.totalorder %s152, %s154
      %p161 = scmp.eq.s32.totalorder %s27, 1
      %p162 = por %p160, %p161
      %p163 = scmp.ne.s32.totalorder %s154, %s155
      %p164 = scmp.eq.s32.totalorder %s27, 0
      %p165 = por %p163, %p164
      %p166 = scmp.ne.s32.totalorder %s154, %s155
      %p167 = scmp.eq.s32.totalorder %s28, 1
      %p168 = por %p166, %p167
      %p170 = scmp.ne.s32.totalorder %s155, %s169
      %p171 = scmp.eq.s32.totalorder %s28, 0
      %p172 = por %p170, %p171
      %s174 = sadd.s32 %s173, 1
      %p177 = scmp.eq.s32.totalorder %s22, 1
      %p178 = scmp.ne.s32.totalorder %s173, %s175
      %p179 = scmp.eq.s32.totalorder %s22, 0
      %p180 = por %p178, %p179
      %p181 = scmp.ne.s32.totalorder %s173, %s175
      %p182 = scmp.eq.s32.totalorder %s27, 1
      %p183 = por %p181, %p182
      %p184 = scmp.ne.s32.totalorder %s175, %s176
      %p185 = scmp.eq.s32.totalorder %s27, 0
      %p186 = por %p184, %p185
      %p187 = scmp.ne.s32.totalorder %s175, %s176
      %p188 = scmp.eq.s32.totalorder %s28, 1
      %p189 = por %p187, %p188
      %p191 = scmp.ne.s32.totalorder %s176, %s190
      %p192 = scmp.eq.s32.totalorder %s28, 0
      %p193 = por %p191, %p192
      %s195 = sadd.s32 %s194, 1
      %p198 = scmp.eq.s32.totalorder %s22, 1
      %p199 = scmp.ne.s32.totalorder %s194, %s196
      %p200 = scmp.eq.s32.totalorder %s22, 0
      %p201 = por %p199, %p200
      %p202 = scmp.ne.s32.totalorder %s194, %s196
      %p203 = scmp.eq.s32.totalorder %s27, 1
      %p204 = por %p202, %p203
      %p205 = scmp.ne.s32.totalorder %s196, %s197
      %p206 = scmp.eq.s32.totalorder %s27, 0
      %p207 = por %p205, %p206
      %p208 = scmp.ne.s32.totalorder %s196, %s197
      %p209 = scmp.eq.s32.totalorder %s28, 1
      %p210 = por %p208, %p209
      %p212 = scmp.ne.s32.totalorder %s197, %s211
      %p213 = scmp.eq.s32.totalorder %s28, 0
      %p214 = por %p212, %p213
      %s216 = sadd.s32 %s215, 1
      %p219 = scmp.eq.s32.totalorder %s22, 1
      %p220 = scmp.ne.s32.totalorder %s215, %s217
      %p221 = scmp.eq.s32.totalorder %s22, 0
      %p222 = por %p220, %p221
      %p223 = scmp.ne.s32.totalorder %s215, %s217
      %p224 = scmp.eq.s32.totalorder %s27, 1
      %p225 = por %p223, %p224
      %p226 = scmp.ne.s32.totalorder %s217, %s218
      %p227 = scmp.eq.s32.totalorder %s27, 0
      %p228 = por %p226, %p227
      %p229 = scmp.ne.s32.totalorder %s217, %s218
      %p230 = scmp.eq.s32.totalorder %s28, 1
      %p231 = por %p229, %p230
      %p233 = scmp.ne.s32.totalorder %s218, %s232
      %p234 = scmp.eq.s32.totalorder %s28, 0
      %p235 = por %p233, %p234
      %s237 = sadd.s32 %s236, 1
      %p240 = scmp.eq.s32.totalorder %s22, 1
      %p241 = scmp.ne.s32.totalorder %s236, %s238
      %p242 = scmp.eq.s32.totalorder %s22, 0
      %p243 = por %p241, %p242
      %p244 = scmp.ne.s32.totalorder %s236, %s238
      %p245 = scmp.eq.s32.totalorder %s27, 1
      %p246 = por %p244, %p245
      %p247 = scmp.ne.s32.totalorder %s238, %s239
      %p248 = scmp.eq.s32.totalorder %s27, 0
      %p249 = por %p247, %p248
      %p250 = scmp.ne.s32.totalorder %s238, %s239
      %p251 = scmp.eq.s32.totalorder %s28, 1
      %p252 = por %p250, %p251
      %p254 = scmp.ne.s32.totalorder %s239, %s253
      %p255 = scmp.eq.s32.totalorder %s28, 0
      %p256 = por %p254, %p255
      %s258 = sadd.s32 %s257, 1
      %p261 = scmp.eq.s32.totalorder %s22, 1
      %p262 = scmp.ne.s32.totalorder %s257, %s259
      %p263 = scmp.eq.s32.totalorder %s22, 0
      %p264 = por %p262, %p263
      %p265 = scmp.ne.s32.totalorder %s257, %s259
      %p266 = scmp.eq.s32.totalorder %s27, 1
      %p267 = por %p265, %p266
      %p268 = scmp.ne.s32.totalorder %s259, %s260
      %p269 = scmp.eq.s32.totalorder %s27, 0
      %p270 = por %p268, %p269
      %p271 = scmp.ne.s32.totalorder %s259, %s260
      %p272 = scmp.eq.s32.totalorder %s28, 1
      %p273 = por %p271, %p272
      %p275 = scmp.ne.s32.totalorder %s260, %s274
      %p276 = scmp.eq.s32.totalorder %s28, 0
      %p277 = por %p275, %p276
      %s279 = sadd.s32 %s278, 1
      %p282 = scmp.eq.s32.totalorder %s22, 1
      %p283 = scmp.ne.s32.totalorder %s278, %s280
      %p284 = scmp.eq.s32.totalorder %s22, 0
      %p285 = por %p283, %p284
      %p286 = scmp.ne.s32.totalorder %s278, %s280
      %p287 = scmp.eq.s32.totalorder %s27, 1
      %p288 = por %p286, %p287
      %p289 = scmp.ne.s32.totalorder %s280, %s281
      %p290 = scmp.eq.s32.totalorder %s27, 0
      %p291 = por %p289, %p290
      %p292 = scmp.ne.s32.totalorder %s280, %s281
      %p293 = scmp.eq.s32.totalorder %s28, 1
      %p294 = por %p292, %p293
      %p296 = scmp.ne.s32.totalorder %s281, %s295
      %p297 = scmp.eq.s32.totalorder %s28, 0
      %p298 = por %p296, %p297
      %s300 = sadd.s32 %s299, 1
      %p303 = scmp.eq.s32.totalorder %s22, 1
      %p304 = scmp.ne.s32.totalorder %s299, %s301
      %p305 = scmp.eq.s32.totalorder %s22, 0
      %p306 = por %p304, %p305
      %p307 = scmp.ne.s32.totalorder %s299, %s301
      %p308 = scmp.eq.s32.totalorder %s27, 1
      %p309 = por %p307, %p308
      %p310 = scmp.ne.s32.totalorder %s301, %s302
      %p311 = scmp.eq.s32.totalorder %s27, 0
      %p312 = por %p310, %p311
      %p313 = scmp.ne.s32.totalorder %s301, %s302
      %p314 = scmp.eq.s32.totalorder %s28, 1
      %p315 = por %p313, %p314
      %p317 = scmp.ne.s32.totalorder %s302, %s316
      %p318 = scmp.eq.s32.totalorder %s28, 0
      %p319 = por %p317, %p318
      %s320 = ssub.s32 %s29, %s41
      %s321 = ssub.s32 %s30, %s37
      %s322 = sor.u32 %s320, %s321
      %p323 = scmp.eq.s32.totalorder %s322, 0
      %s325 = sadd.s32 %s324, 1
      %s326 = scalar_select %p323, %s324, %s325
      %p329 = pneg %p323
      %p330 = scmp.eq.s32.totalorder %s22, 1
      %p331 = por %p329, %p330
      %p332 = scmp.ne.s32.totalorder %s324, %s327
      %p333 = scmp.eq.s32.totalorder %s22, 0
      %p334 = por %p332, %p333
      %p335 = scmp.ne.s32.totalorder %s324, %s327
      %p336 = scmp.eq.s32.totalorder %s27, 1
      %p337 = por %p335, %p336
      %p338 = scmp.ne.s32.totalorder %s327, %s328
      %p339 = scmp.eq.s32.totalorder %s27, 0
      %p340 = por %p338, %p339
      %p341 = scmp.ne.s32.totalorder %s327, %s328
      %p342 = scmp.eq.s32.totalorder %s28, 1
      %p343 = por %p341, %p342
      %p345 = scmp.ne.s32.totalorder %s328, %s344
      %p346 = scmp.eq.s32.totalorder %s28, 0
      %p347 = por %p345, %p346
      %p348 = scmp.le.s32.totalorder 1, %s22
      %p349 = scmp.lt.s32.totalorder %s22, 3
      %p350 = pnand %p348, %p349
      %p351 = pneg %p350
      // Predicated region
      $region9: #{tpu_custom_call.1} parent=5 // pred_check
        _
      $region10: #{tpu_custom_call.1} parent=5 // pred_check_branch
        %353 = sbr.rel (%p350) target = $region12
      $region11: #{tpu_custom_call.1} parent=5 // pred_region
        %s354 = ssub.s32 %s22, 1
        // Predicated region
        $region13: #{tpu_custom_call.1} parent=11 // pred_check
          %p355 = pneg %p81
        $region14: #{tpu_custom_call.1} parent=11 // pred_check_branch
          %357 = sbr.rel (%p355) target = $region16
        $region15: #{tpu_custom_call.1} parent=11 // pred_region
          _
        $region16: #{tpu_custom_call.1} parent=11 // pred_fallthru
          _
        // Predicated region
        $region17: #{tpu_custom_call.1} parent=11 // pred_check
          %p358 = pneg %p102
        $region18: #{tpu_custom_call.1} parent=11 // pred_check_branch
          %360 = sbr.rel (%p358) target = $region20
        $region19: #{tpu_custom_call.1} parent=11 // pred_region
          _
        $region20: #{tpu_custom_call.1} parent=11 // pred_fallthru
          _
        // Predicated region
        $region21: #{tpu_custom_call.1} parent=11 // pred_check
          %p361 = pneg %p123
        $region22: #{tpu_custom_call.1} parent=11 // pred_check_branch
          %363 = sbr.rel (%p361) target = $region24
        $region23: #{tpu_custom_call.1} parent=11 // pred_region
          _
        $region24: #{tpu_custom_call.1} parent=11 // pred_fallthru
          _
        // Predicated region
        $region25: #{tpu_custom_call.1} parent=11 // pred_check
          %p364 = pneg %p144
        $region26: #{tpu_custom_call.1} parent=11 // pred_check_branch
          %366 = sbr.rel (%p364) target = $region28
        $region27: #{tpu_custom_call.1} parent=11 // pred_region
          _
        $region28: #{tpu_custom_call.1} parent=11 // pred_fallthru
          _
        // Predicated region
        $region29: #{tpu_custom_call.1} parent=11 // pred_check
          %p367 = pneg %p165
        $region30: #{tpu_custom_call.1} parent=11 // pred_check_branch
          %369 = sbr.rel (%p367) target = $region32
        $region31: #{tpu_custom_call.1} parent=11 // pred_region
          _
        $region32: #{tpu_custom_call.1} parent=11 // pred_fallthru
          _
        // Predicated region
        $region33: #{tpu_custom_call.1} parent=11 // pred_check
          %p370 = pneg %p186
        $region34: #{tpu_custom_call.1} parent=11 // pred_check_branch
          %372 = sbr.rel (%p370) target = $region36
        $region35: #{tpu_custom_call.1} parent=11 // pred_region
          _
        $region36: #{tpu_custom_call.1} parent=11 // pred_fallthru
          _
        // Predicated region
        $region37: #{tpu_custom_call.1} parent=11 // pred_check
          %p373 = pneg %p207
        $region38: #{tpu_custom_call.1} parent=11 // pred_check_branch
          %375 = sbr.rel (%p373) target = $region40
        $region39: #{tpu_custom_call.1} parent=11 // pred_region
          _
        $region40: #{tpu_custom_call.1} parent=11 // pred_fallthru
          _
        // Predicated region
        $region41: #{tpu_custom_call.1} parent=11 // pred_check
          %p376 = pneg %p228
        $region42: #{tpu_custom_call.1} parent=11 // pred_check_branch
          %378 = sbr.rel (%p376) target = $region44
        $region43: #{tpu_custom_call.1} parent=11 // pred_region
          _
        $region44: #{tpu_custom_call.1} parent=11 // pred_fallthru
          _
        // Predicated region
        $region45: #{tpu_custom_call.1} parent=11 // pred_check
          %p379 = pneg %p249
        $region46: #{tpu_custom_call.1} parent=11 // pred_check_branch
          %381 = sbr.rel (%p379) target = $region48
        $region47: #{tpu_custom_call.1} parent=11 // pred_region
          _
        $region48: #{tpu_custom_call.1} parent=11 // pred_fallthru
          _
        // Predicated region
        $region49: #{tpu_custom_call.1} parent=11 // pred_check
          %p382 = pneg %p270
        $region50: #{tpu_custom_call.1} parent=11 // pred_check_branch
          %384 = sbr.rel (%p382) target = $region52
        $region51: #{tpu_custom_call.1} parent=11 // pred_region
          _
        $region52: #{tpu_custom_call.1} parent=11 // pred_fallthru
          _
        // Predicated region
        $region53: #{tpu_custom_call.1} parent=11 // pred_check
          %p385 = pneg %p291
        $region54: #{tpu_custom_call.1} parent=11 // pred_check_branch
          %387 = sbr.rel (%p385) target = $region56
        $region55: #{tpu_custom_call.1} parent=11 // pred_region
          _
        $region56: #{tpu_custom_call.1} parent=11 // pred_fallthru
          _
        // Predicated region
        $region57: #{tpu_custom_call.1} parent=11 // pred_check
          %p388 = pneg %p312
        $region58: #{tpu_custom_call.1} parent=11 // pred_check_branch
          %390 = sbr.rel (%p388) target = $region60
        $region59: #{tpu_custom_call.1} parent=11 // pred_region
          _
        $region60: #{tpu_custom_call.1} parent=11 // pred_fallthru
          _
      $region12: #{tpu_custom_call.1} parent=5 // pred_fallthru
        _
      %p391 = scmp.lt.s32.totalorder %s22, 2
      // Predicated region
      $region61: #{tpu_custom_call.1} parent=5 // pred_check
        %p392 = pneg %p391
      $region62: #{tpu_custom_call.1} parent=5 // pred_check_branch
        %394 = sbr.rel (%p392) target = $region64
      $region63: #{tpu_custom_call.1} parent=5 // pred_region
        // Predicated region
        $region65: #{tpu_custom_call.1} parent=63 // pred_check
          %p395 = pneg %p54
        $region66: #{tpu_custom_call.1} parent=63 // pred_check_branch
          %397 = sbr.rel (%p395) target = $region68
        $region67: #{tpu_custom_call.1} parent=63 // pred_region
          %p398 = scmp.lt.s32.totalorder %s29, 1
          %s399 = scalar_select %p398, %s29, 1
          %s400 = smul.addr %s399, 4
          %s401 = scalar_lea.vmem %s0, %s400
        $region68: #{tpu_custom_call.1} parent=63 // pred_fallthru
          _
      $region64: #{tpu_custom_call.1} parent=5 // pred_fallthru
        _
      %p402 = scmp.le.s32.totalorder 1, %s22
      %p403 = scmp.lt.s32.totalorder %s22, 3
      %p404 = pnand %p402, %p403
      %p405 = pneg %p404
      // Predicated region
      $region69: #{tpu_custom_call.1} parent=5 // pred_check
        _
      $region70: #{tpu_custom_call.1} parent=5 // pred_check_branch
        %407 = sbr.rel (%p404) target = $region72
      $region71: #{tpu_custom_call.1} parent=5 // pred_region
        %s408 = ssub.s32 %s22, 1
        %p409 = scmp.lt.s32.totalorder %s31, 1
        %s410 = scalar_select %p409, %s31, 1
        %s411 = smul.addr %s410, 4
        %s412 = scalar_lea.vmem %s0, %s411
        %p413 = pneg %p60
        %p414 = pneg %p57
        %p415 = pneg %p81
        %p416 = pneg %p78
        %p417 = pneg %p102
        %p418 = pneg %p99
        %p419 = pneg %p123
        %p420 = pneg %p120
        %p421 = pneg %p144
        %p422 = pneg %p141
        %p423 = pneg %p165
        %p424 = pneg %p162
        %p425 = pneg %p186
        %p426 = pneg %p183
        %p427 = pneg %p207
        %p428 = pneg %p204
        %p429 = pneg %p228
        %p430 = pneg %p225
        %p431 = pneg %p249
        %p432 = pneg %p246
        %p433 = pneg %p270
        %p434 = pneg %p267
        %p435 = pneg %p291
        %p436 = pneg %p288
        %p437 = pneg %p312
        %p438 = pneg %p309
        %p439 = pneg %p340
        %p440 = pneg %p337
        %s441 = sand.u32 %s327, 1
        %s442 = scalar_lea.sflag [#allocation6], %s441
        %s443 = sand.u32 %s327, 1
        %s444 = smul.addr %s443, 8
        %s445 = scalar_lea.vmem [#allocation5], %s444
        %p446 = scmp.lt.s32.totalorder %s31, 1
        %s447 = scalar_select %p446, %s31, 1
        %s448 = smul.addr %s447, 4
        %s449 = scalar_lea.vmem %s0, %s448
        %p451 = scmp.eq.s32.totalorder %s32, 0
        // Predicated region
        $region73: #{tpu_custom_call.1} parent=71 // pred_check
          %p452 = pneg %p451
        $region74: #{tpu_custom_call.1} parent=71 // pred_check_branch
          %454 = sbr.rel (%p452) target = $region76
        $region75: #{tpu_custom_call.1} parent=71 // pred_region
          %v455 = vld [vmem:[%s449] sm:$0xf]
          %v456 = vunpack.c.l.bf16 %v455
          %v457 = vld [vmem:[%s1] sm:$0x1]
          %v458 = vld [vmem:[%s2] sm:$0x1]
          %vm459 = vcmask 261120
          %v460 = vsel %vm459, %v456, 0.0
          %461 = vadd.xlane.f32.xlu0 %v460
          %v462 = vpop.xlane.xlu0 %461
          %v463 = vrcp.pop 32.0
          %v464 = vmul.f32 %v462, %v463
          %v465 = vsub.f32 %v456, %v464
          %v466 = vmul.f32 %v465, %v465
          %v467 = vsel %vm459, %v466, 0.0
          %468 = vadd.xlane.f32.xlu0 %v467
          %v469 = vpop.xlane.xlu0 %468
          %v470 = vmul.f32 %v469, %v463
          %v471 = vadd.f32 %v470, 1e-05
          %v472 = vrsqrt.pop %v471
          %v473 = vmul.f32 %v465, %v472
          %v475 = vlaneseq
          %v476 = vshrl.u32 %v475, 7
          %v477 = vsub.s32 0, %v476
          %v478 = vrot.slane %v457, %v477
          %v480 = vmul.f32 %v473, %v478
          %v482 = vlaneseq
          %v483 = vshrl.u32 %v482, 7
          %v484 = vsub.s32 0, %v483
          %v485 = vrot.slane %v458, %v484
          %v487 = vadd.f32 %v480, %v485
          %v488 = vpack.c.bf16 %v487, %v487
          %vm489 = vcmask 257024
          %490 = vst.msk [vmem:[#allocation2] sm:$0xf] %vm489, %v488
          %v491 = vld [vmem:[%s4] sm:$0xf]
          %v492 = vld [vmem:[%s4 + $0x4] sm:$0xf]
          %v493 = vld [vmem:[%s4 + $0x8] sm:$0xf]
          %v494 = vld [vmem:[%s4 + $0xc] sm:$0xf]
          %v499 = vunpack.c.l.b16 %v491
          %v500 = vunpack.c.l.b16 %v492
          %v501 = vunpack.c.l.b16 %v493
          %v502 = vunpack.c.l.b16 %v494
          %v503 = vpack.c.b16 %v500, %v499
          %v504 = vpack.c.b16 %v502, %v501
          %v508 = vsel %vm459, %v488, 0
          %510 = vmatprep.subr.bf16.mxu0 0
          %511 = vmatpush1.bf16.msra.mxu0 %v503
          %512 = vmatprep.subr.bf16.mxu0 0
          %513 = vmatpush1.bf16.msra.mxu0 %v504
          %514 = vmatprep.subr.bf16.mxu0 0
          %515 = vmatpush1.bf16.msra.mxu0 0
          %516 = vmatprep.subr.bf16.mxu0 0
          %517 = vmatpush1.bf16.msra.mxu0 0
          %518 = vmatprep.subr.bf16.mxu0 0
          %519 = vmatpush1.bf16.msra.mxu0 0
          %520 = vmatprep.subr.bf16.mxu0 0
          %521 = vmatpush1.bf16.msra.mxu0 0
          %522 = vmatprep.subr.bf16.mxu0 0
          %523 = vmatpush1.bf16.msra.mxu0 0
          %524 = vmatprep.subr.bf16.mxu0 0
          %525 = vmatpush1.bf16.msra.mxu0 0
          %526 = vmatprep.subr.bf16.mxu0 0
          %527 = vmatpush1.bf16.msra.mxu0 0
          %528 = vmatprep.subr.bf16.mxu0 0
          %529 = vmatpush1.bf16.msra.mxu0 0
          %530 = vmatprep.subr.bf16.mxu0 0
          %531 = vmatpush1.bf16.msra.mxu0 0
          %532 = vmatprep.subr.bf16.mxu0 0
          %533 = vmatpush1.bf16.msra.mxu0 0
          %534 = vmatprep.subr.bf16.mxu0 0
          %535 = vmatpush1.bf16.msra.mxu0 0
          %536 = vmatprep.subr.bf16.mxu0 0
          %537 = vmatpush1.bf16.msra.mxu0 0
          %538 = vmatprep.subr.bf16.mxu0 0
          %539 = vmatpush1.bf16.msra.mxu0 0
          %540 = vmatprep.subr.bf16.mxu0 0
          %541 = vmatpush1.bf16.msra.mxu0 0
          %542 = vmatprep.mubr.bf16.mxu0 0
          %543 = vmatmul.mubr.bf16.gmra.mrb[0].mxu0 %v508
          %v544 = vpop.f32.mrb[0].mxu0
          %v545 = vadd.f32 0.0, %v544
          %v546 = vpop.f32.mrb[0].mxu0
          %v547 = vpop.f32.mrb[0].mxu0
          %v548 = vpop.f32.mrb[0].mxu0
          %549 = vdwg.mxu0
          %v550 = vpack.c.bf16 %v545, %v545
          %vm551 = vcmask 60416
          %552 = vst.msk [vmem:[#allocation3] sm:$0xf] %vm551, %v550
          %v554 = vunpack.c.l.b16 %v550
          %v555 = vpack.c.b16 %v554, %v554
          %556 = vrot.lane.b32.xlu0 %v555, 96
          %v557 = vpop.permute.xlu0 %556
          %559 = vst.msk [vmem:[#allocation4] sm:$0xf] %vm551, %v557
          %560 = vrot.lane.b32.xlu0 %v555, 120
          %v561 = vpop.permute.xlu0 %560
          %s563 = scalar_lea.vmem [#allocation3], 4
          %564 = vst.msk [vmem:[%s563] sm:$0xf] %vm551, %v561
          %565 = vrot.lane.b32.xlu0 %v555, 88
          %v566 = vpop.permute.xlu0 %565
          %s568 = scalar_lea.vmem [#allocation4], 4
          %569 = vst.msk [vmem:[%s568] sm:$0xf] %vm551, %v566
          %570 = vrot.lane.b32.xlu0 %v555, 112
          %v571 = vpop.permute.xlu0 %570
          %s573 = scalar_lea.vmem [#allocation3], 8
          %574 = vst.msk [vmem:[%s573] sm:$0xf] %vm551, %v571
          %575 = vrot.lane.b32.xlu0 %v555, 80
          %v576 = vpop.permute.xlu0 %575
          %s578 = scalar_lea.vmem [#allocation4], 8
          %579 = vst.msk [vmem:[%s578] sm:$0xf] %vm551, %v576
          %580 = vrot.lane.b32.xlu0 %v555, 104
          %v581 = vpop.permute.xlu0 %580
          %s583 = scalar_lea.vmem [#allocation3], 12
          %584 = vst.msk [vmem:[%s583] sm:$0xf] %vm551, %v581
          %585 = vrot.lane.b32.xlu0 %v555, 72
          %v586 = vpop.permute.xlu0 %585
          %s588 = scalar_lea.vmem [#allocation4], 12
          %589 = vst.msk [vmem:[%s588] sm:$0xf] %vm551, %v586
        $region76: #{tpu_custom_call.1} parent=71 // pred_fallthru
          _
        %s590 = smul.u32 %s32, 8
        %s591 = sshra.s32 %s590, 3
        %s592 = sand.u32 %s590, 7
        %s593 = smul.addr %s591, 4
        %s594 = scalar_lea.vmem %s449, %s593
        %v595 = vld [vmem:[%s594] sm:$0xf]
        %v596 = vunpack.c.l.bf16 %v595
        %s597 = smul.addr %s591, 4
        %s598 = scalar_lea.vmem [#allocation2], %s597
        %v599 = vld [vmem:[%s598] sm:$0xf]
        %v600 = vld [vmem:[%s3] sm:$0xf]
        %v601 = vld [vmem:[%s3 + $0x4] sm:$0xf]
        %v602 = vld [vmem:[%s3 + $0x8] sm:$0xf]
        %v603 = vld [vmem:[%s3 + $0xc] sm:$0xf]
        %v608 = vunpack.c.l.b16 %v600
        %v609 = vunpack.c.l.b16 %v601
        %v610 = vunpack.c.l.b16 %v602
        %v611 = vunpack.c.l.b16 %v603
        %v612 = vpack.c.b16 %v609, %v608
        %v613 = vpack.c.b16 %v611, %v610
        %vm616 = vcmask 261120
        %v618 = vsel %vm616, %v599, 0
        %620 = vmatprep.subr.bf16.mxu0 0
        %621 = vmatpush1.bf16.msra.mxu0 %v612
        %622 = vmatprep.subr.bf16.mxu0 0
        %623 = vmatpush1.bf16.msra.mxu0 %v613
        %624 = vmatprep.subr.bf16.mxu0 0
        %625 = vmatpush1.bf16.msra.mxu0 0
        %626 = vmatprep.subr.bf16.mxu0 0
        %627 = vmatpush1.bf16.msra.mxu0 0
        %628 = vmatprep.subr.bf16.mxu0 0
        %629 = vmatpush1.bf16.msra.mxu0 0
        %630 = vmatprep.subr.bf16.mxu0 0
        %631 = vmatpush1.bf16.msra.mxu0 0
        %632 = vmatprep.subr.bf16.mxu0 0
        %633 = vmatpush1.bf16.msra.mxu0 0
        %634 = vmatprep.subr.bf16.mxu0 0
        %635 = vmatpush1.bf16.msra.mxu0 0
        %636 = vmatprep.subr.bf16.mxu0 0
        %637 = vmatpush1.bf16.msra.mxu0 0
        %638 = vmatprep.subr.bf16.mxu0 0
        %639 = vmatpush1.bf16.msra.mxu0 0
        %640 = vmatprep.subr.bf16.mxu0 0
        %641 = vmatpush1.bf16.msra.mxu0 0
        %642 = vmatprep.subr.bf16.mxu0 0
        %643 = vmatpush1.bf16.msra.mxu0 0
        %644 = vmatprep.subr.bf16.mxu0 0
        %645 = vmatpush1.bf16.msra.mxu0 0
        %646 = vmatprep.subr.bf16.mxu0 0
        %647 = vmatpush1.bf16.msra.mxu0 0
        %648 = vmatprep.subr.bf16.mxu0 0
        %649 = vmatpush1.bf16.msra.mxu0 0
        %650 = vmatprep.subr.bf16.mxu0 0
        %651 = vmatpush1.bf16.msra.mxu0 0
        %652 = vmatprep.mubr.bf16.mxu0 0
        %653 = vmatmul.mubr.bf16.gmra.mrb[0].mxu0 %v618
        %v654 = vpop.f32.mrb[0].mxu0
        %v655 = vadd.f32 0.0, %v654
        %v656 = vpop.f32.mrb[0].mxu0
        %v657 = vpop.f32.mrb[0].mxu0
        %v658 = vpop.f32.mrb[0].mxu0
        %659 = vdwg.mxu0
        %v660 = vpack.c.bf16 %v655, %v655
        %v661 = vld [vmem:[#allocation3] sm:$0xf]
        %vm662 = vcmask 64512
        %v664 = vsel %vm662, %v660, 0
        %v667 = vsel %vm662, %v661, 0
        %669 = vmatprep.subr.bf16.mxu0 0
        %670 = vmatpush1.bf16.xpose.msra.mxu0 %v667
        %671 = vmatprep.subr.bf16.mxu0 0
        %672 = vmatpush1.bf16.xpose.msra.mxu0 0
        %673 = vmatprep.subr.bf16.mxu0 0
        %674 = vmatpush1.bf16.xpose.msra.mxu0 0
        %675 = vmatprep.subr.bf16.mxu0 0
        %676 = vmatpush1.bf16.xpose.msra.mxu0 0
        %677 = vmatprep.subr.bf16.mxu0 0
        %678 = vmatpush1.bf16.xpose.msra.mxu0 0
        %679 = vmatprep.subr.bf16.mxu0 0
        %680 = vmatpush1.bf16.xpose.msra.mxu0 0
        %681 = vmatprep.subr.bf16.mxu0 0
        %682 = vmatpush1.bf16.xpose.msra.mxu0 0
        %683 = vmatprep.subr.bf16.mxu0 0
        %684 = vmatpush1.bf16.xpose.msra.mxu0 0
        %685 = vmatprep.subr.bf16.mxu0 0
        %686 = vmatpush1.bf16.xpose.msra.mxu0 0
        %687 = vmatprep.subr.bf16.mxu0 0
        %688 = vmatpush1.bf16.xpose.msra.mxu0 0
        %689 = vmatprep.subr.bf16.mxu0 0
        %690 = vmatpush1.bf16.xpose.msra.mxu0 0
        %691 = vmatprep.subr.bf16.mxu0 0
        %692 = vmatpush1.bf16.xpose.msra.mxu0 0
        %693 = vmatprep.subr.bf16.mxu0 0
        %694 = vmatpush1.bf16.xpose.msra.mxu0 0
        %695 = vmatprep.subr.bf16.mxu0 0
        %696 = vmatpush1.bf16.xpose.msra.mxu0 0
        %697 = vmatprep.subr.bf16.mxu0 0
        %698 = vmatpush1.bf16.xpose.msra.mxu0 0
        %699 = vmatprep.subr.bf16.mxu0 0
        %700 = vmatpush1.bf16.xpose.msra.mxu0 0
        %701 = vmatprep.mubr.bf16.mxu0 0
        %702 = vmatmul.mubr.bf16.gmra.mrb[0].mxu0 %v664
        %v703 = vpop.f32.mrb[0].mxu0
        %v704 = vadd.f32 0.0, %v703
        %v705 = vpop.f32.mrb[0].mxu0
        %v706 = vpop.f32.mrb[0].mxu0
        %v707 = vpop.f32.mrb[0].mxu0
        %708 = vdwg.mxu0
        %v709 = vsel %vm662, %v704, -inf
        %710 = vmax.xlane.f32.xlu0 %v709
        %v711 = vpop.xlane.xlu0 %710
        %v712 = vsub.f32 %v704, %v711
        %v713 = vmul.f32 %v712, 1.442695
        %v714 = vpow.pop %v713
        %v715 = vsel %vm662, %v714, 0.0
        %716 = vadd.xlane.f32.xlu0 %v715
        %v717 = vpop.xlane.xlu0 %716
        %v718 = vrcp.pop %v717
        %v719 = vmul.f32 %v714, %v718
        %v720 = vpack.c.bf16 %v719, %v719
        %v721 = vld [vmem:[#allocation4] sm:$0xf]
        %v723 = vsel %vm662, %v720, 0
        %vm725 = vcmask 1043456
        %v727 = vsel %vm725, %v721, 0
        %729 = vmatprep.subr.bf16.mxu0 0
        %730 = vmatpush1.bf16.msra.mxu0 %v727
        %731 = vmatprep.subr.bf16.mxu0 0
        %732 = vmatpush1.bf16.msra.mxu0 0
        %733 = vmatprep.subr.bf16.mxu0 0
        %734 = vmatpush1.bf16.msra.mxu0 0
        %735 = vmatprep.subr.bf16.mxu0 0
        %736 = vmatpush1.bf16.msra.mxu0 0
        %737 = vmatprep.subr.bf16.mxu0 0
        %738 = vmatpush1.bf16.msra.mxu0 0
        %739 = vmatprep.subr.bf16.mxu0 0
        %740 = vmatpush1.bf16.msra.mxu0 0
        %741 = vmatprep.subr.bf16.mxu0 0
        %742 = vmatpush1.bf16.msra.mxu0 0
        %743 = vmatprep.subr.bf16.mxu0 0
        %744 = vmatpush1.bf16.msra.mxu0 0
        %745 = vmatprep.subr.bf16.mxu0 0
        %746 = vmatpush1.bf16.msra.mxu0 0
        %747 = vmatprep.subr.bf16.mxu0 0
        %748 = vmatpush1.bf16.msra.mxu0 0
        %749 = vmatprep.subr.bf16.mxu0 0
        %750 = vmatpush1.bf16.msra.mxu0 0
        %751 = vmatprep.subr.bf16.mxu0 0
        %752 = vmatpush1.bf16.msra.mxu0 0
        %753 = vmatprep.subr.bf16.mxu0 0
        %754 = vmatpush1.bf16.msra.mxu0 0
        %755 = vmatprep.subr.bf16.mxu0 0
        %756 = vmatpush1.bf16.msra.mxu0 0
        %757 = vmatprep.subr.bf16.mxu0 0
        %758 = vmatpush1.bf16.msra.mxu0 0
        %759 = vmatprep.subr.bf16.mxu0 0
        %760 = vmatpush1.bf16.msra.mxu0 0
        %761 = vmatprep.mubr.bf16.mxu0 0
        %762 = vmatmul.mubr.bf16.gmra.mrb[0].mxu0 %v723
        %v763 = vpop.f32.mrb[0].mxu0
        %v764 = vadd.f32 0.0, %v763
        %v765 = vpop.f32.mrb[0].mxu0
        %v766 = vpop.f32.mrb[0].mxu0
        %v767 = vpop.f32.mrb[0].mxu0
        %768 = vdwg.mxu0
        %v769 = vpack.c.bf16 %v764, %v764
        %v770 = vld [vmem:[%s5] sm:$0xf]
        %s771 = scalar_lea.vmem %s3, 16
        %v772 = vld [vmem:[%s771] sm:$0xf]
        %v773 = vld [vmem:[%s771 + $0x4] sm:$0xf]
        %v774 = vld [vmem:[%s771 + $0x8] sm:$0xf]
        %v775 = vld [vmem:[%s771 + $0xc] sm:$0xf]
        %v780 = vunpack.c.l.b16 %v772
        %v781 = vunpack.c.l.b16 %v773
        %v782 = vunpack.c.l.b16 %v774
        %v783 = vunpack.c.l.b16 %v775
        %v784 = vpack.c.b16 %v781, %v780
        %v785 = vpack.c.b16 %v783, %v782
        %788 = vmatprep.subr.bf16.mxu0 0
        %789 = vmatpush1.bf16.msra.mxu0 %v784
        %790 = vmatprep.subr.bf16.mxu0 0
        %791 = vmatpush1.bf16.msra.mxu0 %v785
        %792 = vmatprep.subr.bf16.mxu0 0
        %793 = vmatpush1.bf16.msra.mxu0 0
        %794 = vmatprep.subr.bf16.mxu0 0
        %795 = vmatpush1.bf16.msra.mxu0 0
        %796 = vmatprep.subr.bf16.mxu0 0
        %797 = vmatpush1.bf16.msra.mxu0 0
        %798 = vmatprep.subr.bf16.mxu0 0
        %799 = vmatpush1.bf16.msra.mxu0 0
        %800 = vmatprep.subr.bf16.mxu0 0
        %801 = vmatpush1.bf16.msra.mxu0 0
        %802 = vmatprep.subr.bf16.mxu0 0
        %803 = vmatpush1.bf16.msra.mxu0 0
        %804 = vmatprep.subr.bf16.mxu0 0
        %805 = vmatpush1.bf16.msra.mxu0 0
        %806 = vmatprep.subr.bf16.mxu0 0
        %807 = vmatpush1.bf16.msra.mxu0 0
        %808 = vmatprep.subr.bf16.mxu0 0
        %809 = vmatpush1.bf16.msra.mxu0 0
        %810 = vmatprep.subr.bf16.mxu0 0
        %811 = vmatpush1.bf16.msra.mxu0 0
        %812 = vmatprep.subr.bf16.mxu0 0
        %813 = vmatpush1.bf16.msra.mxu0 0
        %814 = vmatprep.subr.bf16.mxu0 0
        %815 = vmatpush1.bf16.msra.mxu0 0
        %816 = vmatprep.subr.bf16.mxu0 0
        %817 = vmatpush1.bf16.msra.mxu0 0
        %818 = vmatprep.subr.bf16.mxu0 0
        %819 = vmatpush1.bf16.msra.mxu0 0
        %820 = vmatprep.mubr.bf16.mxu0 0
        %821 = vmatmul.mubr.bf16.gmra.mrb[0].mxu0 %v618
        %v822 = vpop.f32.mrb[0].mxu0
        %v823 = vadd.f32 0.0, %v822
        %v824 = vpop.f32.mrb[0].mxu0
        %v825 = vpop.f32.mrb[0].mxu0
        %v826 = vpop.f32.mrb[0].mxu0
        %827 = vdwg.mxu0
        %v828 = vpack.c.bf16 %v823, %v823
        %s829 = scalar_lea.vmem [#allocation3], 4
        %v830 = vld [vmem:[%s829] sm:$0xf]
        %v832 = vsel %vm662, %v828, 0
        %v835 = vsel %vm662, %v830, 0
        %837 = vmatprep.subr.bf16.mxu0 0
        %838 = vmatpush1.bf16.xpose.msra.mxu0 %v835
        %839 = vmatprep.subr.bf16.mxu0 0
        %840 = vmatpush1.bf16.xpose.msra.mxu0 0
        %841 = vmatprep.subr.bf16.mxu0 0
        %842 = vmatpush1.bf16.xpose.msra.mxu0 0
        %843 = vmatprep.subr.bf16.mxu0 0
        %844 = vmatpush1.bf16.xpose.msra.mxu0 0
        %845 = vmatprep.subr.bf16.mxu0 0
        %846 = vmatpush1.bf16.xpose.msra.mxu0 0
        %847 = vmatprep.subr.bf16.mxu0 0
        %848 = vmatpush1.bf16.xpose.msra.mxu0 0
        %849 = vmatprep.subr.bf16.mxu0 0
        %850 = vmatpush1.bf16.xpose.msra.mxu0 0
        %851 = vmatprep.subr.bf16.mxu0 0
        %852 = vmatpush1.bf16.xpose.msra.mxu0 0
        %853 = vmatprep.subr.bf16.mxu0 0
        %854 = vmatpush1.bf16.xpose.msra.mxu0 0
        %855 = vmatprep.subr.bf16.mxu0 0
        %856 = vmatpush1.bf16.xpose.msra.mxu0 0
        %857 = vmatprep.subr.bf16.mxu0 0
        %858 = vmatpush1.bf16.xpose.msra.mxu0 0
        %859 = vmatprep.subr.bf16.mxu0 0
        %860 = vmatpush1.bf16.xpose.msra.mxu0 0
        %861 = vmatprep.subr.bf16.mxu0 0
        %862 = vmatpush1.bf16.xpose.msra.mxu0 0
        %863 = vmatprep.subr.bf16.mxu0 0
        %864 = vmatpush1.bf16.xpose.msra.mxu0 0
        %865 = vmatprep.subr.bf16.mxu0 0
        %866 = vmatpush1.bf16.xpose.msra.mxu0 0
        %867 = vmatprep.subr.bf16.mxu0 0
        %868 = vmatpush1.bf16.xpose.msra.mxu0 0
        %869 = vmatprep.mubr.bf16.mxu0 0
        %870 = vmatmul.mubr.bf16.gmra.mrb[0].mxu0 %v832
        %v871 = vpop.f32.mrb[0].mxu0
        %v872 = vadd.f32 0.0, %v871
        %v873 = vpop.f32.mrb[0].mxu0
        %v874 = vpop.f32.mrb[0].mxu0
        %v875 = vpop.f32.mrb[0].mxu0
        %876 = vdwg.mxu0
        %v877 = vsel %vm662, %v872, -inf
        %878 = vmax.xlane.f32.xlu0 %v877
        %v879 = vpop.xlane.xlu0 %878
        %v880 = vsub.f32 %v872, %v879
        %v881 = vmul.f32 %v880, 1.442695
        %v882 = vpow.pop %v881
        %v883 = vsel %vm662, %v882, 0.0
        %884 = vadd.xlane.f32.xlu0 %v883
        %v885 = vpop.xlane.xlu0 %884
        %v886 = vrcp.pop %v885
        %v887 = vmul.f32 %v882, %v886
        %v888 = vpack.c.bf16 %v887, %v887
        %s889 = scalar_lea.vmem [#allocation4], 4
        %v890 = vld [vmem:[%s889] sm:$0xf]
        %v892 = vsel %vm662, %v888, 0
        %v895 = vsel %vm725, %v890, 0
        %897 = vmatprep.subr.bf16.mxu0 0
        %898 = vmatpush1.bf16.msra.mxu0 %v895
        %899 = vmatprep.subr.bf16.mxu0 0
        %900 = vmatpush1.bf16.msra.mxu0 0
        %901 = vmatprep.subr.bf16.mxu0 0
        %902 = vmatpush1.bf16.msra.mxu0 0
        %903 = vmatprep.subr.bf16.mxu0 0
        %904 = vmatpush1.bf16.msra.mxu0 0
        %905 = vmatprep.subr.bf16.mxu0 0
        %906 = vmatpush1.bf16.msra.mxu0 0
        %907 = vmatprep.subr.bf16.mxu0 0
        %908 = vmatpush1.bf16.msra.mxu0 0
        %909 = vmatprep.subr.bf16.mxu0 0
        %910 = vmatpush1.bf16.msra.mxu0 0
        %911 = vmatprep.subr.bf16.mxu0 0
        %912 = vmatpush1.bf16.msra.mxu0 0
        %913 = vmatprep.subr.bf16.mxu0 0
        %914 = vmatpush1.bf16.msra.mxu0 0
        %915 = vmatprep.subr.bf16.mxu0 0
        %916 = vmatpush1.bf16.msra.mxu0 0
        %917 = vmatprep.subr.bf16.mxu0 0
        %918 = vmatpush1.bf16.msra.mxu0 0
        %919 = vmatprep.subr.bf16.mxu0 0
        %920 = vmatpush1.bf16.msra.mxu0 0
        %921 = vmatprep.subr.bf16.mxu0 0
        %922 = vmatpush1.bf16.msra.mxu0 0
        %923 = vmatprep.subr.bf16.mxu0 0
        %924 = vmatpush1.bf16.msra.mxu0 0
        %925 = vmatprep.subr.bf16.mxu0 0
        %926 = vmatpush1.bf16.msra.mxu0 0
        %927 = vmatprep.subr.bf16.mxu0 0
        %928 = vmatpush1.bf16.msra.mxu0 0
        %929 = vmatprep.mubr.bf16.mxu0 0
        %930 = vmatmul.mubr.bf16.gmra.mrb[0].mxu0 %v892
        %v931 = vpop.f32.mrb[0].mxu0
        %v932 = vadd.f32 0.0, %v931
        %v933 = vpop.f32.mrb[0].mxu0
        %v934 = vpop.f32.mrb[0].mxu0
        %v935 = vpop.f32.mrb[0].mxu0
        %936 = vdwg.mxu0
        %v937 = vpack.c.bf16 %v932, %v932
        %s938 = scalar_lea.vmem %s5, 4
        %v939 = vld [vmem:[%s938] sm:$0xf]
        %v941 = vsel %vm662, %v937, 0
        %v944 = vsel %vm725, %v939, 0
        %946 = vmatprep.subr.bf16.mxu0 0
        %947 = vmatpush1.bf16.msra.mxu0 %v944
        %948 = vmatprep.subr.bf16.mxu0 0
        %949 = vmatpush1.bf16.msra.mxu0 0
        %950 = vmatprep.subr.bf16.mxu0 0
        %951 = vmatpush1.bf16.msra.mxu0 0
        %952 = vmatprep.subr.bf16.mxu0 0
        %953 = vmatpush1.bf16.msra.mxu0 0
        %954 = vmatprep.subr.bf16.mxu0 0
        %955 = vmatpush1.bf16.msra.mxu0 0
        %956 = vmatprep.subr.bf16.mxu0 0
        %957 = vmatpush1.bf16.msra.mxu0 0
        %958 = vmatprep.subr.bf16.mxu0 0
        %959 = vmatpush1.bf16.msra.mxu0 0
        %960 = vmatprep.subr.bf16.mxu0 0
        %961 = vmatpush1.bf16.msra.mxu0 0
        %962 = vmatprep.subr.bf16.mxu0 0
        %963 = vmatpush1.bf16.msra.mxu0 0
        %964 = vmatprep.subr.bf16.mxu0 0
        %965 = vmatpush1.bf16.msra.mxu0 0
        %966 = vmatprep.subr.bf16.mxu0 0
        %967 = vmatpush1.bf16.msra.mxu0 0
        %968 = vmatprep.subr.bf16.mxu0 0
        %969 = vmatpush1.bf16.msra.mxu0 0
        %970 = vmatprep.subr.bf16.mxu0 0
        %971 = vmatpush1.bf16.msra.mxu0 0
        %972 = vmatprep.subr.bf16.mxu0 0
        %973 = vmatpush1.bf16.msra.mxu0 0
        %974 = vmatprep.subr.bf16.mxu0 0
        %975 = vmatpush1.bf16.msra.mxu0 0
        %976 = vmatprep.subr.bf16.mxu0 0
        %977 = vmatpush1.bf16.msra.mxu0 0
        %978 = vmatprep.mubr.bf16.mxu0 0
        %979 = vmatmul.mubr.bf16.gmra.mrb[0].mxu0 %v941
        %v980 = vpop.f32.mrb[0].mxu0
        %v981 = vadd.f32 0.0, %v980
        %v982 = vpop.f32.mrb[0].mxu0
        %v983 = vpop.f32.mrb[0].mxu0
        %v984 = vpop.f32.mrb[0].mxu0
        %985 = vdwg.mxu0
        %v987 = vsel %vm662, %v769, 0
        %v990 = vsel %vm725, %v770, 0
        %992 = vmatprep.subr.bf16.mxu0 0
        %993 = vmatpush1.bf16.msra.mxu0 %v990
        %994 = vmatprep.subr.bf16.mxu0 0
        %995 = vmatpush1.bf16.msra.mxu0 0
        %996 = vmatprep.subr.bf16.mxu0 0
        %997 = vmatpush1.bf16.msra.mxu0 0
        %998 = vmatprep.subr.bf16.mxu0 0
        %999 = vmatpush1.bf16.msra.mxu0 0
        %1000 = vmatprep.subr.bf16.mxu0 0
        %1001 = vmatpush1.bf16.msra.mxu0 0
        %1002 = vmatprep.subr.bf16.mxu0 0
        %1003 = vmatpush1.bf16.msra.mxu0 0
        %1004 = vmatprep.subr.bf16.mxu0 0
        %1005 = vmatpush1.bf16.msra.mxu0 0
        %1006 = vmatprep.subr.bf16.mxu0 0
        %1007 = vmatpush1.bf16.msra.mxu0 0
        %1008 = vmatprep.subr.bf16.mxu0 0
        %1009 = vmatpush1.bf16.msra.mxu0 0
        %1010 = vmatprep.subr.bf16.mxu0 0
        %1011 = vmatpush1.bf16.msra.mxu0 0
        %1012 = vmatprep.subr.bf16.mxu0 0
        %1013 = vmatpush1.bf16.msra.mxu0 0
        %1014 = vmatprep.subr.bf16.mxu0 0
        %1015 = vmatpush1.bf16.msra.mxu0 0
        %1016 = vmatprep.subr.bf16.mxu0 0
        %1017 = vmatpush1.bf16.msra.mxu0 0
        %1018 = vmatprep.subr.bf16.mxu0 0
        %1019 = vmatpush1.bf16.msra.mxu0 0
        %1020 = vmatprep.subr.bf16.mxu0 0
        %1021 = vmatpush1.bf16.msra.mxu0 0
        %1022 = vmatprep.subr.bf16.mxu0 0
        %1023 = vmatpush1.bf16.msra.mxu0 0
        %1024 = vmatprep.mubr.bf16.mxu0 0
        %1025 = vmatmul.mubr.bf16.gmra.mrb[0].mxu0 %v987
        %v1026 = vpop.f32.mrb[0].mxu0
        %v1027 = vadd.f32 %v981, %v1026
        %v1028 = vpop.f32.mrb[0].mxu0
        %v1029 = vpop.f32.mrb[0].mxu0
        %v1030 = vpop.f32.mrb[0].mxu0
        %1031 = vdwg.mxu0
        %s1032 = scalar_lea.vmem %s3, 32
        %v1033 = vld [vmem:[%s1032] sm:$0xf]
        %v1034 = vld [vmem:[%s1032 + $0x4] sm:$0xf]
        %v1035 = vld [vmem:[%s1032 + $0x8] sm:$0xf]
        %v1036 = vld [vmem:[%s1032 + $0xc] sm:$0xf]
        %v1041 = vunpack.c.l.b16 %v1033
        %v1042 = vunpack.c.l.b16 %v1034
        %v1043 = vunpack.c.l.b16 %v1035
        %v1044 = vunpack.c.l.b16 %v1036
        %v1045 = vpack.c.b16 %v1042, %v1041
        %v1046 = vpack.c.b16 %v1044, %v1043
        %1049 = vmatprep.subr.bf16.mxu0 0
        %1050 = vmatpush1.bf16.msra.mxu0 %v1045
        %1051 = vmatprep.subr.bf16.mxu0 0
        %1052 = vmatpush1.bf16.msra.mxu0 %v1046
        %1053 = vmatprep.subr.bf16.mxu0 0
        %1054 = vmatpush1.bf16.msra.mxu0 0
        %1055 = vmatprep.subr.bf16.mxu0 0
        %1056 = vmatpush1.bf16.msra.mxu0 0
        %1057 = vmatprep.subr.bf16.mxu0 0
        %1058 = vmatpush1.bf16.msra.mxu0 0
        %1059 = vmatprep.subr.bf16.mxu0 0
        %1060 = vmatpush1.bf16.msra.mxu0 0
        %1061 = vmatprep.subr.bf16.mxu0 0
        %1062 = vmatpush1.bf16.msra.mxu0 0
        %1063 = vmatprep.subr.bf16.mxu0 0
        %1064 = vmatpush1.bf16.msra.mxu0 0
        %1065 = vmatprep.subr.bf16.mxu0 0
        %1066 = vmatpush1.bf16.msra.mxu0 0
        %1067 = vmatprep.subr.bf16.mxu0 0
        %1068 = vmatpush1.bf16.msra.mxu0 0
        %1069 = vmatprep.subr.bf16.mxu0 0
        %1070 = vmatpush1.bf16.msra.mxu0 0
        %1071 = vmatprep.subr.bf16.mxu0 0
        %1072 = vmatpush1.bf16.msra.mxu0 0
        %1073 = vmatprep.subr.bf16.mxu0 0
        %1074 = vmatpush1.bf16.msra.mxu0 0
        %1075 = vmatprep.subr.bf16.mxu0 0
        %1076 = vmatpush1.bf16.msra.mxu0 0
        %1077 = vmatprep.subr.bf16.mxu0 0
        %1078 = vmatpush1.bf16.msra.mxu0 0
        %1079 = vmatprep.subr.bf16.mxu0 0
        %1080 = vmatpush1.bf16.msra.mxu0 0
        %1081 = vmatprep.mubr.bf16.mxu0 0
        %1082 = vmatmul.mubr.bf16.gmra.mrb[0].mxu0 %v618
        %v1083 = vpop.f32.mrb[0].mxu0
        %v1084 = vadd.f32 0.0, %v1083
        %v1085 = vpop.f32.mrb[0].mxu0
        %v1086 = vpop.f32.mrb[0].mxu0
        %v1087 = vpop.f32.mrb[0].mxu0
        %1088 = vdwg.mxu0
        %v1089 = vpack.c.bf16 %v1084, %v1084
        %s1090 = scalar_lea.vmem [#allocation3], 8
        %v1091 = vld [vmem:[%s1090] sm:$0xf]
        %v1093 = vsel %vm662, %v1089, 0
        %v1096 = vsel %vm662, %v1091, 0
        %1098 = vmatprep.subr.bf16.mxu0 0
        %1099 = vmatpush1.bf16.xpose.msra.mxu0 %v1096
        %1100 = vmatprep.subr.bf16.mxu0 0
        %1101 = vmatpush1.bf16.xpose.msra.mxu0 0
        %1102 = vmatprep.subr.bf16.mxu0 0
        %1103 = vmatpush1.bf16.xpose.msra.mxu0 0
        %1104 = vmatprep.subr.bf16.mxu0 0
        %1105 = vmatpush1.bf16.xpose.msra.mxu0 0
        %1106 = vmatprep.subr.bf16.mxu0 0
        %1107 = vmatpush1.bf16.xpose.msra.mxu0 0
        %1108 = vmatprep.subr.bf16.mxu0 0
        %1109 = vmatpush1.bf16.xpose.msra.mxu0 0
        %1110 = vmatprep.subr.bf16.mxu0 0
        %1111 = vmatpush1.bf16.xpose.msra.mxu0 0
        %1112 = vmatprep.subr.bf16.mxu0 0
        %1113 = vmatpush1.bf16.xpose.msra.mxu0 0
        %1114 = vmatprep.subr.bf16.mxu0 0
        %1115 = vmatpush1.bf16.xpose.msra.mxu0 0
        %1116 = vmatprep.subr.bf16.mxu0 0
        %1117 = vmatpush1.bf16.xpose.msra.mxu0 0
        %1118 = vmatprep.subr.bf16.mxu0 0
        %1119 = vmatpush1.bf16.xpose.msra.mxu0 0
        %1120 = vmatprep.subr.bf16.mxu0 0
        %1121 = vmatpush1.bf16.xpose.msra.mxu0 0
        %1122 = vmatprep.subr.bf16.mxu0 0
        %1123 = vmatpush1.bf16.xpose.msra.mxu0 0
        %1124 = vmatprep.subr.bf16.mxu0 0
        %1125 = vmatpush1.bf16.xpose.msra.mxu0 0
        %1126 = vmatprep.subr.bf16.mxu0 0
        %1127 = vmatpush1.bf16.xpose.msra.mxu0 0
        %1128 = vmatprep.subr.bf16.mxu0 0
        %1129 = vmatpush1.bf16.xpose.msra.mxu0 0
        %1130 = vmatprep.mubr.bf16.mxu0 0
        %1131 = vmatmul.mubr.bf16.gmra.mrb[0].mxu0 %v1093
        %v1132 = vpop.f32.mrb[0].mxu0
        %v1133 = vadd.f32 0.0, %v1132
        %v1134 = vpop.f32.mrb[0].mxu0
        %v1135 = vpop.f32.mrb[0].mxu0
        %v1136 = vpop.f32.mrb[0].mxu0
        %1137 = vdwg.mxu0
        %v1138 = vsel %vm662, %v1133, -inf
        %1139 = vmax.xlane.f32.xlu0 %v1138
        %v1140 = vpop.xlane.xlu0 %1139
        %v1141 = vsub.f32 %v1133, %v1140
        %v1142 = vmul.f32 %v1141, 1.442695
        %v1143 = vpow.pop %v1142
        %v1144 = vsel %vm662, %v1143, 0.0
        %1145 = vadd.xlane.f32.xlu0 %v1144
        %v1146 = vpop.xlane.xlu0 %1145
        %v1147 = vrcp.pop %v1146
        %v1148 = vmul.f32 %v1143, %v1147
        %v1149 = vpack.c.bf16 %v1148, %v1148
        %s1150 = scalar_lea.vmem [#allocation4], 8
        %v1151 = vld [vmem:[%s1150] sm:$0xf]
        %v1153 = vsel %vm662, %v1149, 0
        %v1156 = vsel %vm725, %v1151, 0
        %1158 = vmatprep.subr.bf16.mxu0 0
        %1159 = vmatpush1.bf16.msra.mxu0 %v1156
        %1160 = vmatprep.subr.bf16.mxu0 0
        %1161 = vmatpush1.bf16.msra.mxu0 0
        %1162 = vmatprep.subr.bf16.mxu0 0
        %1163 = vmatpush1.bf16.msra.mxu0 0
        %1164 = vmatprep.subr.bf16.mxu0 0
        %1165 = vmatpush1.bf16.msra.mxu0 0
        %1166 = vmatprep.subr.bf16.mxu0 0
        %1167 = vmatpush1.bf16.msra.mxu0 0
        %1168 = vmatprep.subr.bf16.mxu0 0
        %1169 = vmatpush1.bf16.msra.mxu0 0
        %1170 = vmatprep.subr.bf16.mxu0 0
        %1171 = vmatpush1.bf16.msra.mxu0 0
        %1172 = vmatprep.subr.bf16.mxu0 0
        %1173 = vmatpush1.bf16.msra.mxu0 0
        %1174 = vmatprep.subr.bf16.mxu0 0
        %1175 = vmatpush1.bf16.msra.mxu0 0
        %1176 = vmatprep.subr.bf16.mxu0 0
        %1177 = vmatpush1.bf16.msra.mxu0 0
        %1178 = vmatprep.subr.bf16.mxu0 0
        %1179 = vmatpush1.bf16.msra.mxu0 0
        %1180 = vmatprep.subr.bf16.mxu0 0
        %1181 = vmatpush1.bf16.msra.mxu0 0
        %1182 = vmatprep.subr.bf16.mxu0 0
        %1183 = vmatpush1.bf16.msra.mxu0 0
        %1184 = vmatprep.subr.bf16.mxu0 0
        %1185 = vmatpush1.bf16.msra.mxu0 0
        %1186 = vmatprep.subr.bf16.mxu0 0
        %1187 = vmatpush1.bf16.msra.mxu0 0
        %1188 = vmatprep.subr.bf16.mxu0 0
        %1189 = vmatpush1.bf16.msra.mxu0 0
        %1190 = vmatprep.mubr.bf16.mxu0 0
        %1191 = vmatmul.mubr.bf16.gmra.mrb[0].mxu0 %v1153
        %v1192 = vpop.f32.mrb[0].mxu0
        %v1193 = vadd.f32 0.0, %v1192
        %v1194 = vpop.f32.mrb[0].mxu0
        %v1195 = vpop.f32.mrb[0].mxu0
        %v1196 = vpop.f32.mrb[0].mxu0
        %1197 = vdwg.mxu0
        %v1198 = vpack.c.bf16 %v1193, %v1193
        %s1199 = scalar_lea.vmem %s5, 8
        %v1200 = vld [vmem:[%s1199] sm:$0xf]
        %v1202 = vsel %vm662, %v1198, 0
        %v1205 = vsel %vm725, %v1200, 0
        %1207 = vmatprep.subr.bf16.mxu0 0
        %1208 = vmatpush1.bf16.msra.mxu0 %v1205
        %1209 = vmatprep.subr.bf16.mxu0 0
        %1210 = vmatpush1.bf16.msra.mxu0 0
        %1211 = vmatprep.subr.bf16.mxu0 0
        %1212 = vmatpush1.bf16.msra.mxu0 0
        %1213 = vmatprep.subr.bf16.mxu0 0
        %1214 = vmatpush1.bf16.msra.mxu0 0
        %1215 = vmatprep.subr.bf16.mxu0 0
        %1216 = vmatpush1.bf16.msra.mxu0 0
        %1217 = vmatprep.subr.bf16.mxu0 0
        %1218 = vmatpush1.bf16.msra.mxu0 0
        %1219 = vmatprep.subr.bf16.mxu0 0
        %1220 = vmatpush1.bf16.msra.mxu0 0
        %1221 = vmatprep.subr.bf16.mxu0 0
        %1222 = vmatpush1.bf16.msra.mxu0 0
        %1223 = vmatprep.subr.bf16.mxu0 0
        %1224 = vmatpush1.bf16.msra.mxu0 0
        %1225 = vmatprep.subr.bf16.mxu0 0
        %1226 = vmatpush1.bf16.msra.mxu0 0
        %1227 = vmatprep.subr.bf16.mxu0 0
        %1228 = vmatpush1.bf16.msra.mxu0 0
        %1229 = vmatprep.subr.bf16.mxu0 0
        %1230 = vmatpush1.bf16.msra.mxu0 0
        %1231 = vmatprep.subr.bf16.mxu0 0
        %1232 = vmatpush1.bf16.msra.mxu0 0
        %1233 = vmatprep.subr.bf16.mxu0 0
        %1234 = vmatpush1.bf16.msra.mxu0 0
        %1235 = vmatprep.subr.bf16.mxu0 0
        %1236 = vmatpush1.bf16.msra.mxu0 0
        %1237 = vmatprep.subr.bf16.mxu0 0
        %1238 = vmatpush1.bf16.msra.mxu0 0
        %1239 = vmatprep.mubr.bf16.mxu0 0
        %1240 = vmatmul.mubr.bf16.gmra.mrb[0].mxu0 %v1202
        %v1241 = vpop.f32.mrb[0].mxu0
        %v1242 = vadd.f32 0.0, %v1241
        %v1243 = vpop.f32.mrb[0].mxu0
        %v1244 = vpop.f32.mrb[0].mxu0
        %v1245 = vpop.f32.mrb[0].mxu0
        %1246 = vdwg.mxu0
        %v1247 = vadd.f32 %v1027, %v1242
        %s1248 = scalar_lea.vmem %s3, 48
        %v1249 = vld [vmem:[%s1248] sm:$0xf]
        %v1250 = vld [vmem:[%s1248 + $0x4] sm:$0xf]
        %v1251 = vld [vmem:[%s1248 + $0x8] sm:$0xf]
        %v1252 = vld [vmem:[%s1248 + $0xc] sm:$0xf]
        %v1257 = vunpack.c.l.b16 %v1249
        %v1258 = vunpack.c.l.b16 %v1250
        %v1259 = vunpack.c.l.b16 %v1251
        %v1260 = vunpack.c.l.b16 %v1252
        %v1261 = vpack.c.b16 %v1258, %v1257
        %v1262 = vpack.c.b16 %v1260, %v1259
        %1265 = vmatprep.subr.bf16.mxu0 0
        %1266 = vmatpush1.bf16.msra.mxu0 %v1261
        %1267 = vmatprep.subr.bf16.mxu0 0
        %1268 = vmatpush1.bf16.msra.mxu0 %v1262
        %1269 = vmatprep.subr.bf16.mxu0 0
        %1270 = vmatpush1.bf16.msra.mxu0 0
        %1271 = vmatprep.subr.bf16.mxu0 0
        %1272 = vmatpush1.bf16.msra.mxu0 0
        %1273 = vmatprep.subr.bf16.mxu0 0
        %1274 = vmatpush1.bf16.msra.mxu0 0
        %1275 = vmatprep.subr.bf16.mxu0 0
        %1276 = vmatpush1.bf16.msra.mxu0 0
        %1277 = vmatprep.subr.bf16.mxu0 0
        %1278 = vmatpush1.bf16.msra.mxu0 0
        %1279 = vmatprep.subr.bf16.mxu0 0
        %1280 = vmatpush1.bf16.msra.mxu0 0
        %1281 = vmatprep.subr.bf16.mxu0 0
        %1282 = vmatpush1.bf16.msra.mxu0 0
        %1283 = vmatprep.subr.bf16.mxu0 0
        %1284 = vmatpush1.bf16.msra.mxu0 0
        %1285 = vmatprep.subr.bf16.mxu0 0
        %1286 = vmatpush1.bf16.msra.mxu0 0
        %1287 = vmatprep.subr.bf16.mxu0 0
        %1288 = vmatpush1.bf16.msra.mxu0 0
        %1289 = vmatprep.subr.bf16.mxu0 0
        %1290 = vmatpush1.bf16.msra.mxu0 0
        %1291 = vmatprep.subr.bf16.mxu0 0
        %1292 = vmatpush1.bf16.msra.mxu0 0
        %1293 = vmatprep.subr.bf16.mxu0 0
        %1294 = vmatpush1.bf16.msra.mxu0 0
        %1295 = vmatprep.subr.bf16.mxu0 0
        %1296 = vmatpush1.bf16.msra.mxu0 0
        %1297 = vmatprep.mubr.bf16.mxu0 0
        %1298 = vmatmul.mubr.bf16.gmra.mrb[0].mxu0 %v618
        %v1299 = vpop.f32.mrb[0].mxu0
        %v1300 = vadd.f32 0.0, %v1299
        %v1301 = vpop.f32.mrb[0].mxu0
        %v1302 = vpop.f32.mrb[0].mxu0
        %v1303 = vpop.f32.mrb[0].mxu0
        %1304 = vdwg.mxu0
        %v1305 = vpack.c.bf16 %v1300, %v1300
        %s1306 = scalar_lea.vmem [#allocation3], 12
        %v1307 = vld [vmem:[%s1306] sm:$0xf]
        %v1309 = vsel %vm662, %v1305, 0
        %v1312 = vsel %vm662, %v1307, 0
        %1314 = vmatprep.subr.bf16.mxu0 0
        %1315 = vmatpush1.bf16.xpose.msra.mxu0 %v1312
        %1316 = vmatprep.subr.bf16.mxu0 0
        %1317 = vmatpush1.bf16.xpose.msra.mxu0 0
        %1318 = vmatprep.subr.bf16.mxu0 0
        %1319 = vmatpush1.bf16.xpose.msra.mxu0 0
        %1320 = vmatprep.subr.bf16.mxu0 0
        %1321 = vmatpush1.bf16.xpose.msra.mxu0 0
        %1322 = vmatprep.subr.bf16.mxu0 0
        %1323 = vmatpush1.bf16.xpose.msra.mxu0 0
        %1324 = vmatprep.subr.bf16.mxu0 0
        %1325 = vmatpush1.bf16.xpose.msra.mxu0 0
        %1326 = vmatprep.subr.bf16.mxu0 0
        %1327 = vmatpush1.bf16.xpose.msra.mxu0 0
        %1328 = vmatprep.subr.bf16.mxu0 0
        %1329 = vmatpush1.bf16.xpose.msra.mxu0 0
        %1330 = vmatprep.subr.bf16.mxu0 0
        %1331 = vmatpush1.bf16.xpose.msra.mxu0 0
        %1332 = vmatprep.subr.bf16.mxu0 0
        %1333 = vmatpush1.bf16.xpose.msra.mxu0 0
        %1334 = vmatprep.subr.bf16.mxu0 0
        %1335 = vmatpush1.bf16.xpose.msra.mxu0 0
        %1336 = vmatprep.subr.bf16.mxu0 0
        %1337 = vmatpush1.bf16.xpose.msra.mxu0 0
        %1338 = vmatprep.subr.bf16.mxu0 0
        %1339 = vmatpush1.bf16.xpose.msra.mxu0 0
        %1340 = vmatprep.subr.bf16.mxu0 0
        %1341 = vmatpush1.bf16.xpose.msra.mxu0 0
        %1342 = vmatprep.subr.bf16.mxu0 0
        %1343 = vmatpush1.bf16.xpose.msra.mxu0 0
        %1344 = vmatprep.subr.bf16.mxu0 0
        %1345 = vmatpush1.bf16.xpose.msra.mxu0 0
        %1346 = vmatprep.mubr.bf16.mxu0 0
        %1347 = vmatmul.mubr.bf16.gmra.mrb[0].mxu0 %v1309
        %v1348 = vpop.f32.mrb[0].mxu0
        %v1349 = vadd.f32 0.0, %v1348
        %v1350 = vpop.f32.mrb[0].mxu0
        %v1351 = vpop.f32.mrb[0].mxu0
        %v1352 = vpop.f32.mrb[0].mxu0
        %1353 = vdwg.mxu0
        %v1354 = vsel %vm662, %v1349, -inf
        %1355 = vmax.xlane.f32.xlu0 %v1354
        %v1356 = vpop.xlane.xlu0 %1355
        %v1357 = vsub.f32 %v1349, %v1356
        %v1358 = vmul.f32 %v1357, 1.442695
        %v1359 = vpow.pop %v1358
        %v1360 = vsel %vm662, %v1359, 0.0
        %1361 = vadd.xlane.f32.xlu0 %v1360
        %v1362 = vpop.xlane.xlu0 %1361
        %v1363 = vrcp.pop %v1362
        %v1364 = vmul.f32 %v1359, %v1363
        %v1365 = vpack.c.bf16 %v1364, %v1364
        %s1366 = scalar_lea.vmem [#allocation4], 12
        %v1367 = vld [vmem:[%s1366] sm:$0xf]
        %v1369 = vsel %vm662, %v1365, 0
        %v1372 = vsel %vm725, %v1367, 0
        %1374 = vmatprep.subr.bf16.mxu0 0
        %1375 = vmatpush1.bf16.msra.mxu0 %v1372
        %1376 = vmatprep.subr.bf16.mxu0 0
        %1377 = vmatpush1.bf16.msra.mxu0 0
        %1378 = vmatprep.subr.bf16.mxu0 0
        %1379 = vmatpush1.bf16.msra.mxu0 0
        %1380 = vmatprep.subr.bf16.mxu0 0
        %1381 = vmatpush1.bf16.msra.mxu0 0
        %1382 = vmatprep.subr.bf16.mxu0 0
        %1383 = vmatpush1.bf16.msra.mxu0 0
        %1384 = vmatprep.subr.bf16.mxu0 0
        %1385 = vmatpush1.bf16.msra.mxu0 0
        %1386 = vmatprep.subr.bf16.mxu0 0
        %1387 = vmatpush1.bf16.msra.mxu0 0
        %1388 = vmatprep.subr.bf16.mxu0 0
        %1389 = vmatpush1.bf16.msra.mxu0 0
        %1390 = vmatprep.subr.bf16.mxu0 0
        %1391 = vmatpush1.bf16.msra.mxu0 0
        %1392 = vmatprep.subr.bf16.mxu0 0
        %1393 = vmatpush1.bf16.msra.mxu0 0
        %1394 = vmatprep.subr.bf16.mxu0 0
        %1395 = vmatpush1.bf16.msra.mxu0 0
        %1396 = vmatprep.subr.bf16.mxu0 0
        %1397 = vmatpush1.bf16.msra.mxu0 0
        %1398 = vmatprep.subr.bf16.mxu0 0
        %1399 = vmatpush1.bf16.msra.mxu0 0
        %1400 = vmatprep.subr.bf16.mxu0 0
        %1401 = vmatpush1.bf16.msra.mxu0 0
        %1402 = vmatprep.subr.bf16.mxu0 0
        %1403 = vmatpush1.bf16.msra.mxu0 0
        %1404 = vmatprep.subr.bf16.mxu0 0
        %1405 = vmatpush1.bf16.msra.mxu0 0
        %1406 = vmatprep.mubr.bf16.mxu0 0
        %1407 = vmatmul.mubr.bf16.gmra.mrb[0].mxu0 %v1369
        %v1408 = vpop.f32.mrb[0].mxu0
        %v1409 = vadd.f32 0.0, %v1408
        %v1410 = vpop.f32.mrb[0].mxu0
        %v1411 = vpop.f32.mrb[0].mxu0
        %v1412 = vpop.f32.mrb[0].mxu0
        %1413 = vdwg.mxu0
        %v1414 = vpack.c.bf16 %v1409, %v1409
        %s1415 = scalar_lea.vmem %s5, 12
        %v1416 = vld [vmem:[%s1415] sm:$0xf]
        %v1418 = vsel %vm662, %v1414, 0
        %v1421 = vsel %vm725, %v1416, 0
        %1423 = vmatprep.subr.bf16.mxu0 0
        %1424 = vmatpush1.bf16.msra.mxu0 %v1421
        %1425 = vmatprep.subr.bf16.mxu0 0
        %1426 = vmatpush1.bf16.msra.mxu0 0
        %1427 = vmatprep.subr.bf16.mxu0 0
        %1428 = vmatpush1.bf16.msra.mxu0 0
        %1429 = vmatprep.subr.bf16.mxu0 0
        %1430 = vmatpush1.bf16.msra.mxu0 0
        %1431 = vmatprep.subr.bf16.mxu0 0
        %1432 = vmatpush1.bf16.msra.mxu0 0
        %1433 = vmatprep.subr.bf16.mxu0 0
        %1434 = vmatpush1.bf16.msra.mxu0 0
        %1435 = vmatprep.subr.bf16.mxu0 0
        %1436 = vmatpush1.bf16.msra.mxu0 0
        %1437 = vmatprep.subr.bf16.mxu0 0
        %1438 = vmatpush1.bf16.msra.mxu0 0
        %1439 = vmatprep.subr.bf16.mxu0 0
        %1440 = vmatpush1.bf16.msra.mxu0 0
        %1441 = vmatprep.subr.bf16.mxu0 0
        %1442 = vmatpush1.bf16.msra.mxu0 0
        %1443 = vmatprep.subr.bf16.mxu0 0
        %1444 = vmatpush1.bf16.msra.mxu0 0
        %1445 = vmatprep.subr.bf16.mxu0 0
        %1446 = vmatpush1.bf16.msra.mxu0 0
        %1447 = vmatprep.subr.bf16.mxu0 0
        %1448 = vmatpush1.bf16.msra.mxu0 0
        %1449 = vmatprep.subr.bf16.mxu0 0
        %1450 = vmatpush1.bf16.msra.mxu0 0
        %1451 = vmatprep.subr.bf16.mxu0 0
        %1452 = vmatpush1.bf16.msra.mxu0 0
        %1453 = vmatprep.subr.bf16.mxu0 0
        %1454 = vmatpush1.bf16.msra.mxu0 0
        %1455 = vmatprep.mubr.bf16.mxu0 0
        %1456 = vmatmul.mubr.bf16.gmra.mrb[0].mxu0 %v1418
        %v1457 = vpop.f32.mrb[0].mxu0
        %v1458 = vadd.f32 0.0, %v1457
        %v1459 = vpop.f32.mrb[0].mxu0
        %v1460 = vpop.f32.mrb[0].mxu0
        %v1461 = vpop.f32.mrb[0].mxu0
        %1462 = vdwg.mxu0
        %v1463 = vadd.f32 %v1247, %v1458
        %v1464 = vadd.f32 %v596, %v1463
        %v1465 = vld [vmem:[%s6] sm:$0x1]
        %v1467 = vlaneseq
        %v1468 = vshrl.u32 %v1467, 7
        %v1469 = vsub.s32 0, %v1468
        %v1470 = vrot.slane %v1465, %v1469
        %v1472 = vadd.f32 %v1464, %v1470
        %v1473 = vld [vmem:[%s7] sm:$0x1]
        %v1474 = vld [vmem:[%s8] sm:$0x1]
        %v1475 = vsel %vm616, %v1472, 0.0
        %1476 = vadd.xlane.f32.xlu0 %v1475
        %v1477 = vpop.xlane.xlu0 %1476
        %v1478 = vrcp.pop 32.0
        %v1479 = vmul.f32 %v1477, %v1478
        %v1480 = vsub.f32 %v1472, %v1479
        %v1481 = vmul.f32 %v1480, %v1480
        %v1482 = vsel %vm616, %v1481, 0.0
        %1483 = vadd.xlane.f32.xlu0 %v1482
        %v1484 = vpop.xlane.xlu0 %1483
        %v1485 = vmul.f32 %v1484, %v1478
        %v1486 = vadd.f32 %v1485, 1e-05
        %v1487 = vrsqrt.pop %v1486
        %v1488 = vmul.f32 %v1480, %v1487
        %v1490 = vlaneseq
        %v1491 = vshrl.u32 %v1490, 7
        %v1492 = vsub.s32 0, %v1491
        %v1493 = vrot.slane %v1473, %v1492
        %v1495 = vmul.f32 %v1488, %v1493
        %v1497 = vlaneseq
        %v1498 = vshrl.u32 %v1497, 7
        %v1499 = vsub.s32 0, %v1498
        %v1500 = vrot.slane %v1474, %v1499
        %v1502 = vadd.f32 %v1495, %v1500
        %v1503 = vpack.c.bf16 %v1502, %v1502
        %v1504 = vld [vmem:[%s9] sm:$0xf]
        %v1505 = vld [vmem:[%s9 + $0x4] sm:$0xf]
        %v1506 = vld [vmem:[%s9 + $0x8] sm:$0xf]
        %v1507 = vld [vmem:[%s9 + $0xc] sm:$0xf]
        %v1508 = vld [vmem:[%s10] sm:$0x1]
        %v1510 = vlaneseq
        %v1511 = vshrl.u32 %v1510, 7
        %v1512 = vsub.s32 0, %v1511
        %v1513 = vrot.slane %v1508, %v1512
        %v1519 = vunpack.c.l.b16 %v1504
        %v1520 = vunpack.c.l.b16 %v1505
        %v1521 = vunpack.c.l.b16 %v1506
        %v1522 = vunpack.c.l.b16 %v1507
        %v1523 = vpack.c.b16 %v1520, %v1519
        %v1524 = vpack.c.b16 %v1522, %v1521
        %v1528 = vsel %vm616, %v1503, 0
        %1530 = vmatprep.subr.bf16.mxu0 0
        %1531 = vmatpush1.bf16.msra.mxu0 %v1523
        %1532 = vmatprep.subr.bf16.mxu0 0
        %1533 = vmatpush1.bf16.msra.mxu0 %v1524
        %1534 = vmatprep.subr.bf16.mxu0 0
        %1535 = vmatpush1.bf16.msra.mxu0 0
        %1536 = vmatprep.subr.bf16.mxu0 0
        %1537 = vmatpush1.bf16.msra.mxu0 0
        %1538 = vmatprep.subr.bf16.mxu0 0
        %1539 = vmatpush1.bf16.msra.mxu0 0
        %1540 = vmatprep.subr.bf16.mxu0 0
        %1541 = vmatpush1.bf16.msra.mxu0 0
        %1542 = vmatprep.subr.bf16.mxu0 0
        %1543 = vmatpush1.bf16.msra.mxu0 0
        %1544 = vmatprep.subr.bf16.mxu0 0
        %1545 = vmatpush1.bf16.msra.mxu0 0
        %1546 = vmatprep.subr.bf16.mxu0 0
        %1547 = vmatpush1.bf16.msra.mxu0 0
        %1548 = vmatprep.subr.bf16.mxu0 0
        %1549 = vmatpush1.bf16.msra.mxu0 0
        %1550 = vmatprep.subr.bf16.mxu0 0
        %1551 = vmatpush1.bf16.msra.mxu0 0
        %1552 = vmatprep.subr.bf16.mxu0 0
        %1553 = vmatpush1.bf16.msra.mxu0 0
        %1554 = vmatprep.subr.bf16.mxu0 0
        %1555 = vmatpush1.bf16.msra.mxu0 0
        %1556 = vmatprep.subr.bf16.mxu0 0
        %1557 = vmatpush1.bf16.msra.mxu0 0
        %1558 = vmatprep.subr.bf16.mxu0 0
        %1559 = vmatpush1.bf16.msra.mxu0 0
        %1560 = vmatprep.subr.bf16.mxu0 0
        %1561 = vmatpush1.bf16.msra.mxu0 0
        %1562 = vmatprep.mubr.bf16.mxu0 0
        %1563 = vmatmul.mubr.bf16.gmra.mrb[0].mxu0 %v1528
        %v1564 = vpop.f32.mrb[0].mxu0
        %v1565 = vadd.f32 %v1513, %v1564
        %v1566 = vpop.f32.mrb[0].mxu0
        %v1567 = vpop.f32.mrb[0].mxu0
        %v1568 = vpop.f32.mrb[0].mxu0
        %1569 = vdwg.mxu0
        %v1570 = vmul.f32 %v1565, 0.5
        %v1571 = vmul.f32 %v1565, 0.70710677
        %v1572 = vand.u32 2147483647, %v1571
        %v1573 = vmul.f32 %v1572, 0.3275911
        %v1574 = vadd.f32 %v1573, 1.0
        %v1575 = vrcp.pop %v1574
        %v1576 = vmul.f32 1.0, %v1575
        %v1577 = vmul.f32 %v1576, 1.0614054
        %v1578 = vadd.f32 %v1577, -1.4531521
        %v1579 = vmul.f32 %v1578, %v1576
        %v1580 = vadd.f32 %v1579, 1.4214138
        %v1581 = vmul.f32 %v1580, %v1576
        %v1582 = vadd.f32 %v1581, -0.28449672
        %v1583 = vmul.f32 %v1582, %v1576
        %v1584 = vadd.f32 %v1583, 0.2548296
        %v1585 = vmul.f32 %v1584, %v1576
        %v1586 = vsub.f32 0.0, %v1572
        %v1587 = vmul.f32 %v1586, %v1572
        %v1588 = vmul.f32 %v1587, 1.442695
        %v1589 = vpow.pop %v1588
        %v1590 = vmul.f32 %v1585, %v1589
        %v1591 = vsub.f32 1.0, %v1590
        %vm1592 = vcmp.ge.f32.partialorder %v1571, 0.0
        %v1593 = vsub.f32 0.0, %v1591
        %v1594 = vsel %vm1592, %v1591, %v1593
        %v1595 = vadd.f32 %v1594, 1.0
        %v1596 = vmul.f32 %v1570, %v1595
        %v1597 = vpack.c.bf16 %v1596, %v1596
        %v1598 = vld [vmem:[%s11] sm:$0xf]
        %v1599 = vld [vmem:[%s11 + $0x4] sm:$0xf]
        %v1600 = vld [vmem:[%s11 + $0x8] sm:$0xf]
        %v1601 = vld [vmem:[%s11 + $0xc] sm:$0xf]
        %v1602 = vld [vmem:[%s11 + $0x10] sm:$0xf]
        %v1603 = vld [vmem:[%s11 + $0x14] sm:$0xf]
        %v1604 = vld [vmem:[%s11 + $0x18] sm:$0xf]
        %v1605 = vld [vmem:[%s11 + $0x1c] sm:$0xf]
        %v1606 = vld [vmem:[%s11 + $0x20] sm:$0xf]
        %v1607 = vld [vmem:[%s11 + $0x24] sm:$0xf]
        %v1608 = vld [vmem:[%s11 + $0x28] sm:$0xf]
        %v1609 = vld [vmem:[%s11 + $0x2c] sm:$0xf]
        %v1610 = vld [vmem:[%s11 + $0x30] sm:$0xf]
        %v1611 = vld [vmem:[%s11 + $0x34] sm:$0xf]
        %v1612 = vld [vmem:[%s11 + $0x38] sm:$0xf]
        %v1613 = vld [vmem:[%s11 + $0x3c] sm:$0xf]
        %v1614 = vld [vmem:[%s12] sm:$0x1]
        %v1616 = vlaneseq
        %v1617 = vshrl.u32 %v1616, 7
        %v1618 = vsub.s32 0, %v1617
        %v1619 = vrot.slane %v1614, %v1618
        %v1637 = vunpack.c.l.b16 %v1598
        %v1638 = vunpack.c.l.b16 %v1599
        %v1639 = vunpack.c.l.b16 %v1600
        %v1640 = vunpack.c.l.b16 %v1601
        %v1641 = vunpack.c.l.b16 %v1602
        %v1642 = vunpack.c.l.b16 %v1603
        %v1643 = vunpack.c.l.b16 %v1604
        %v1644 = vunpack.c.l.b16 %v1605
        %v1645 = vunpack.c.l.b16 %v1606
        %v1646 = vunpack.c.l.b16 %v1607
        %v1647 = vunpack.c.l.b16 %v1608
        %v1648 = vunpack.c.l.b16 %v1609
        %v1649 = vunpack.c.l.b16 %v1610
        %v1650 = vunpack.c.l.b16 %v1611
        %v1651 = vunpack.c.l.b16 %v1612
        %v1652 = vunpack.c.l.b16 %v1613
        %v1653 = vpack.c.b16 %v1638, %v1637
        %v1654 = vpack.c.b16 %v1640, %v1639
        %v1655 = vpack.c.b16 %v1642, %v1641
        %v1656 = vpack.c.b16 %v1644, %v1643
        %v1657 = vpack.c.b16 %v1646, %v1645
        %v1658 = vpack.c.b16 %v1648, %v1647
        %v1659 = vpack.c.b16 %v1650, %v1649
        %v1660 = vpack.c.b16 %v1652, %v1651
        %1669 = vmatprep.subr.bf16.mxu0 0
        %1670 = vmatpush1.bf16.msra.mxu0 %v1653
        %1671 = vmatprep.subr.bf16.mxu0 0
        %1672 = vmatpush1.bf16.msra.mxu0 %v1654
        %1673 = vmatprep.subr.bf16.mxu0 0
        %1674 = vmatpush1.bf16.msra.mxu0 %v1655
        %1675 = vmatprep.subr.bf16.mxu0 0
        %1676 = vmatpush1.bf16.msra.mxu0 %v1656
        %1677 = vmatprep.subr.bf16.mxu0 0
        %1678 = vmatpush1.bf16.msra.mxu0 %v1657
        %1679 = vmatprep.subr.bf16.mxu0 0
        %1680 = vmatpush1.bf16.msra.mxu0 %v1658
        %1681 = vmatprep.subr.bf16.mxu0 0
        %1682 = vmatpush1.bf16.msra.mxu0 %v1659
        %1683 = vmatprep.subr.bf16.mxu0 0
        %1684 = vmatpush1.bf16.msra.mxu0 %v1660
        %1685 = vmatprep.subr.bf16.mxu0 0
        %1686 = vmatpush1.bf16.msra.mxu0 0
        %1687 = vmatprep.subr.bf16.mxu0 0
        %1688 = vmatpush1.bf16.msra.mxu0 0
        %1689 = vmatprep.subr.bf16.mxu0 0
        %1690 = vmatpush1.bf16.msra.mxu0 0
        %1691 = vmatprep.subr.bf16.mxu0 0
        %1692 = vmatpush1.bf16.msra.mxu0 0
        %1693 = vmatprep.subr.bf16.mxu0 0
        %1694 = vmatpush1.bf16.msra.mxu0 0
        %1695 = vmatprep.subr.bf16.mxu0 0
        %1696 = vmatpush1.bf16.msra.mxu0 0
        %1697 = vmatprep.subr.bf16.mxu0 0
        %1698 = vmatpush1.bf16.msra.mxu0 0
        %1699 = vmatprep.subr.bf16.mxu0 0
        %1700 = vmatpush1.bf16.msra.mxu0 0
        %1701 = vmatprep.mubr.bf16.mxu0 0
        %1702 = vmatmul.mubr.bf16.gmra.mrb[0].mxu0 %v1597
        %v1703 = vpop.f32.mrb[0].mxu0
        %v1704 = vadd.f32 %v1619, %v1703
        %v1705 = vpop.f32.mrb[0].mxu0
        %v1706 = vpop.f32.mrb[0].mxu0
        %v1707 = vpop.f32.mrb[0].mxu0
        %1708 = vdwg.mxu0
        %v1709 = vadd.f32 %v1472, %v1704
        %1710 = vst.msk [vmem:[%s445] sm:$0xff] %vm616, %v1709
        %s1711 = sand.u32 %s327, 1
        %s1712 = scalar_lea.sflag [#allocation6], %s1711
        %s1713 = sand.u32 %s327, 1
        %s1714 = smul.addr %s1713, 8
        %s1715 = scalar_lea.vmem [#allocation5], %s1714
        // Predicated region
        $region77: #{tpu_custom_call.1} parent=71 // pred_check
          %p1716 = pneg %p337
        $region78: #{tpu_custom_call.1} parent=71 // pred_check_branch
          %1718 = sbr.rel (%p1716) target = $region80
        $region79: #{tpu_custom_call.1} parent=71 // pred_region
          %s1720 = ssub.s32 128, 128
          %1721 = vsyncadd %s1712, %s1720
          %s1722 = sadd.s32 %s32, %s31
          %s1723 = smul.addr %s1722, 128
          %s1724 = scalar_lea.hbm %s13, %s1723
          %s1726 = sshll.u32 %s1715, 4
          %s1727 = int_to_ptr.vmem [resolvable:$true] %s1726
          %1729 = dma.vmem_to_hbm [thread:$0]  %s1727, 128, %s1724, %s1712
        $region80: #{tpu_custom_call.1} parent=71 // pred_fallthru
          _
      $region72: #{tpu_custom_call.1} parent=5 // pred_fallthru
        _
      %p1730 = scmp.le.s32.totalorder 2, %s22
      // Predicated region
      $region81: #{tpu_custom_call.1} parent=5 // pred_check
        %p1731 = pneg %p1730
      $region82: #{tpu_custom_call.1} parent=5 // pred_check_branch
        %1733 = sbr.rel (%p1731) target = $region84
      $region83: #{tpu_custom_call.1} parent=5 // pred_region
        %s1734 = ssub.s32 %s22, 2
        // Predicated region
        $region85: #{tpu_custom_call.1} parent=83 // pred_check
          %p1735 = pneg %p343
        $region86: #{tpu_custom_call.1} parent=83 // pred_check_branch
          %1737 = sbr.rel (%p1735) target = $region88
        $region87: #{tpu_custom_call.1} parent=83 // pred_region
          %s1738 = sand.u32 %s328, 1
          %s1739 = scalar_lea.sflag [#allocation6], %s1738
          %s1740 = sand.u32 %s328, 1
          %s1741 = smul.addr %s1740, 8
          %s1742 = scalar_lea.vmem [#allocation5], %s1741
          %1743 = dma.done %s1739, 128
        $region88: #{tpu_custom_call.1} parent=83 // pred_fallthru
          _
      $region84: #{tpu_custom_call.1} parent=5 // pred_fallthru
        _
    $region6: #{tpu_custom_call.1} parent=1 // loop_footer
      %s26 = sadd.s32 1, %s22
    $region7: #{tpu_custom_call.1} parent=1 // loop_footer_branch
      %21 = sbr.rel target = $region3
    $region8: #{tpu_custom_call.1} parent=1 // loop_exit
      _
    %1744 = vsyncpa [#allocation6], 1
    %s1745 = scalar_lea.sflag [#allocation6], 1
    %1746 = vsyncpa %s1745, 1

</llo_original>
